<compile_context>
chip_gen: v6e
topology: v6e:2x2x1
jax: 0.10.0
libtpu: 0.0.40
codegen_flags: <defaults>
</compile_context>

<pallas_src>
import math

import jax
import jax.numpy as jnp
from jax.experimental import pallas as pl
from jax.experimental.pallas import tpu as pltpu


def _leaky(x):
    # LeakyReLU(0.2):  slope < 1  =>  max(x, 0.2*x) == leaky_relu(x)
    # (one mul + one max on the VPU; cheaper than cmp+select).
    return jnp.maximum(x, 0.2 * x)


def _dot(a, b):
    return jnp.dot(a, b, preferred_element_type=jnp.float32)


# ----------------------------------------------------------------------------
# Fused Pallas kernel: full stream for one tile of pixels of one stream.
# ----------------------------------------------------------------------------
def _make_stream_kernel(num_spe):
    def kernel(*refs):
        x_ref = refs[0]
        o_ref = refs[-1]
        p = refs[1:-1]

        h = x_ref[...]                                   # (Cin, tile_p)
        idx = 0
        for _ in range(num_spe):
            wb3, bb3, wm3, bm3, we3, be = p[idx:idx + 6]
            idx += 6
            # begin conv (Cin -> 60) as three (Cin -> 20) matmuls: the three
            # channel splits of x1 come straight out of three weight blocks.
            s1 = _leaky(_dot(wb3[0], h) + bb3[0])
            s2 = _leaky(_dot(wb3[1], h) + bb3[1])
            s3 = _leaky(_dot(wb3[2], h) + bb3[2])
            # chained 20 -> 20 streams
            m1 = _leaky(_dot(wm3[0], s1) + bm3[0])
            m2 = _leaky(_dot(wm3[1], s2 + m1) + bm3[1])
            m3 = _leaky(_dot(wm3[2], s3 + m2) + bm3[2])
            # end conv (60 -> Cout):  x2 = x1 + concat([m1, m2, m3]) folded
            # into three column blocks of `we` -> no concat / sublane slicing.
            h = _leaky(_dot(we3[0], s1 + m1)
                       + _dot(we3[1], s2 + m2)
                       + _dot(we3[2], s3 + m3)
                       + be[...])
        w_end, b_end = p[idx], p[idx + 1]
        o_ref[...] = _leaky(_dot(w_end[...], h) + b_end[...])

    return kernel


# ----------------------------------------------------------------------------
# pallas_call plumbing
# ----------------------------------------------------------------------------
def _choose_tile(P, max_tile=2048):
    """Pixel-tile (lane) width: multiple of 128, as large as possible, but
    prefer >=2 grid steps so the pipeline / megacore has something to split.
    Capped so tiles stay tiny even in v7x's 64 MiB VMEM."""
    if P <= 256:
        return P if P % 128 == 0 else 128
    half = max(128, ((P // 2) // 128) * 128)
    return min(max_tile, half)


def _param_spec(a):
    """Resident BlockSpec for a weight stacked along a leading stream axis:
    block index follows grid axis 0 (stream), stays fixed over pixel tiles
    (so it is DMA'd once per stream, not per tile)."""
    rest = tuple(a.shape[1:])
    nd = len(rest)
    return pl.BlockSpec((None,) + rest,
                        lambda s, i, _nd=nd: (s,) + (0,) * _nd)


def fused_streams_call(x_scp, stacked):
    """x_scp: (S, Cin, P) float32 (stream, channels, pixels).
    `stacked`: param pytree with every leaf stacked along a leading S axis.
    Returns (S, Cout, P)."""
    S, cin, P = x_scp.shape
    cout = stacked["w_end"].shape[1]
    num_spe = len(stacked["spes"])

    tile_p = _choose_tile(P)
    n_tiles = -(-P // tile_p)
    Pp = n_tiles * tile_p
    if Pp != P:
        x_scp = jnp.pad(x_scp, ((0, 0), (0, 0), (0, Pp - P)))

    args = [x_scp]
    in_specs = [pl.BlockSpec((None, cin, tile_p), lambda s, i: (s, 0, i))]

    flops = 0
    param_bytes = 0
    c = cin
    for sp in stacked["spes"]:
        for name in ("wb3", "bb3", "wm3", "bm3", "we3", "be"):
            a = sp[name]
            args.append(a)
            in_specs.append(_param_spec(a))
            param_bytes += a.size * a.dtype.itemsize
        c_out = sp["we3"].shape[2]
        flops += 2 * S * Pp * (c * 60 + 3 * 20 * 20 + 60 * c_out)
        c = c_out
    for a in (stacked["w_end"], stacked["b_end"]):
        args.append(a)
        in_specs.append(_param_spec(a))
        param_bytes += a.size * a.dtype.itemsize
    flops += 2 * S * Pp * c * cout
    bytes_accessed = 4 * S * Pp * (cin + cout) + param_bytes

    out = pl.pallas_call(
        _make_stream_kernel(num_spe),
        out_shape=jax.ShapeDtypeStruct((S, cout, Pp), jnp.float32),
        grid=(S, n_tiles),                      # stream outer -> weights re-fetched
        in_specs=in_specs,                      # only once per stream
        out_specs=pl.BlockSpec((None, cout, tile_p), lambda s, i: (s, 0, i)),
        compiler_params=pltpu.CompilerParams(
            dimension_semantics=("parallel", "parallel")),
        cost_estimate=pl.CostEstimate(
            flops=int(flops), transcendentals=0,
            bytes_accessed=int(bytes_accessed)),
    )(*args)
    return out[..., :P] if Pp != P else out


# ----------------------------------------------------------------------------
# Parameter construction (deterministic, synthetic) — PyTorch Conv2d layout:
# weight (Cout, Cin) (1x1 kernel squeezed), bias (Cout, 1).
# ----------------------------------------------------------------------------
def _init_conv(key, cin, cout):
    kw, kb = jax.random.split(key)
    scale = 1.0 / math.sqrt(cin)
    w = jax.random.uniform(kw, (cout, cin), jnp.float32, -scale, scale)
    b = jax.random.uniform(kb, (cout, 1), jnp.float32, -scale, scale)
    return w, b


def init_spe_params(key, cin, cout):
    keys = jax.random.split(key, 5)
    p = {}
    p["wb"], p["bb"] = _init_conv(keys[0], cin, 60)
    p["w1"], p["b1"] = _init_conv(keys[1], 20, 20)
    p["w2"], p["b2"] = _init_conv(keys[2], 20, 20)
    p["w3"], p["b3"] = _init_conv(keys[3], 20, 20)
    p["we"], p["be"] = _init_conv(keys[4], 60, cout)
    return p


def pack_spe_params(p):
    """Pre-split weights so the kernel needs no channel slices / concat."""
    return {
        "wb3": p["wb"].reshape(3, 20, -1),                      # (3, 20, Cin)
        "bb3": p["bb"].reshape(3, 20, 1),                       # (3, 20, 1)
        "wm3": jnp.stack([p["w1"], p["w2"], p["w3"]]),          # (3, 20, 20)
        "bm3": jnp.stack([p["b1"], p["b2"], p["b3"]]),          # (3, 20, 1)
        "we3": jnp.stack([p["we"][:, 0:20], p["we"][:, 20:40],
                          p["we"][:, 40:60]]),                  # (3, Cout, 20)
        "be": p["be"],                                          # (Cout, 1)
    }


def init_stream_params(key, msi_channels, hsi_channels):
    num_ups = int(round(math.log2(hsi_channels / msi_channels)))
    keys = jax.random.split(key, num_ups + 1)
    spes = []
    for i in range(1, num_ups + 1):
        spes.append(init_spe_params(keys[i - 1],
                                    msi_channels * 2 ** (i - 1),
                                    msi_channels * 2 ** i))
    w_end, b_end = _init_conv(keys[num_ups],
                              msi_channels * 2 ** num_ups, hsi_channels)
    return {"spes": spes, "w_end": w_end, "b_end": b_end}


def pack_stream_params(raw):
    return {"spes": [pack_spe_params(sp) for sp in raw["spes"]],
            "w_end": raw["w_end"], "b_end": raw["b_end"]}


def stack_packed(packed_list):
    """Stack the per-stream packed params along a leading stream axis (both
    streams of two_stream_split share the same architecture)."""
    return jax.tree_util.tree_map(lambda *xs: jnp.stack(xs, axis=0),
                                  *packed_list)


# ----------------------------------------------------------------------------
# two_stream_split forward
# ----------------------------------------------------------------------------
def _to_cp(x_nchw):
    n, c, h, w = x_nchw.shape
    # NCHW -> (C, N*H*W); NCHW is already channel-major, only batch moves.
    return jnp.transpose(x_nchw, (1, 0, 2, 3)).reshape(c, n * h * w)


def _from_cp(y_cp, n, h, w):
    cout = y_cp.shape[0]
    return jnp.transpose(y_cp.reshape(cout, n, h, w), (1, 0, 2, 3))


@jax.jit
def two_stream_split_forward(lrmsi_flrhsi, lrmsi_fhrmsi, stacked_packed):
    """Fused path (inputs share a shape): one pallas_call covers both streams,
    grid axis 0 = stream, grid axis 1 = pixel tile."""
    n, _, h, w = lrmsi_flrhsi.shape
    x = jnp.stack([_to_cp(lrmsi_flrhsi), _to_cp(lrmsi_fhrmsi)], axis=0)
    y = fused_streams_call(x, stacked_packed)
    return _from_cp(y[0], n, h, w), _from_cp(y[1], n, h, w)


@jax.jit
def stream_forward(x_nchw, packed_single_stacked):
    """Single-stream fallback (use when the two inputs differ in spatial size);
    `packed_single_stacked` = stack_packed([packed]) (leading S = 1)."""
    n, _, h, w = x_nchw.shape
    y = fused_streams_call(_to_cp(x_nchw)[None], packed_single_stacked)
    return _from_cp(y[0], n, h, w)


# ----------------------------------------------------------------------------
# Pure-JAX reference (un-split weights, explicit slices/concat like PyTorch)
# ----------------------------------------------------------------------------
def _ref_spe(x, p):          # x: (Cin, P)
    x1 = _leaky(p["wb"] @ x + p["bb"])
    s1, s2, s3 = x1[0:20], x1[20:40], x1[40:60]
    m1 = _leaky(p["w1"] @ s1 + p["b1"])
    m2 = _leaky(p["w2"] @ (s2 + m1) + p["b2"])
    m3 = _leaky(p["w3"] @ (s3 + m2) + p["b3"])
    x2 = x1 + jnp.concatenate([m1, m2, m3], axis=0)
    return _leaky(p["we"] @ x2 + p["be"])


def _ref_stream(x_nchw, raw):
    n, c, h, w = x_nchw.shape
    x = jnp.transpose(x_nchw, (1, 0, 2, 3)).reshape(c, n * h * w)
    for sp in raw["spes"]:
        x = _ref_spe(x, sp)
    x = _leaky(raw["w_end"] @ x + raw["b_end"])
    cout = x.shape[0]
    return jnp.transpose(x.reshape(cout, n, h, w), (1, 0, 2, 3))


# ----------------------------------------------------------------------------
if __name__ == "__main__":
    msi_channels = 4
    hsi_channels = 16       # num_ups = log2(16/4) = 2
    N, H, W = 2, 16, 16     # P = 512 -> tile_p = 256, grid = (2, 2) parallel

    key = jax.random.PRNGKey(0)
    k_lr, k_hr, k_x1, k_x2 = jax.random.split(key, 4)

    lr_raw = init_stream_params(k_lr, msi_channels, hsi_channels)
    hr_raw = init_stream_params(k_hr, msi_channels, hsi_channels)
    stacked = stack_packed([pack_stream_params(lr_raw),
                            pack_stream_params(hr_raw)])

    lrmsi_flrhsi = jax.random.normal(k_x1, (N, msi_channels, H, W), jnp.float32)
    lrmsi_fhrmsi = jax.random.normal(k_x2, (N, msi_channels, H, W), jnp.float32)

    out1, out2 = two_stream_split_forward(lrmsi_flrhsi, lrmsi_fhrmsi, stacked)
    jax.block_until_ready((out1, out2))

    # sanity check against pure-JAX reference
    ref1 = _ref_stream(lrmsi_flrhsi, lr_raw)
    ref2 = _ref_stream(lrmsi_fhrmsi, hr_raw)
    assert out1.shape == (N, hsi_channels, H, W)
    assert out2.shape == (N, hsi_channels, H, W)
    assert jnp.allclose(out1, ref1, atol=1e-4, rtol=1e-4)
    assert jnp.allclose(out2, ref2, atol=1e-4, rtol=1e-4)

    print("KERNEL_OK")
</pallas_src>

<mosaic_0001>
module attributes {stable_mosaic.version = 11 : i64} {
  func.func @kernel(%arg0: i32, %arg1: i32, %arg2: memref<1x4x256xf32, #tpu.memory_space<vmem>>, %arg3: memref<1x3x20x4xf32, #tpu.memory_space<vmem>>, %arg4: memref<1x3x20x1xf32, #tpu.memory_space<vmem>>, %arg5: memref<1x3x20x20xf32, #tpu.memory_space<vmem>>, %arg6: memref<1x3x20x1xf32, #tpu.memory_space<vmem>>, %arg7: memref<1x3x8x20xf32, #tpu.memory_space<vmem>>, %arg8: memref<1x8x1xf32, #tpu.memory_space<vmem>>, %arg9: memref<1x3x20x8xf32, #tpu.memory_space<vmem>>, %arg10: memref<1x3x20x1xf32, #tpu.memory_space<vmem>>, %arg11: memref<1x3x20x20xf32, #tpu.memory_space<vmem>>, %arg12: memref<1x3x20x1xf32, #tpu.memory_space<vmem>>, %arg13: memref<1x3x16x20xf32, #tpu.memory_space<vmem>>, %arg14: memref<1x16x1xf32, #tpu.memory_space<vmem>>, %arg15: memref<1x16x16xf32, #tpu.memory_space<vmem>>, %arg16: memref<1x16x1xf32, #tpu.memory_space<vmem>>, %arg17: memref<1x16x256xf32, #tpu.memory_space<vmem>>) attributes {dimension_semantics = [#tpu.dimension_semantics<parallel>, #tpu.dimension_semantics<parallel>], iteration_bounds = array<i64: 2, 2>, scalar_prefetch = 0 : i64, scratch_operands = 0 : i64, tpu.core_type = #tpu.core_type<tc>, window_params = [{transform_indices = @transform_0, window_bounds = array<i64: 1, 4, 256>}, {transform_indices = @transform_1, window_bounds = array<i64: 1, 3, 20, 4>}, {transform_indices = @transform_2, window_bounds = array<i64: 1, 3, 20, 1>}, {transform_indices = @transform_3, window_bounds = array<i64: 1, 3, 20, 20>}, {transform_indices = @transform_4, window_bounds = array<i64: 1, 3, 20, 1>}, {transform_indices = @transform_5, window_bounds = array<i64: 1, 3, 8, 20>}, {transform_indices = @transform_6, window_bounds = array<i64: 1, 8, 1>}, {transform_indices = @transform_7, window_bounds = array<i64: 1, 3, 20, 8>}, {transform_indices = @transform_8, window_bounds = array<i64: 1, 3, 20, 1>}, {transform_indices = @transform_9, window_bounds = array<i64: 1, 3, 20, 20>}, {transform_indices = @transform_10, window_bounds = array<i64: 1, 3, 20, 1>}, {transform_indices = @transform_11, window_bounds = array<i64: 1, 3, 16, 20>}, {transform_indices = @transform_12, window_bounds = array<i64: 1, 16, 1>}, {transform_indices = @transform_13, window_bounds = array<i64: 1, 16, 16>}, {transform_indices = @transform_14, window_bounds = array<i64: 1, 16, 1>}, {transform_indices = @transform_15, window_bounds = array<i64: 1, 16, 256>}]} {
    %c0 = arith.constant 0 : index
    %c0_0 = arith.constant 0 : index
    %c0_1 = arith.constant 0 : index
    %0 = vector.load %arg2[%c0, %c0_0, %c0_1] : memref<1x4x256xf32, #tpu.memory_space<vmem>>, vector<1x4x256xf32>
    %1 = vector.shape_cast %0 : vector<1x4x256xf32> to vector<4x256xf32>
    %c0_2 = arith.constant 0 : index
    %c0_3 = arith.constant 0 : index
    %c0_4 = arith.constant 0 : index
    %c0_5 = arith.constant 0 : index
    %2 = vector.load %arg3[%c0_2, %c0_3, %c0_4, %c0_5] : memref<1x3x20x4xf32, #tpu.memory_space<vmem>>, vector<1x1x20x4xf32>
    %3 = vector.shape_cast %2 : vector<1x1x20x4xf32> to vector<20x4xf32>
    %cst = arith.constant dense<0.000000e+00> : vector<20x256xf32>
    %4 = tpu.matmul %3, %1, %cst {dimension_numbers = #tpu.dot_dimension_numbers<[1], [0], [0], [1], [0, 0, 1, 1], [], []>} : vector<20x4xf32>, vector<4x256xf32>, vector<20x256xf32> -> vector<20x256xf32>
    %c0_6 = arith.constant 0 : index
    %c0_7 = arith.constant 0 : index
    %c0_8 = arith.constant 0 : index
    %c0_9 = arith.constant 0 : index
    %5 = vector.load %arg4[%c0_6, %c0_7, %c0_8, %c0_9] : memref<1x3x20x1xf32, #tpu.memory_space<vmem>>, vector<1x1x20x1xf32>
    %6 = vector.shape_cast %5 : vector<1x1x20x1xf32> to vector<20x1xf32>
    %7 = vector.broadcast %6 : vector<20x1xf32> to vector<20x256xf32>
    %8 = arith.addf %4, %7 : vector<20x256xf32>
    %cst_10 = arith.constant 2.000000e-01 : f32
    %9 = vector.broadcast %cst_10 : f32 to vector<20x256xf32>
    %10 = arith.mulf %9, %8 : vector<20x256xf32>
    %11 = arith.maximumf %8, %10 : vector<20x256xf32>
    %c0_11 = arith.constant 0 : index
    %c1 = arith.constant 1 : index
    %c0_12 = arith.constant 0 : index
    %c0_13 = arith.constant 0 : index
    %12 = vector.load %arg3[%c0_11, %c1, %c0_12, %c0_13] : memref<1x3x20x4xf32, #tpu.memory_space<vmem>>, vector<1x1x20x4xf32>
    %13 = vector.shape_cast %12 : vector<1x1x20x4xf32> to vector<20x4xf32>
    %cst_14 = arith.constant dense<0.000000e+00> : vector<20x256xf32>
    %14 = tpu.matmul %13, %1, %cst_14 {dimension_numbers = #tpu.dot_dimension_numbers<[1], [0], [0], [1], [0, 0, 1, 1], [], []>} : vector<20x4xf32>, vector<4x256xf32>, vector<20x256xf32> -> vector<20x256xf32>
    %c0_15 = arith.constant 0 : index
    %c1_16 = arith.constant 1 : index
    %c0_17 = arith.constant 0 : index
    %c0_18 = arith.constant 0 : index
    %15 = vector.load %arg4[%c0_15, %c1_16, %c0_17, %c0_18] : memref<1x3x20x1xf32, #tpu.memory_space<vmem>>, vector<1x1x20x1xf32>
    %16 = vector.shape_cast %15 : vector<1x1x20x1xf32> to vector<20x1xf32>
    %17 = vector.broadcast %16 : vector<20x1xf32> to vector<20x256xf32>
    %18 = arith.addf %14, %17 : vector<20x256xf32>
    %cst_19 = arith.constant 2.000000e-01 : f32
    %19 = vector.broadcast %cst_19 : f32 to vector<20x256xf32>
    %20 = arith.mulf %19, %18 : vector<20x256xf32>
    %21 = arith.maximumf %18, %20 : vector<20x256xf32>
    %c0_20 = arith.constant 0 : index
    %c2 = arith.constant 2 : index
    %c0_21 = arith.constant 0 : index
    %c0_22 = arith.constant 0 : index
    %22 = vector.load %arg3[%c0_20, %c2, %c0_21, %c0_22] : memref<1x3x20x4xf32, #tpu.memory_space<vmem>>, vector<1x1x20x4xf32>
    %23 = vector.shape_cast %22 : vector<1x1x20x4xf32> to vector<20x4xf32>
    %cst_23 = arith.constant dense<0.000000e+00> : vector<20x256xf32>
    %24 = tpu.matmul %23, %1, %cst_23 {dimension_numbers = #tpu.dot_dimension_numbers<[1], [0], [0], [1], [0, 0, 1, 1], [], []>} : vector<20x4xf32>, vector<4x256xf32>, vector<20x256xf32> -> vector<20x256xf32>
    %c0_24 = arith.constant 0 : index
    %c2_25 = arith.constant 2 : index
    %c0_26 = arith.constant 0 : index
    %c0_27 = arith.constant 0 : index
    %25 = vector.load %arg4[%c0_24, %c2_25, %c0_26, %c0_27] : memref<1x3x20x1xf32, #tpu.memory_space<vmem>>, vector<1x1x20x1xf32>
    %26 = vector.shape_cast %25 : vector<1x1x20x1xf32> to vector<20x1xf32>
    %27 = vector.broadcast %26 : vector<20x1xf32> to vector<20x256xf32>
    %28 = arith.addf %24, %27 : vector<20x256xf32>
    %cst_28 = arith.constant 2.000000e-01 : f32
    %29 = vector.broadcast %cst_28 : f32 to vector<20x256xf32>
    %30 = arith.mulf %29, %28 : vector<20x256xf32>
    %31 = arith.maximumf %28, %30 : vector<20x256xf32>
    %c0_29 = arith.constant 0 : index
    %c0_30 = arith.constant 0 : index
    %c0_31 = arith.constant 0 : index
    %c0_32 = arith.constant 0 : index
    %32 = vector.load %arg5[%c0_29, %c0_30, %c0_31, %c0_32] : memref<1x3x20x20xf32, #tpu.memory_space<vmem>>, vector<1x1x20x20xf32>
    %33 = vector.shape_cast %32 : vector<1x1x20x20xf32> to vector<20x20xf32>
    %cst_33 = arith.constant dense<0.000000e+00> : vector<20x256xf32>
    %34 = tpu.matmul %33, %11, %cst_33 {dimension_numbers = #tpu.dot_dimension_numbers<[1], [0], [0], [1], [0, 0, 1, 1], [], []>} : vector<20x20xf32>, vector<20x256xf32>, vector<20x256xf32> -> vector<20x256xf32>
    %c0_34 = arith.constant 0 : index
    %c0_35 = arith.constant 0 : index
    %c0_36 = arith.constant 0 : index
    %c0_37 = arith.constant 0 : index
    %35 = vector.load %arg6[%c0_34, %c0_35, %c0_36, %c0_37] : memref<1x3x20x1xf32, #tpu.memory_space<vmem>>, vector<1x1x20x1xf32>
    %36 = vector.shape_cast %35 : vector<1x1x20x1xf32> to vector<20x1xf32>
    %37 = vector.broadcast %36 : vector<20x1xf32> to vector<20x256xf32>
    %38 = arith.addf %34, %37 : vector<20x256xf32>
    %cst_38 = arith.constant 2.000000e-01 : f32
    %39 = vector.broadcast %cst_38 : f32 to vector<20x256xf32>
    %40 = arith.mulf %39, %38 : vector<20x256xf32>
    %41 = arith.maximumf %38, %40 : vector<20x256xf32>
    %c0_39 = arith.constant 0 : index
    %c1_40 = arith.constant 1 : index
    %c0_41 = arith.constant 0 : index
    %c0_42 = arith.constant 0 : index
    %42 = vector.load %arg5[%c0_39, %c1_40, %c0_41, %c0_42] : memref<1x3x20x20xf32, #tpu.memory_space<vmem>>, vector<1x1x20x20xf32>
    %43 = vector.shape_cast %42 : vector<1x1x20x20xf32> to vector<20x20xf32>
    %44 = arith.addf %21, %41 : vector<20x256xf32>
    %cst_43 = arith.constant dense<0.000000e+00> : vector<20x256xf32>
    %45 = tpu.matmul %43, %44, %cst_43 {dimension_numbers = #tpu.dot_dimension_numbers<[1], [0], [0], [1], [0, 0, 1, 1], [], []>} : vector<20x20xf32>, vector<20x256xf32>, vector<20x256xf32> -> vector<20x256xf32>
    %c0_44 = arith.constant 0 : index
    %c1_45 = arith.constant 1 : index
    %c0_46 = arith.constant 0 : index
    %c0_47 = arith.constant 0 : index
    %46 = vector.load %arg6[%c0_44, %c1_45, %c0_46, %c0_47] : memref<1x3x20x1xf32, #tpu.memory_space<vmem>>, vector<1x1x20x1xf32>
    %47 = vector.shape_cast %46 : vector<1x1x20x1xf32> to vector<20x1xf32>
    %48 = vector.broadcast %47 : vector<20x1xf32> to vector<20x256xf32>
    %49 = arith.addf %45, %48 : vector<20x256xf32>
    %cst_48 = arith.constant 2.000000e-01 : f32
    %50 = vector.broadcast %cst_48 : f32 to vector<20x256xf32>
    %51 = arith.mulf %50, %49 : vector<20x256xf32>
    %52 = arith.maximumf %49, %51 : vector<20x256xf32>
    %c0_49 = arith.constant 0 : index
    %c2_50 = arith.constant 2 : index
    %c0_51 = arith.constant 0 : index
    %c0_52 = arith.constant 0 : index
    %53 = vector.load %arg5[%c0_49, %c2_50, %c0_51, %c0_52] : memref<1x3x20x20xf32, #tpu.memory_space<vmem>>, vector<1x1x20x20xf32>
    %54 = vector.shape_cast %53 : vector<1x1x20x20xf32> to vector<20x20xf32>
    %55 = arith.addf %31, %52 : vector<20x256xf32>
    %cst_53 = arith.constant dense<0.000000e+00> : vector<20x256xf32>
    %56 = tpu.matmul %54, %55, %cst_53 {dimension_numbers = #tpu.dot_dimension_numbers<[1], [0], [0], [1], [0, 0, 1, 1], [], []>} : vector<20x20xf32>, vector<20x256xf32>, vector<20x256xf32> -> vector<20x256xf32>
    %c0_54 = arith.constant 0 : index
    %c2_55 = arith.constant 2 : index
    %c0_56 = arith.constant 0 : index
    %c0_57 = arith.constant 0 : index
    %57 = vector.load %arg6[%c0_54, %c2_55, %c0_56, %c0_57] : memref<1x3x20x1xf32, #tpu.memory_space<vmem>>, vector<1x1x20x1xf32>
    %58 = vector.shape_cast %57 : vector<1x1x20x1xf32> to vector<20x1xf32>
    %59 = vector.broadcast %58 : vector<20x1xf32> to vector<20x256xf32>
    %60 = arith.addf %56, %59 : vector<20x256xf32>
    %cst_58 = arith.constant 2.000000e-01 : f32
    %61 = vector.broadcast %cst_58 : f32 to vector<20x256xf32>
    %62 = arith.mulf %61, %60 : vector<20x256xf32>
    %63 = arith.maximumf %60, %62 : vector<20x256xf32>
    %c0_59 = arith.constant 0 : index
    %c0_60 = arith.constant 0 : index
    %c0_61 = arith.constant 0 : index
    %c0_62 = arith.constant 0 : index
    %64 = vector.load %arg7[%c0_59, %c0_60, %c0_61, %c0_62] : memref<1x3x8x20xf32, #tpu.memory_space<vmem>>, vector<1x1x8x20xf32>
    %65 = vector.shape_cast %64 : vector<1x1x8x20xf32> to vector<8x20xf32>
    %66 = arith.addf %11, %41 : vector<20x256xf32>
    %cst_63 = arith.constant dense<0.000000e+00> : vector<8x256xf32>
    %67 = tpu.matmul %65, %66, %cst_63 {dimension_numbers = #tpu.dot_dimension_numbers<[1], [0], [0], [1], [0, 0, 1, 1], [], []>} : vector<8x20xf32>, vector<20x256xf32>, vector<8x256xf32> -> vector<8x256xf32>
    %c0_64 = arith.constant 0 : index
    %c1_65 = arith.constant 1 : index
    %c0_66 = arith.constant 0 : index
    %c0_67 = arith.constant 0 : index
    %68 = vector.load %arg7[%c0_64, %c1_65, %c0_66, %c0_67] : memref<1x3x8x20xf32, #tpu.memory_space<vmem>>, vector<1x1x8x20xf32>
    %69 = vector.shape_cast %68 : vector<1x1x8x20xf32> to vector<8x20xf32>
    %70 = arith.addf %21, %52 : vector<20x256xf32>
    %cst_68 = arith.constant dense<0.000000e+00> : vector<8x256xf32>
    %71 = tpu.matmul %69, %70, %cst_68 {dimension_numbers = #tpu.dot_dimension_numbers<[1], [0], [0], [1], [0, 0, 1, 1], [], []>} : vector<8x20xf32>, vector<20x256xf32>, vector<8x256xf32> -> vector<8x256xf32>
    %72 = arith.addf %67, %71 : vector<8x256xf32>
    %c0_69 = arith.constant 0 : index
    %c2_70 = arith.constant 2 : index
    %c0_71 = arith.constant 0 : index
    %c0_72 = arith.constant 0 : index
    %73 = vector.load %arg7[%c0_69, %c2_70, %c0_71, %c0_72] : memref<1x3x8x20xf32, #tpu.memory_space<vmem>>, vector<1x1x8x20xf32>
    %74 = vector.shape_cast %73 : vector<1x1x8x20xf32> to vector<8x20xf32>
    %75 = arith.addf %31, %63 : vector<20x256xf32>
    %cst_73 = arith.constant dense<0.000000e+00> : vector<8x256xf32>
    %76 = tpu.matmul %74, %75, %cst_73 {dimension_numbers = #tpu.dot_dimension_numbers<[1], [0], [0], [1], [0, 0, 1, 1], [], []>} : vector<8x20xf32>, vector<20x256xf32>, vector<8x256xf32> -> vector<8x256xf32>
    %77 = arith.addf %72, %76 : vector<8x256xf32>
    %c0_74 = arith.constant 0 : index
    %c0_75 = arith.constant 0 : index
    %c0_76 = arith.constant 0 : index
    %78 = vector.load %arg8[%c0_74, %c0_75, %c0_76] : memref<1x8x1xf32, #tpu.memory_space<vmem>>, vector<1x8x1xf32>
    %79 = vector.shape_cast %78 : vector<1x8x1xf32> to vector<8x1xf32>
    %80 = vector.broadcast %79 : vector<8x1xf32> to vector<8x256xf32>
    %81 = arith.addf %77, %80 : vector<8x256xf32>
    %cst_77 = arith.constant 2.000000e-01 : f32
    %82 = vector.broadcast %cst_77 : f32 to vector<8x256xf32>
    %83 = arith.mulf %82, %81 : vector<8x256xf32>
    %84 = arith.maximumf %81, %83 : vector<8x256xf32>
    %c0_78 = arith.constant 0 : index
    %c0_79 = arith.constant 0 : index
    %c0_80 = arith.constant 0 : index
    %c0_81 = arith.constant 0 : index
    %85 = vector.load %arg9[%c0_78, %c0_79, %c0_80, %c0_81] : memref<1x3x20x8xf32, #tpu.memory_space<vmem>>, vector<1x1x20x8xf32>
    %86 = vector.shape_cast %85 : vector<1x1x20x8xf32> to vector<20x8xf32>
    %cst_82 = arith.constant dense<0.000000e+00> : vector<20x256xf32>
    %87 = tpu.matmul %86, %84, %cst_82 {dimension_numbers = #tpu.dot_dimension_numbers<[1], [0], [0], [1], [0, 0, 1, 1], [], []>} : vector<20x8xf32>, vector<8x256xf32>, vector<20x256xf32> -> vector<20x256xf32>
    %c0_83 = arith.constant 0 : index
    %c0_84 = arith.constant 0 : index
    %c0_85 = arith.constant 0 : index
    %c0_86 = arith.constant 0 : index
    %88 = vector.load %arg10[%c0_83, %c0_84, %c0_85, %c0_86] : memref<1x3x20x1xf32, #tpu.memory_space<vmem>>, vector<1x1x20x1xf32>
    %89 = vector.shape_cast %88 : vector<1x1x20x1xf32> to vector<20x1xf32>
    %90 = vector.broadcast %89 : vector<20x1xf32> to vector<20x256xf32>
    %91 = arith.addf %87, %90 : vector<20x256xf32>
    %cst_87 = arith.constant 2.000000e-01 : f32
    %92 = vector.broadcast %cst_87 : f32 to vector<20x256xf32>
    %93 = arith.mulf %92, %91 : vector<20x256xf32>
    %94 = arith.maximumf %91, %93 : vector<20x256xf32>
    %c0_88 = arith.constant 0 : index
    %c1_89 = arith.constant 1 : index
    %c0_90 = arith.constant 0 : index
    %c0_91 = arith.constant 0 : index
    %95 = vector.load %arg9[%c0_88, %c1_89, %c0_90, %c0_91] : memref<1x3x20x8xf32, #tpu.memory_space<vmem>>, vector<1x1x20x8xf32>
    %96 = vector.shape_cast %95 : vector<1x1x20x8xf32> to vector<20x8xf32>
    %cst_92 = arith.constant dense<0.000000e+00> : vector<20x256xf32>
    %97 = tpu.matmul %96, %84, %cst_92 {dimension_numbers = #tpu.dot_dimension_numbers<[1], [0], [0], [1], [0, 0, 1, 1], [], []>} : vector<20x8xf32>, vector<8x256xf32>, vector<20x256xf32> -> vector<20x256xf32>
    %c0_93 = arith.constant 0 : index
    %c1_94 = arith.constant 1 : index
    %c0_95 = arith.constant 0 : index
    %c0_96 = arith.constant 0 : index
    %98 = vector.load %arg10[%c0_93, %c1_94, %c0_95, %c0_96] : memref<1x3x20x1xf32, #tpu.memory_space<vmem>>, vector<1x1x20x1xf32>
    %99 = vector.shape_cast %98 : vector<1x1x20x1xf32> to vector<20x1xf32>
    %100 = vector.broadcast %99 : vector<20x1xf32> to vector<20x256xf32>
    %101 = arith.addf %97, %100 : vector<20x256xf32>
    %cst_97 = arith.constant 2.000000e-01 : f32
    %102 = vector.broadcast %cst_97 : f32 to vector<20x256xf32>
    %103 = arith.mulf %102, %101 : vector<20x256xf32>
    %104 = arith.maximumf %101, %103 : vector<20x256xf32>
    %c0_98 = arith.constant 0 : index
    %c2_99 = arith.constant 2 : index
    %c0_100 = arith.constant 0 : index
    %c0_101 = arith.constant 0 : index
    %105 = vector.load %arg9[%c0_98, %c2_99, %c0_100, %c0_101] : memref<1x3x20x8xf32, #tpu.memory_space<vmem>>, vector<1x1x20x8xf32>
    %106 = vector.shape_cast %105 : vector<1x1x20x8xf32> to vector<20x8xf32>
    %cst_102 = arith.constant dense<0.000000e+00> : vector<20x256xf32>
    %107 = tpu.matmul %106, %84, %cst_102 {dimension_numbers = #tpu.dot_dimension_numbers<[1], [0], [0], [1], [0, 0, 1, 1], [], []>} : vector<20x8xf32>, vector<8x256xf32>, vector<20x256xf32> -> vector<20x256xf32>
    %c0_103 = arith.constant 0 : index
    %c2_104 = arith.constant 2 : index
    %c0_105 = arith.constant 0 : index
    %c0_106 = arith.constant 0 : index
    %108 = vector.load %arg10[%c0_103, %c2_104, %c0_105, %c0_106] : memref<1x3x20x1xf32, #tpu.memory_space<vmem>>, vector<1x1x20x1xf32>
    %109 = vector.shape_cast %108 : vector<1x1x20x1xf32> to vector<20x1xf32>
    %110 = vector.broadcast %109 : vector<20x1xf32> to vector<20x256xf32>
    %111 = arith.addf %107, %110 : vector<20x256xf32>
    %cst_107 = arith.constant 2.000000e-01 : f32
    %112 = vector.broadcast %cst_107 : f32 to vector<20x256xf32>
    %113 = arith.mulf %112, %111 : vector<20x256xf32>
    %114 = arith.maximumf %111, %113 : vector<20x256xf32>
    %c0_108 = arith.constant 0 : index
    %c0_109 = arith.constant 0 : index
    %c0_110 = arith.constant 0 : index
    %c0_111 = arith.constant 0 : index
    %115 = vector.load %arg11[%c0_108, %c0_109, %c0_110, %c0_111] : memref<1x3x20x20xf32, #tpu.memory_space<vmem>>, vector<1x1x20x20xf32>
    %116 = vector.shape_cast %115 : vector<1x1x20x20xf32> to vector<20x20xf32>
    %cst_112 = arith.constant dense<0.000000e+00> : vector<20x256xf32>
    %117 = tpu.matmul %116, %94, %cst_112 {dimension_numbers = #tpu.dot_dimension_numbers<[1], [0], [0], [1], [0, 0, 1, 1], [], []>} : vector<20x20xf32>, vector<20x256xf32>, vector<20x256xf32> -> vector<20x256xf32>
    %c0_113 = arith.constant 0 : index
    %c0_114 = arith.constant 0 : index
    %c0_115 = arith.constant 0 : index
    %c0_116 = arith.constant 0 : index
    %118 = vector.load %arg12[%c0_113, %c0_114, %c0_115, %c0_116] : memref<1x3x20x1xf32, #tpu.memory_space<vmem>>, vector<1x1x20x1xf32>
    %119 = vector.shape_cast %118 : vector<1x1x20x1xf32> to vector<20x1xf32>
    %120 = vector.broadcast %119 : vector<20x1xf32> to vector<20x256xf32>
    %121 = arith.addf %117, %120 : vector<20x256xf32>
    %cst_117 = arith.constant 2.000000e-01 : f32
    %122 = vector.broadcast %cst_117 : f32 to vector<20x256xf32>
    %123 = arith.mulf %122, %121 : vector<20x256xf32>
    %124 = arith.maximumf %121, %123 : vector<20x256xf32>
    %c0_118 = arith.constant 0 : index
    %c1_119 = arith.constant 1 : index
    %c0_120 = arith.constant 0 : index
    %c0_121 = arith.constant 0 : index
    %125 = vector.load %arg11[%c0_118, %c1_119, %c0_120, %c0_121] : memref<1x3x20x20xf32, #tpu.memory_space<vmem>>, vector<1x1x20x20xf32>
    %126 = vector.shape_cast %125 : vector<1x1x20x20xf32> to vector<20x20xf32>
    %127 = arith.addf %104, %124 : vector<20x256xf32>
    %cst_122 = arith.constant dense<0.000000e+00> : vector<20x256xf32>
    %128 = tpu.matmul %126, %127, %cst_122 {dimension_numbers = #tpu.dot_dimension_numbers<[1], [0], [0], [1], [0, 0, 1, 1], [], []>} : vector<20x20xf32>, vector<20x256xf32>, vector<20x256xf32> -> vector<20x256xf32>
    %c0_123 = arith.constant 0 : index
    %c1_124 = arith.constant 1 : index
    %c0_125 = arith.constant 0 : index
    %c0_126 = arith.constant 0 : index
    %129 = vector.load %arg12[%c0_123, %c1_124, %c0_125, %c0_126] : memref<1x3x20x1xf32, #tpu.memory_space<vmem>>, vector<1x1x20x1xf32>
    %130 = vector.shape_cast %129 : vector<1x1x20x1xf32> to vector<20x1xf32>
    %131 = vector.broadcast %130 : vector<20x1xf32> to vector<20x256xf32>
    %132 = arith.addf %128, %131 : vector<20x256xf32>
    %cst_127 = arith.constant 2.000000e-01 : f32
    %133 = vector.broadcast %cst_127 : f32 to vector<20x256xf32>
    %134 = arith.mulf %133, %132 : vector<20x256xf32>
    %135 = arith.maximumf %132, %134 : vector<20x256xf32>
    %c0_128 = arith.constant 0 : index
    %c2_129 = arith.constant 2 : index
    %c0_130 = arith.constant 0 : index
    %c0_131 = arith.constant 0 : index
    %136 = vector.load %arg11[%c0_128, %c2_129, %c0_130, %c0_131] : memref<1x3x20x20xf32, #tpu.memory_space<vmem>>, vector<1x1x20x20xf32>
    %137 = vector.shape_cast %136 : vector<1x1x20x20xf32> to vector<20x20xf32>
    %138 = arith.addf %114, %135 : vector<20x256xf32>
    %cst_132 = arith.constant dense<0.000000e+00> : vector<20x256xf32>
    %139 = tpu.matmul %137, %138, %cst_132 {dimension_numbers = #tpu.dot_dimension_numbers<[1], [0], [0], [1], [0, 0, 1, 1], [], []>} : vector<20x20xf32>, vector<20x256xf32>, vector<20x256xf32> -> vector<20x256xf32>
    %c0_133 = arith.constant 0 : index
    %c2_134 = arith.constant 2 : index
    %c0_135 = arith.constant 0 : index
    %c0_136 = arith.constant 0 : index
    %140 = vector.load %arg12[%c0_133, %c2_134, %c0_135, %c0_136] : memref<1x3x20x1xf32, #tpu.memory_space<vmem>>, vector<1x1x20x1xf32>
    %141 = vector.shape_cast %140 : vector<1x1x20x1xf32> to vector<20x1xf32>
    %142 = vector.broadcast %141 : vector<20x1xf32> to vector<20x256xf32>
    %143 = arith.addf %139, %142 : vector<20x256xf32>
    %cst_137 = arith.constant 2.000000e-01 : f32
    %144 = vector.broadcast %cst_137 : f32 to vector<20x256xf32>
    %145 = arith.mulf %144, %143 : vector<20x256xf32>
    %146 = arith.maximumf %143, %145 : vector<20x256xf32>
    %c0_138 = arith.constant 0 : index
    %c0_139 = arith.constant 0 : index
    %c0_140 = arith.constant 0 : index
    %c0_141 = arith.constant 0 : index
    %147 = vector.load %arg13[%c0_138, %c0_139, %c0_140, %c0_141] : memref<1x3x16x20xf32, #tpu.memory_space<vmem>>, vector<1x1x16x20xf32>
    %148 = vector.shape_cast %147 : vector<1x1x16x20xf32> to vector<16x20xf32>
    %149 = arith.addf %94, %124 : vector<20x256xf32>
    %cst_142 = arith.constant dense<0.000000e+00> : vector<16x256xf32>
    %150 = tpu.matmul %148, %149, %cst_142 {dimension_numbers = #tpu.dot_dimension_numbers<[1], [0], [0], [1], [0, 0, 1, 1], [], []>} : vector<16x20xf32>, vector<20x256xf32>, vector<16x256xf32> -> vector<16x256xf32>
    %c0_143 = arith.constant 0 : index
    %c1_144 = arith.constant 1 : index
    %c0_145 = arith.constant 0 : index
    %c0_146 = arith.constant 0 : index
    %151 = vector.load %arg13[%c0_143, %c1_144, %c0_145, %c0_146] : memref<1x3x16x20xf32, #tpu.memory_space<vmem>>, vector<1x1x16x20xf32>
    %152 = vector.shape_cast %151 : vector<1x1x16x20xf32> to vector<16x20xf32>
    %153 = arith.addf %104, %135 : vector<20x256xf32>
    %cst_147 = arith.constant dense<0.000000e+00> : vector<16x256xf32>
    %154 = tpu.matmul %152, %153, %cst_147 {dimension_numbers = #tpu.dot_dimension_numbers<[1], [0], [0], [1], [0, 0, 1, 1], [], []>} : vector<16x20xf32>, vector<20x256xf32>, vector<16x256xf32> -> vector<16x256xf32>
    %155 = arith.addf %150, %154 : vector<16x256xf32>
    %c0_148 = arith.constant 0 : index
    %c2_149 = arith.constant 2 : index
    %c0_150 = arith.constant 0 : index
    %c0_151 = arith.constant 0 : index
    %156 = vector.load %arg13[%c0_148, %c2_149, %c0_150, %c0_151] : memref<1x3x16x20xf32, #tpu.memory_space<vmem>>, vector<1x1x16x20xf32>
    %157 = vector.shape_cast %156 : vector<1x1x16x20xf32> to vector<16x20xf32>
    %158 = arith.addf %114, %146 : vector<20x256xf32>
    %cst_152 = arith.constant dense<0.000000e+00> : vector<16x256xf32>
    %159 = tpu.matmul %157, %158, %cst_152 {dimension_numbers = #tpu.dot_dimension_numbers<[1], [0], [0], [1], [0, 0, 1, 1], [], []>} : vector<16x20xf32>, vector<20x256xf32>, vector<16x256xf32> -> vector<16x256xf32>
    %160 = arith.addf %155, %159 : vector<16x256xf32>
    %c0_153 = arith.constant 0 : index
    %c0_154 = arith.constant 0 : index
    %c0_155 = arith.constant 0 : index
    %161 = vector.load %arg14[%c0_153, %c0_154, %c0_155] : memref<1x16x1xf32, #tpu.memory_space<vmem>>, vector<1x16x1xf32>
    %162 = vector.shape_cast %161 : vector<1x16x1xf32> to vector<16x1xf32>
    %163 = vector.broadcast %162 : vector<16x1xf32> to vector<16x256xf32>
    %164 = arith.addf %160, %163 : vector<16x256xf32>
    %cst_156 = arith.constant 2.000000e-01 : f32
    %165 = vector.broadcast %cst_156 : f32 to vector<16x256xf32>
    %166 = arith.mulf %165, %164 : vector<16x256xf32>
    %167 = arith.maximumf %164, %166 : vector<16x256xf32>
    %c0_157 = arith.constant 0 : index
    %c0_158 = arith.constant 0 : index
    %c0_159 = arith.constant 0 : index
    %168 = vector.load %arg15[%c0_157, %c0_158, %c0_159] : memref<1x16x16xf32, #tpu.memory_space<vmem>>, vector<1x16x16xf32>
    %169 = vector.shape_cast %168 : vector<1x16x16xf32> to vector<16x16xf32>
    %cst_160 = arith.constant dense<0.000000e+00> : vector<16x256xf32>
    %170 = tpu.matmul %169, %167, %cst_160 {dimension_numbers = #tpu.dot_dimension_numbers<[1], [0], [0], [1], [0, 0, 1, 1], [], []>} : vector<16x16xf32>, vector<16x256xf32>, vector<16x256xf32> -> vector<16x256xf32>
    %c0_161 = arith.constant 0 : index
    %c0_162 = arith.constant 0 : index
    %c0_163 = arith.constant 0 : index
    %171 = vector.load %arg16[%c0_161, %c0_162, %c0_163] : memref<1x16x1xf32, #tpu.memory_space<vmem>>, vector<1x16x1xf32>
    %172 = vector.shape_cast %171 : vector<1x16x1xf32> to vector<16x1xf32>
    %173 = vector.broadcast %172 : vector<16x1xf32> to vector<16x256xf32>
    %174 = arith.addf %170, %173 : vector<16x256xf32>
    %cst_164 = arith.constant 2.000000e-01 : f32
    %175 = vector.broadcast %cst_164 : f32 to vector<16x256xf32>
    %176 = arith.mulf %175, %174 : vector<16x256xf32>
    %177 = arith.maximumf %174, %176 : vector<16x256xf32>
    %c0_165 = arith.constant 0 : index
    %c0_166 = arith.constant 0 : index
    %c0_167 = arith.constant 0 : index
    %178 = vector.load %arg17[%c0_165, %c0_166, %c0_167] : memref<1x16x256xf32, #tpu.memory_space<vmem>>, vector<1x16x256xf32>
    %179 = vector.shape_cast %178 : vector<1x16x256xf32> to vector<16x256xf32>
    %180 = vector.shape_cast %177 : vector<16x256xf32> to vector<1x16x256xf32>
    tpu.vector_store %arg17[%c0_165, %c0_166, %c0_167], %180 {strides = array<i32>} : memref<1x16x256xf32, #tpu.memory_space<vmem>>, vector<1x16x256xf32>,
    return
  }
  func.func @transform_0(%arg0: i32, %arg1: i32) -> (i32, i32, i32) {
    %c0_i32 = arith.constant 0 : i32
    %c0_i32_0 = arith.constant 0 : i32
    return %arg0, %c0_i32, %arg1 : i32, i32, i32
  }
  func.func @transform_1(%arg0: i32, %arg1: i32) -> (i32, i32, i32, i32) {
    %c0_i32 = arith.constant 0 : i32
    %c0_i32_0 = arith.constant 0 : i32
    %c0_i32_1 = arith.constant 0 : i32
    %c0_i32_2 = arith.constant 0 : i32
    return %arg0, %c0_i32, %c0_i32_0, %c0_i32_1 : i32, i32, i32, i32
  }
  func.func @transform_2(%arg0: i32, %arg1: i32) -> (i32, i32, i32, i32) {
    %c0_i32 = arith.constant 0 : i32
    %c0_i32_0 = arith.constant 0 : i32
    %c0_i32_1 = arith.constant 0 : i32
    %c0_i32_2 = arith.constant 0 : i32
    return %arg0, %c0_i32, %c0_i32_0, %c0_i32_1 : i32, i32, i32, i32
  }
  func.func @transform_3(%arg0: i32, %arg1: i32) -> (i32, i32, i32, i32) {
    %c0_i32 = arith.constant 0 : i32
    %c0_i32_0 = arith.constant 0 : i32
    %c0_i32_1 = arith.constant 0 : i32
    %c0_i32_2 = arith.constant 0 : i32
    return %arg0, %c0_i32, %c0_i32_0, %c0_i32_1 : i32, i32, i32, i32
  }
  func.func @transform_4(%arg0: i32, %arg1: i32) -> (i32, i32, i32, i32) {
    %c0_i32 = arith.constant 0 : i32
    %c0_i32_0 = arith.constant 0 : i32
    %c0_i32_1 = arith.constant 0 : i32
    %c0_i32_2 = arith.constant 0 : i32
    return %arg0, %c0_i32, %c0_i32_0, %c0_i32_1 : i32, i32, i32, i32
  }
  func.func @transform_5(%arg0: i32, %arg1: i32) -> (i32, i32, i32, i32) {
    %c0_i32 = arith.constant 0 : i32
    %c0_i32_0 = arith.constant 0 : i32
    %c0_i32_1 = arith.constant 0 : i32
    %c0_i32_2 = arith.constant 0 : i32
    return %arg0, %c0_i32, %c0_i32_0, %c0_i32_1 : i32, i32, i32, i32
  }
  func.func @transform_6(%arg0: i32, %arg1: i32) -> (i32, i32, i32) {
    %c0_i32 = arith.constant 0 : i32
    %c0_i32_0 = arith.constant 0 : i32
    %c0_i32_1 = arith.constant 0 : i32
    return %arg0, %c0_i32, %c0_i32_0 : i32, i32, i32
  }
  func.func @transform_7(%arg0: i32, %arg1: i32) -> (i32, i32, i32, i32) {
    %c0_i32 = arith.constant 0 : i32
    %c0_i32_0 = arith.constant 0 : i32
    %c0_i32_1 = arith.constant 0 : i32
    %c0_i32_2 = arith.constant 0 : i32
    return %arg0, %c0_i32, %c0_i32_0, %c0_i32_1 : i32, i32, i32, i32
  }
  func.func @transform_8(%arg0: i32, %arg1: i32) -> (i32, i32, i32, i32) {
    %c0_i32 = arith.constant 0 : i32
    %c0_i32_0 = arith.constant 0 : i32
    %c0_i32_1 = arith.constant 0 : i32
    %c0_i32_2 = arith.constant 0 : i32
    return %arg0, %c0_i32, %c0_i32_0, %c0_i32_1 : i32, i32, i32, i32
  }
  func.func @transform_9(%arg0: i32, %arg1: i32) -> (i32, i32, i32, i32) {
    %c0_i32 = arith.constant 0 : i32
    %c0_i32_0 = arith.constant 0 : i32
    %c0_i32_1 = arith.constant 0 : i32
    %c0_i32_2 = arith.constant 0 : i32
    return %arg0, %c0_i32, %c0_i32_0, %c0_i32_1 : i32, i32, i32, i32
  }
  func.func @transform_10(%arg0: i32, %arg1: i32) -> (i32, i32, i32, i32) {
    %c0_i32 = arith.constant 0 : i32
    %c0_i32_0 = arith.constant 0 : i32
    %c0_i32_1 = arith.constant 0 : i32
    %c0_i32_2 = arith.constant 0 : i32
    return %arg0, %c0_i32, %c0_i32_0, %c0_i32_1 : i32, i32, i32, i32
  }
  func.func @transform_11(%arg0: i32, %arg1: i32) -> (i32, i32, i32, i32) {
    %c0_i32 = arith.constant 0 : i32
    %c0_i32_0 = arith.constant 0 : i32
    %c0_i32_1 = arith.constant 0 : i32
    %c0_i32_2 = arith.constant 0 : i32
    return %arg0, %c0_i32, %c0_i32_0, %c0_i32_1 : i32, i32, i32, i32
  }
  func.func @transform_12(%arg0: i32, %arg1: i32) -> (i32, i32, i32) {
    %c0_i32 = arith.constant 0 : i32
    %c0_i32_0 = arith.constant 0 : i32
    %c0_i32_1 = arith.constant 0 : i32
    return %arg0, %c0_i32, %c0_i32_0 : i32, i32, i32
  }
  func.func @transform_13(%arg0: i32, %arg1: i32) -> (i32, i32, i32) {
    %c0_i32 = arith.constant 0 : i32
    %c0_i32_0 = arith.constant 0 : i32
    %c0_i32_1 = arith.constant 0 : i32
    return %arg0, %c0_i32, %c0_i32_0 : i32, i32, i32
  }
  func.func @transform_14(%arg0: i32, %arg1: i32) -> (i32, i32, i32) {
    %c0_i32 = arith.constant 0 : i32
    %c0_i32_0 = arith.constant 0 : i32
    %c0_i32_1 = arith.constant 0 : i32
    return %arg0, %c0_i32, %c0_i32_0 : i32, i32, i32
  }
  func.func @transform_15(%arg0: i32, %arg1: i32) -> (i32, i32, i32) {
    %c0_i32 = arith.constant 0 : i32
    %c0_i32_0 = arith.constant 0 : i32
    return %arg0, %c0_i32, %arg1 : i32, i32, i32
  }
}

</mosaic_0001>

<llo_original>
// kernel: squeeze.3
$region0: #{squeeze.3}
  %s0 = inlined_call_operand.vmem [shape: f32[1,16,512], index: 0, kind: input, shape index: {}]
  %s1 = inlined_call_operand.vmem [shape: f32[16,2,16,16], index: 1, kind: output, shape index: {}]
  %v2 = vld [vmem:[%s0] sm:$0xff]
  %vm3 = vcmask 130048
  %4 = vst.msk [vmem:[%s1] sm:$0x1] %vm3, %v2
  %s5 = scalar_lea.vmem %s1, 31
  %6 = vst.msk [vmem:[%s5] sm:$0x2] %vm3, %v2
  %s7 = scalar_lea.vmem %s1, 62
  %8 = vst.msk [vmem:[%s7] sm:$0x4] %vm3, %v2
  %s9 = scalar_lea.vmem %s1, 93
  %10 = vst.msk [vmem:[%s9] sm:$0x8] %vm3, %v2
  %s11 = scalar_lea.vmem %s1, 124
  %12 = vst.msk [vmem:[%s11] sm:$0x10] %vm3, %v2
  %s13 = scalar_lea.vmem %s1, 155
  %14 = vst.msk [vmem:[%s13] sm:$0x20] %vm3, %v2
  %s15 = scalar_lea.vmem %s1, 186
  %16 = vst.msk [vmem:[%s15] sm:$0x40] %vm3, %v2
  %s17 = scalar_lea.vmem %s1, 217
  %18 = vst.msk [vmem:[%s17] sm:$0x80] %vm3, %v2
  %s19 = scalar_lea.vmem %s0, 8
  %v20 = vld [vmem:[%s19] sm:$0xff]
  %vm21 = vcmask 130048
  %s22 = scalar_lea.vmem %s1, 8
  %23 = vst.msk [vmem:[%s22] sm:$0x1] %vm21, %v20
  %s24 = scalar_lea.vmem %s1, 39
  %25 = vst.msk [vmem:[%s24] sm:$0x2] %vm21, %v20
  %s26 = scalar_lea.vmem %s1, 70
  %27 = vst.msk [vmem:[%s26] sm:$0x4] %vm21, %v20
  %s28 = scalar_lea.vmem %s1, 101
  %29 = vst.msk [vmem:[%s28] sm:$0x8] %vm21, %v20
  %s30 = scalar_lea.vmem %s1, 132
  %31 = vst.msk [vmem:[%s30] sm:$0x10] %vm21, %v20
  %s32 = scalar_lea.vmem %s1, 163
  %33 = vst.msk [vmem:[%s32] sm:$0x20] %vm21, %v20
  %s34 = scalar_lea.vmem %s1, 194
  %35 = vst.msk [vmem:[%s34] sm:$0x40] %vm21, %v20
  %s36 = scalar_lea.vmem %s1, 225
  %37 = vst.msk [vmem:[%s36] sm:$0x80] %vm21, %v20
  %s38 = scalar_lea.vmem %s0, 16
  %v39 = vld [vmem:[%s38] sm:$0xff]
  %vm40 = vcmask 130048
  %s41 = scalar_lea.vmem %s1, 16
  %42 = vst.msk [vmem:[%s41] sm:$0x1] %vm40, %v39
  %s43 = scalar_lea.vmem %s1, 47
  %44 = vst.msk [vmem:[%s43] sm:$0x2] %vm40, %v39
  %s45 = scalar_lea.vmem %s1, 78
  %46 = vst.msk [vmem:[%s45] sm:$0x4] %vm40, %v39
  %s47 = scalar_lea.vmem %s1, 109
  %48 = vst.msk [vmem:[%s47] sm:$0x8] %vm40, %v39
  %s49 = scalar_lea.vmem %s1, 140
  %50 = vst.msk [vmem:[%s49] sm:$0x10] %vm40, %v39
  %s51 = scalar_lea.vmem %s1, 171
  %52 = vst.msk [vmem:[%s51] sm:$0x20] %vm40, %v39
  %s53 = scalar_lea.vmem %s1, 202
  %54 = vst.msk [vmem:[%s53] sm:$0x40] %vm40, %v39
  %s55 = scalar_lea.vmem %s1, 233
  %56 = vst.msk [vmem:[%s55] sm:$0x80] %vm40, %v39
  %s57 = scalar_lea.vmem %s0, 24
  %v58 = vld [vmem:[%s57] sm:$0xff]
  %vm59 = vcmask 130048
  %s60 = scalar_lea.vmem %s1, 24
  %61 = vst.msk [vmem:[%s60] sm:$0x1] %vm59, %v58
  %s62 = scalar_lea.vmem %s1, 55
  %63 = vst.msk [vmem:[%s62] sm:$0x2] %vm59, %v58
  %s64 = scalar_lea.vmem %s1, 86
  %65 = vst.msk [vmem:[%s64] sm:$0x4] %vm59, %v58
  %s66 = scalar_lea.vmem %s1, 117
  %67 = vst.msk [vmem:[%s66] sm:$0x8] %vm59, %v58
  %s68 = scalar_lea.vmem %s1, 148
  %69 = vst.msk [vmem:[%s68] sm:$0x10] %vm59, %v58
  %s70 = scalar_lea.vmem %s1, 179
  %71 = vst.msk [vmem:[%s70] sm:$0x20] %vm59, %v58
  %s72 = scalar_lea.vmem %s1, 210
  %73 = vst.msk [vmem:[%s72] sm:$0x40] %vm59, %v58
  %s74 = scalar_lea.vmem %s1, 241
  %75 = vst.msk [vmem:[%s74] sm:$0x80] %vm59, %v58
  %s76 = scalar_lea.vmem %s0, 32
  %v77 = vld [vmem:[%s76] sm:$0xff]
  %vm78 = vcmask 130048
  %s79 = scalar_lea.vmem %s1, 256
  %80 = vst.msk [vmem:[%s79] sm:$0x1] %vm78, %v77
  %s81 = scalar_lea.vmem %s1, 287
  %82 = vst.msk [vmem:[%s81] sm:$0x2] %vm78, %v77
  %s83 = scalar_lea.vmem %s1, 318
  %84 = vst.msk [vmem:[%s83] sm:$0x4] %vm78, %v77
  %s85 = scalar_lea.vmem %s1, 349
  %86 = vst.msk [vmem:[%s85] sm:$0x8] %vm78, %v77
  %s87 = scalar_lea.vmem %s1, 380
  %88 = vst.msk [vmem:[%s87] sm:$0x10] %vm78, %v77
  %s89 = scalar_lea.vmem %s1, 411
  %90 = vst.msk [vmem:[%s89] sm:$0x20] %vm78, %v77
  %s91 = scalar_lea.vmem %s1, 442
  %92 = vst.msk [vmem:[%s91] sm:$0x40] %vm78, %v77
  %s93 = scalar_lea.vmem %s1, 473
  %94 = vst.msk [vmem:[%s93] sm:$0x80] %vm78, %v77
  %s95 = scalar_lea.vmem %s0, 40
  %v96 = vld [vmem:[%s95] sm:$0xff]
  %vm97 = vcmask 130048
  %s98 = scalar_lea.vmem %s1, 264
  %99 = vst.msk [vmem:[%s98] sm:$0x1] %vm97, %v96
  %s100 = scalar_lea.vmem %s1, 295
  %101 = vst.msk [vmem:[%s100] sm:$0x2] %vm97, %v96
  %s102 = scalar_lea.vmem %s1, 326
  %103 = vst.msk [vmem:[%s102] sm:$0x4] %vm97, %v96
  %s104 = scalar_lea.vmem %s1, 357
  %105 = vst.msk [vmem:[%s104] sm:$0x8] %vm97, %v96
  %s106 = scalar_lea.vmem %s1, 388
  %107 = vst.msk [vmem:[%s106] sm:$0x10] %vm97, %v96
  %s108 = scalar_lea.vmem %s1, 419
  %109 = vst.msk [vmem:[%s108] sm:$0x20] %vm97, %v96
  %s110 = scalar_lea.vmem %s1, 450
  %111 = vst.msk [vmem:[%s110] sm:$0x40] %vm97, %v96
  %s112 = scalar_lea.vmem %s1, 481
  %113 = vst.msk [vmem:[%s112] sm:$0x80] %vm97, %v96
  %s114 = scalar_lea.vmem %s0, 48
  %v115 = vld [vmem:[%s114] sm:$0xff]
  %vm116 = vcmask 130048
  %s117 = scalar_lea.vmem %s1, 272
  %118 = vst.msk [vmem:[%s117] sm:$0x1] %vm116, %v115
  %s119 = scalar_lea.vmem %s1, 303
  %120 = vst.msk [vmem:[%s119] sm:$0x2] %vm116, %v115
  %s121 = scalar_lea.vmem %s1, 334
  %122 = vst.msk [vmem:[%s121] sm:$0x4] %vm116, %v115
  %s123 = scalar_lea.vmem %s1, 365
  %124 = vst.msk [vmem:[%s123] sm:$0x8] %vm116, %v115
  %s125 = scalar_lea.vmem %s1, 396
  %126 = vst.msk [vmem:[%s125] sm:$0x10] %vm116, %v115
  %s127 = scalar_lea.vmem %s1, 427
  %128 = vst.msk [vmem:[%s127] sm:$0x20] %vm116, %v115
  %s129 = scalar_lea.vmem %s1, 458
  %130 = vst.msk [vmem:[%s129] sm:$0x40] %vm116, %v115
  %s131 = scalar_lea.vmem %s1, 489
  %132 = vst.msk [vmem:[%s131] sm:$0x80] %vm116, %v115
  %s133 = scalar_lea.vmem %s0, 56
  %v134 = vld [vmem:[%s133] sm:$0xff]
  %vm135 = vcmask 130048
  %s136 = scalar_lea.vmem %s1, 280
  %137 = vst.msk [vmem:[%s136] sm:$0x1] %vm135, %v134
  %s138 = scalar_lea.vmem %s1, 311
  %139 = vst.msk [vmem:[%s138] sm:$0x2] %vm135, %v134
  %s140 = scalar_lea.vmem %s1, 342
  %141 = vst.msk [vmem:[%s140] sm:$0x4] %vm135, %v134
  %s142 = scalar_lea.vmem %s1, 373
  %143 = vst.msk [vmem:[%s142] sm:$0x8] %vm135, %v134
  %s144 = scalar_lea.vmem %s1, 404
  %145 = vst.msk [vmem:[%s144] sm:$0x10] %vm135, %v134
  %s146 = scalar_lea.vmem %s1, 435
  %147 = vst.msk [vmem:[%s146] sm:$0x20] %vm135, %v134
  %s148 = scalar_lea.vmem %s1, 466
  %149 = vst.msk [vmem:[%s148] sm:$0x40] %vm135, %v134
  %s150 = scalar_lea.vmem %s1, 497
  %151 = vst.msk [vmem:[%s150] sm:$0x80] %vm135, %v134
  %v152 = vld [vmem:[%s0] ss:$8 sm:$0xf]
  %s153 = scalar_lea.vmem %s0, 4294967265
  %v154 = vld [vmem:[%s153] ss:$8 sm:$0xf0]
  %vm155 = vcmask 1047556
  %v156 = vsel %vm155, %v154, %v152
  %157 = vrot.lane.b32.xlu0 %v156, 112
  %v158 = vpop.permute.xlu0 %157
  %vm159 = vcmask 130048
  %s160 = scalar_lea.vmem %s1, 1
  %161 = vst.msk [vmem:[%s160] ss:$8 sm:$0xf] %vm159, %v158
  %s162 = scalar_lea.vmem %s1, 1
  %163 = vst.msk [vmem:[%s162] ss:$8 sm:$0xf0] %vm159, %v158
  %s164 = scalar_lea.vmem %s0, 2
  %v165 = vld [vmem:[%s164] ss:$8 sm:$0xf]
  %s166 = scalar_lea.vmem %s0, 4294967267
  %v167 = vld [vmem:[%s166] ss:$8 sm:$0xf0]
  %vm168 = vcmask 1047556
  %v169 = vsel %vm168, %v167, %v165
  %170 = vrot.lane.b32.xlu0 %v169, 112
  %v171 = vpop.permute.xlu0 %170
  %vm172 = vcmask 130048
  %s173 = scalar_lea.vmem %s1, 65
  %174 = vst.msk [vmem:[%s173] ss:$8 sm:$0xf] %vm172, %v171
  %s175 = scalar_lea.vmem %s1, 65
  %176 = vst.msk [vmem:[%s175] ss:$8 sm:$0xf0] %vm172, %v171
  %s177 = scalar_lea.vmem %s0, 4
  %v178 = vld [vmem:[%s177] ss:$8 sm:$0xf]
  %s179 = scalar_lea.vmem %s0, 4294967269
  %v180 = vld [vmem:[%s179] ss:$8 sm:$0xf0]
  %vm181 = vcmask 1047556
  %v182 = vsel %vm181, %v180, %v178
  %183 = vrot.lane.b32.xlu0 %v182, 112
  %v184 = vpop.permute.xlu0 %183
  %vm185 = vcmask 130048
  %s186 = scalar_lea.vmem %s1, 129
  %187 = vst.msk [vmem:[%s186] ss:$8 sm:$0xf] %vm185, %v184
  %s188 = scalar_lea.vmem %s1, 129
  %189 = vst.msk [vmem:[%s188] ss:$8 sm:$0xf0] %vm185, %v184
  %s190 = scalar_lea.vmem %s0, 6
  %v191 = vld [vmem:[%s190] ss:$8 sm:$0xf]
  %s192 = scalar_lea.vmem %s0, 4294967271
  %v193 = vld [vmem:[%s192] ss:$8 sm:$0xf0]
  %vm194 = vcmask 1047556
  %v195 = vsel %vm194, %v193, %v191
  %196 = vrot.lane.b32.xlu0 %v195, 112
  %v197 = vpop.permute.xlu0 %196
  %vm198 = vcmask 130048
  %s199 = scalar_lea.vmem %s1, 193
  %200 = vst.msk [vmem:[%s199] ss:$8 sm:$0xf] %vm198, %v197
  %s201 = scalar_lea.vmem %s1, 193
  %202 = vst.msk [vmem:[%s201] ss:$8 sm:$0xf0] %vm198, %v197
  %s203 = scalar_lea.vmem %s0, 32
  %v204 = vld [vmem:[%s203] ss:$8 sm:$0xf]
  %s205 = scalar_lea.vmem %s0, 1
  %v206 = vld [vmem:[%s205] ss:$8 sm:$0xf0]
  %vm207 = vcmask 1047556
  %v208 = vsel %vm207, %v206, %v204
  %209 = vrot.lane.b32.xlu0 %v208, 112
  %v210 = vpop.permute.xlu0 %209
  %vm211 = vcmask 130048
  %s212 = scalar_lea.vmem %s1, 257
  %213 = vst.msk [vmem:[%s212] ss:$8 sm:$0xf] %vm211, %v210
  %s214 = scalar_lea.vmem %s1, 257
  %215 = vst.msk [vmem:[%s214] ss:$8 sm:$0xf0] %vm211, %v210
  %s216 = scalar_lea.vmem %s0, 34
  %v217 = vld [vmem:[%s216] ss:$8 sm:$0xf]
  %s218 = scalar_lea.vmem %s0, 3
  %v219 = vld [vmem:[%s218] ss:$8 sm:$0xf0]
  %vm220 = vcmask 1047556
  %v221 = vsel %vm220, %v219, %v217
  %222 = vrot.lane.b32.xlu0 %v221, 112
  %v223 = vpop.permute.xlu0 %222
  %vm224 = vcmask 130048
  %s225 = scalar_lea.vmem %s1, 321
  %226 = vst.msk [vmem:[%s225] ss:$8 sm:$0xf] %vm224, %v223
  %s227 = scalar_lea.vmem %s1, 321
  %228 = vst.msk [vmem:[%s227] ss:$8 sm:$0xf0] %vm224, %v223
  %s229 = scalar_lea.vmem %s0, 36
  %v230 = vld [vmem:[%s229] ss:$8 sm:$0xf]
  %s231 = scalar_lea.vmem %s0, 5
  %v232 = vld [vmem:[%s231] ss:$8 sm:$0xf0]
  %vm233 = vcmask 1047556
  %v234 = vsel %vm233, %v232, %v230
  %235 = vrot.lane.b32.xlu0 %v234, 112
  %v236 = vpop.permute.xlu0 %235
  %vm237 = vcmask 130048
  %s238 = scalar_lea.vmem %s1, 385
  %239 = vst.msk [vmem:[%s238] ss:$8 sm:$0xf] %vm237, %v236
  %s240 = scalar_lea.vmem %s1, 385
  %241 = vst.msk [vmem:[%s240] ss:$8 sm:$0xf0] %vm237, %v236
  %s242 = scalar_lea.vmem %s0, 38
  %v243 = vld [vmem:[%s242] ss:$8 sm:$0xf]
  %s244 = scalar_lea.vmem %s0, 7
  %v245 = vld [vmem:[%s244] ss:$8 sm:$0xf0]
  %vm246 = vcmask 1047556
  %v247 = vsel %vm246, %v245, %v243
  %248 = vrot.lane.b32.xlu0 %v247, 112
  %v249 = vpop.permute.xlu0 %248
  %vm250 = vcmask 130048
  %s251 = scalar_lea.vmem %s1, 449
  %252 = vst.msk [vmem:[%s251] ss:$8 sm:$0xf] %vm250, %v249
  %s253 = scalar_lea.vmem %s1, 449
  %254 = vst.msk [vmem:[%s253] ss:$8 sm:$0xf0] %vm250, %v249
  %v255 = vld [vmem:[%s0] ss:$8 sm:$0xf]
  %s256 = scalar_lea.vmem %s0, 4294967265
  %v257 = vld [vmem:[%s256] ss:$8 sm:$0xf0]
  %vm258 = vcmask 1047556
  %v259 = vsel %vm258, %v257, %v255
  %260 = vrot.lane.b32.xlu0 %v259, 96
  %v261 = vpop.permute.xlu0 %260
  %vm262 = vcmask 130048
  %s263 = scalar_lea.vmem %s1, 2
  %264 = vst.msk [vmem:[%s263] ss:$8 sm:$0xf] %vm262, %v261
  %s265 = scalar_lea.vmem %s1, 2
  %266 = vst.msk [vmem:[%s265] ss:$8 sm:$0xf0] %vm262, %v261
  %s267 = scalar_lea.vmem %s0, 2
  %v268 = vld [vmem:[%s267] ss:$8 sm:$0xf]
  %s269 = scalar_lea.vmem %s0, 4294967267
  %v270 = vld [vmem:[%s269] ss:$8 sm:$0xf0]
  %vm271 = vcmask 1047556
  %v272 = vsel %vm271, %v270, %v268
  %273 = vrot.lane.b32.xlu0 %v272, 96
  %v274 = vpop.permute.xlu0 %273
  %vm275 = vcmask 130048
  %s276 = scalar_lea.vmem %s1, 66
  %277 = vst.msk [vmem:[%s276] ss:$8 sm:$0xf] %vm275, %v274
  %s278 = scalar_lea.vmem %s1, 66
  %279 = vst.msk [vmem:[%s278] ss:$8 sm:$0xf0] %vm275, %v274
  %s280 = scalar_lea.vmem %s0, 4
  %v281 = vld [vmem:[%s280] ss:$8 sm:$0xf]
  %s282 = scalar_lea.vmem %s0, 4294967269
  %v283 = vld [vmem:[%s282] ss:$8 sm:$0xf0]
  %vm284 = vcmask 1047556
  %v285 = vsel %vm284, %v283, %v281
  %286 = vrot.lane.b32.xlu0 %v285, 96
  %v287 = vpop.permute.xlu0 %286
  %vm288 = vcmask 130048
  %s289 = scalar_lea.vmem %s1, 130
  %290 = vst.msk [vmem:[%s289] ss:$8 sm:$0xf] %vm288, %v287
  %s291 = scalar_lea.vmem %s1, 130
  %292 = vst.msk [vmem:[%s291] ss:$8 sm:$0xf0] %vm288, %v287
  %s293 = scalar_lea.vmem %s0, 6
  %v294 = vld [vmem:[%s293] ss:$8 sm:$0xf]
  %s295 = scalar_lea.vmem %s0, 4294967271
  %v296 = vld [vmem:[%s295] ss:$8 sm:$0xf0]
  %vm297 = vcmask 1047556
  %v298 = vsel %vm297, %v296, %v294
  %299 = vrot.lane.b32.xlu0 %v298, 96
  %v300 = vpop.permute.xlu0 %299
  %vm301 = vcmask 130048
  %s302 = scalar_lea.vmem %s1, 194
  %303 = vst.msk [vmem:[%s302] ss:$8 sm:$0xf] %vm301, %v300
  %s304 = scalar_lea.vmem %s1, 194
  %305 = vst.msk [vmem:[%s304] ss:$8 sm:$0xf0] %vm301, %v300
  %s306 = scalar_lea.vmem %s0, 32
  %v307 = vld [vmem:[%s306] ss:$8 sm:$0xf]
  %s308 = scalar_lea.vmem %s0, 1
  %v309 = vld [vmem:[%s308] ss:$8 sm:$0xf0]
  %vm310 = vcmask 1047556
  %v311 = vsel %vm310, %v309, %v307
  %312 = vrot.lane.b32.xlu0 %v311, 96
  %v313 = vpop.permute.xlu0 %312
  %vm314 = vcmask 130048
  %s315 = scalar_lea.vmem %s1, 258
  %316 = vst.msk [vmem:[%s315] ss:$8 sm:$0xf] %vm314, %v313
  %s317 = scalar_lea.vmem %s1, 258
  %318 = vst.msk [vmem:[%s317] ss:$8 sm:$0xf0] %vm314, %v313
  %s319 = scalar_lea.vmem %s0, 34
  %v320 = vld [vmem:[%s319] ss:$8 sm:$0xf]
  %s321 = scalar_lea.vmem %s0, 3
  %v322 = vld [vmem:[%s321] ss:$8 sm:$0xf0]
  %vm323 = vcmask 1047556
  %v324 = vsel %vm323, %v322, %v320
  %325 = vrot.lane.b32.xlu0 %v324, 96
  %v326 = vpop.permute.xlu0 %325
  %vm327 = vcmask 130048
  %s328 = scalar_lea.vmem %s1, 322
  %329 = vst.msk [vmem:[%s328] ss:$8 sm:$0xf] %vm327, %v326
  %s330 = scalar_lea.vmem %s1, 322
  %331 = vst.msk [vmem:[%s330] ss:$8 sm:$0xf0] %vm327, %v326
  %s332 = scalar_lea.vmem %s0, 36
  %v333 = vld [vmem:[%s332] ss:$8 sm:$0xf]
  %s334 = scalar_lea.vmem %s0, 5
  %v335 = vld [vmem:[%s334] ss:$8 sm:$0xf0]
  %vm336 = vcmask 1047556
  %v337 = vsel %vm336, %v335, %v333
  %338 = vrot.lane.b32.xlu0 %v337, 96
  %v339 = vpop.permute.xlu0 %338
  %vm340 = vcmask 130048
  %s341 = scalar_lea.vmem %s1, 386
  %342 = vst.msk [vmem:[%s341] ss:$8 sm:$0xf] %vm340, %v339
  %s343 = scalar_lea.vmem %s1, 386
  %344 = vst.msk [vmem:[%s343] ss:$8 sm:$0xf0] %vm340, %v339
  %s345 = scalar_lea.vmem %s0, 38
  %v346 = vld [vmem:[%s345] ss:$8 sm:$0xf]
  %s347 = scalar_lea.vmem %s0, 7
  %v348 = vld [vmem:[%s347] ss:$8 sm:$0xf0]
  %vm349 = vcmask 1047556
  %v350 = vsel %vm349, %v348, %v346
  %351 = vrot.lane.b32.xlu0 %v350, 96
  %v352 = vpop.permute.xlu0 %351
  %vm353 = vcmask 130048
  %s354 = scalar_lea.vmem %s1, 450
  %355 = vst.msk [vmem:[%s354] ss:$8 sm:$0xf] %vm353, %v352
  %s356 = scalar_lea.vmem %s1, 450
  %357 = vst.msk [vmem:[%s356] ss:$8 sm:$0xf0] %vm353, %v352
  %v358 = vld [vmem:[%s0] ss:$8 sm:$0xf]
  %s359 = scalar_lea.vmem %s0, 4294967265
  %v360 = vld [vmem:[%s359] ss:$8 sm:$0xf0]
  %vm361 = vcmask 1047556
  %v362 = vsel %vm361, %v360, %v358
  %363 = vrot.lane.b32.xlu0 %v362, 80
  %v364 = vpop.permute.xlu0 %363
  %vm365 = vcmask 130048
  %s366 = scalar_lea.vmem %s1, 3
  %367 = vst.msk [vmem:[%s366] ss:$8 sm:$0xf] %vm365, %v364
  %s368 = scalar_lea.vmem %s1, 3
  %369 = vst.msk [vmem:[%s368] ss:$8 sm:$0xf0] %vm365, %v364
  %s370 = scalar_lea.vmem %s0, 2
  %v371 = vld [vmem:[%s370] ss:$8 sm:$0xf]
  %s372 = scalar_lea.vmem %s0, 4294967267
  %v373 = vld [vmem:[%s372] ss:$8 sm:$0xf0]
  %vm374 = vcmask 1047556
  %v375 = vsel %vm374, %v373, %v371
  %376 = vrot.lane.b32.xlu0 %v375, 80
  %v377 = vpop.permute.xlu0 %376
  %vm378 = vcmask 130048
  %s379 = scalar_lea.vmem %s1, 67
  %380 = vst.msk [vmem:[%s379] ss:$8 sm:$0xf] %vm378, %v377
  %s381 = scalar_lea.vmem %s1, 67
  %382 = vst.msk [vmem:[%s381] ss:$8 sm:$0xf0] %vm378, %v377
  %s383 = scalar_lea.vmem %s0, 4
  %v384 = vld [vmem:[%s383] ss:$8 sm:$0xf]
  %s385 = scalar_lea.vmem %s0, 4294967269
  %v386 = vld [vmem:[%s385] ss:$8 sm:$0xf0]
  %vm387 = vcmask 1047556
  %v388 = vsel %vm387, %v386, %v384
  %389 = vrot.lane.b32.xlu0 %v388, 80
  %v390 = vpop.permute.xlu0 %389
  %vm391 = vcmask 130048
  %s392 = scalar_lea.vmem %s1, 131
  %393 = vst.msk [vmem:[%s392] ss:$8 sm:$0xf] %vm391, %v390
  %s394 = scalar_lea.vmem %s1, 131
  %395 = vst.msk [vmem:[%s394] ss:$8 sm:$0xf0] %vm391, %v390
  %s396 = scalar_lea.vmem %s0, 6
  %v397 = vld [vmem:[%s396] ss:$8 sm:$0xf]
  %s398 = scalar_lea.vmem %s0, 4294967271
  %v399 = vld [vmem:[%s398] ss:$8 sm:$0xf0]
  %vm400 = vcmask 1047556
  %v401 = vsel %vm400, %v399, %v397
  %402 = vrot.lane.b32.xlu0 %v401, 80
  %v403 = vpop.permute.xlu0 %402
  %vm404 = vcmask 130048
  %s405 = scalar_lea.vmem %s1, 195
  %406 = vst.msk [vmem:[%s405] ss:$8 sm:$0xf] %vm404, %v403
  %s407 = scalar_lea.vmem %s1, 195
  %408 = vst.msk [vmem:[%s407] ss:$8 sm:$0xf0] %vm404, %v403
  %s409 = scalar_lea.vmem %s0, 32
  %v410 = vld [vmem:[%s409] ss:$8 sm:$0xf]
  %s411 = scalar_lea.vmem %s0, 1
  %v412 = vld [vmem:[%s411] ss:$8 sm:$0xf0]
  %vm413 = vcmask 1047556
  %v414 = vsel %vm413, %v412, %v410
  %415 = vrot.lane.b32.xlu0 %v414, 80
  %v416 = vpop.permute.xlu0 %415
  %vm417 = vcmask 130048
  %s418 = scalar_lea.vmem %s1, 259
  %419 = vst.msk [vmem:[%s418] ss:$8 sm:$0xf] %vm417, %v416
  %s420 = scalar_lea.vmem %s1, 259
  %421 = vst.msk [vmem:[%s420] ss:$8 sm:$0xf0] %vm417, %v416
  %s422 = scalar_lea.vmem %s0, 34
  %v423 = vld [vmem:[%s422] ss:$8 sm:$0xf]
  %s424 = scalar_lea.vmem %s0, 3
  %v425 = vld [vmem:[%s424] ss:$8 sm:$0xf0]
  %vm426 = vcmask 1047556
  %v427 = vsel %vm426, %v425, %v423
  %428 = vrot.lane.b32.xlu0 %v427, 80
  %v429 = vpop.permute.xlu0 %428
  %vm430 = vcmask 130048
  %s431 = scalar_lea.vmem %s1, 323
  %432 = vst.msk [vmem:[%s431] ss:$8 sm:$0xf] %vm430, %v429
  %s433 = scalar_lea.vmem %s1, 323
  %434 = vst.msk [vmem:[%s433] ss:$8 sm:$0xf0] %vm430, %v429
  %s435 = scalar_lea.vmem %s0, 36
  %v436 = vld [vmem:[%s435] ss:$8 sm:$0xf]
  %s437 = scalar_lea.vmem %s0, 5
  %v438 = vld [vmem:[%s437] ss:$8 sm:$0xf0]
  %vm439 = vcmask 1047556
  %v440 = vsel %vm439, %v438, %v436
  %441 = vrot.lane.b32.xlu0 %v440, 80
  %v442 = vpop.permute.xlu0 %441
  %vm443 = vcmask 130048
  %s444 = scalar_lea.vmem %s1, 387
  %445 = vst.msk [vmem:[%s444] ss:$8 sm:$0xf] %vm443, %v442
  %s446 = scalar_lea.vmem %s1, 387
  %447 = vst.msk [vmem:[%s446] ss:$8 sm:$0xf0] %vm443, %v442
  %s448 = scalar_lea.vmem %s0, 38
  %v449 = vld [vmem:[%s448] ss:$8 sm:$0xf]
  %s450 = scalar_lea.vmem %s0, 7
  %v451 = vld [vmem:[%s450] ss:$8 sm:$0xf0]
  %vm452 = vcmask 1047556
  %v453 = vsel %vm452, %v451, %v449
  %454 = vrot.lane.b32.xlu0 %v453, 80
  %v455 = vpop.permute.xlu0 %454
  %vm456 = vcmask 130048
  %s457 = scalar_lea.vmem %s1, 451
  %458 = vst.msk [vmem:[%s457] ss:$8 sm:$0xf] %vm456, %v455
  %s459 = scalar_lea.vmem %s1, 451
  %460 = vst.msk [vmem:[%s459] ss:$8 sm:$0xf0] %vm456, %v455
  %v461 = vld [vmem:[%s0] ss:$8 sm:$0xf]
  %s462 = scalar_lea.vmem %s0, 4294967265
  %v463 = vld [vmem:[%s462] ss:$8 sm:$0xf0]
  %vm464 = vcmask 1047556
  %v465 = vsel %vm464, %v463, %v461
  %466 = vrot.lane.b32.xlu0 %v465, 64
  %v467 = vpop.permute.xlu0 %466
  %vm468 = vcmask 130048
  %s469 = scalar_lea.vmem %s1, 4
  %470 = vst.msk [vmem:[%s469] ss:$8 sm:$0xf] %vm468, %v467
  %s471 = scalar_lea.vmem %s1, 4
  %472 = vst.msk [vmem:[%s471] ss:$8 sm:$0xf0] %vm468, %v467
  %s473 = scalar_lea.vmem %s0, 2
  %v474 = vld [vmem:[%s473] ss:$8 sm:$0xf]
  %s475 = scalar_lea.vmem %s0, 4294967267
  %v476 = vld [vmem:[%s475] ss:$8 sm:$0xf0]
  %vm477 = vcmask 1047556
  %v478 = vsel %vm477, %v476, %v474
  %479 = vrot.lane.b32.xlu0 %v478, 64
  %v480 = vpop.permute.xlu0 %479
  %vm481 = vcmask 130048
  %s482 = scalar_lea.vmem %s1, 68
  %483 = vst.msk [vmem:[%s482] ss:$8 sm:$0xf] %vm481, %v480
  %s484 = scalar_lea.vmem %s1, 68
  %485 = vst.msk [vmem:[%s484] ss:$8 sm:$0xf0] %vm481, %v480
  %s486 = scalar_lea.vmem %s0, 4
  %v487 = vld [vmem:[%s486] ss:$8 sm:$0xf]
  %s488 = scalar_lea.vmem %s0, 4294967269
  %v489 = vld [vmem:[%s488] ss:$8 sm:$0xf0]
  %vm490 = vcmask 1047556
  %v491 = vsel %vm490, %v489, %v487
  %492 = vrot.lane.b32.xlu0 %v491, 64
  %v493 = vpop.permute.xlu0 %492
  %vm494 = vcmask 130048
  %s495 = scalar_lea.vmem %s1, 132
  %496 = vst.msk [vmem:[%s495] ss:$8 sm:$0xf] %vm494, %v493
  %s497 = scalar_lea.vmem %s1, 132
  %498 = vst.msk [vmem:[%s497] ss:$8 sm:$0xf0] %vm494, %v493
  %s499 = scalar_lea.vmem %s0, 6
  %v500 = vld [vmem:[%s499] ss:$8 sm:$0xf]
  %s501 = scalar_lea.vmem %s0, 4294967271
  %v502 = vld [vmem:[%s501] ss:$8 sm:$0xf0]
  %vm503 = vcmask 1047556
  %v504 = vsel %vm503, %v502, %v500
  %505 = vrot.lane.b32.xlu0 %v504, 64
  %v506 = vpop.permute.xlu0 %505
  %vm507 = vcmask 130048
  %s508 = scalar_lea.vmem %s1, 196
  %509 = vst.msk [vmem:[%s508] ss:$8 sm:$0xf] %vm507, %v506
  %s510 = scalar_lea.vmem %s1, 196
  %511 = vst.msk [vmem:[%s510] ss:$8 sm:$0xf0] %vm507, %v506
  %s512 = scalar_lea.vmem %s0, 32
  %v513 = vld [vmem:[%s512] ss:$8 sm:$0xf]
  %s514 = scalar_lea.vmem %s0, 1
  %v515 = vld [vmem:[%s514] ss:$8 sm:$0xf0]
  %vm516 = vcmask 1047556
  %v517 = vsel %vm516, %v515, %v513
  %518 = vrot.lane.b32.xlu0 %v517, 64
  %v519 = vpop.permute.xlu0 %518
  %vm520 = vcmask 130048
  %s521 = scalar_lea.vmem %s1, 260
  %522 = vst.msk [vmem:[%s521] ss:$8 sm:$0xf] %vm520, %v519
  %s523 = scalar_lea.vmem %s1, 260
  %524 = vst.msk [vmem:[%s523] ss:$8 sm:$0xf0] %vm520, %v519
  %s525 = scalar_lea.vmem %s0, 34
  %v526 = vld [vmem:[%s525] ss:$8 sm:$0xf]
  %s527 = scalar_lea.vmem %s0, 3
  %v528 = vld [vmem:[%s527] ss:$8 sm:$0xf0]
  %vm529 = vcmask 1047556
  %v530 = vsel %vm529, %v528, %v526
  %531 = vrot.lane.b32.xlu0 %v530, 64
  %v532 = vpop.permute.xlu0 %531
  %vm533 = vcmask 130048
  %s534 = scalar_lea.vmem %s1, 324
  %535 = vst.msk [vmem:[%s534] ss:$8 sm:$0xf] %vm533, %v532
  %s536 = scalar_lea.vmem %s1, 324
  %537 = vst.msk [vmem:[%s536] ss:$8 sm:$0xf0] %vm533, %v532
  %s538 = scalar_lea.vmem %s0, 36
  %v539 = vld [vmem:[%s538] ss:$8 sm:$0xf]
  %s540 = scalar_lea.vmem %s0, 5
  %v541 = vld [vmem:[%s540] ss:$8 sm:$0xf0]
  %vm542 = vcmask 1047556
  %v543 = vsel %vm542, %v541, %v539
  %544 = vrot.lane.b32.xlu0 %v543, 64
  %v545 = vpop.permute.xlu0 %544
  %vm546 = vcmask 130048
  %s547 = scalar_lea.vmem %s1, 388
  %548 = vst.msk [vmem:[%s547] ss:$8 sm:$0xf] %vm546, %v545
  %s549 = scalar_lea.vmem %s1, 388
  %550 = vst.msk [vmem:[%s549] ss:$8 sm:$0xf0] %vm546, %v545
  %s551 = scalar_lea.vmem %s0, 38
  %v552 = vld [vmem:[%s551] ss:$8 sm:$0xf]
  %s553 = scalar_lea.vmem %s0, 7
  %v554 = vld [vmem:[%s553] ss:$8 sm:$0xf0]
  %vm555 = vcmask 1047556
  %v556 = vsel %vm555, %v554, %v552
  %557 = vrot.lane.b32.xlu0 %v556, 64
  %v558 = vpop.permute.xlu0 %557
  %vm559 = vcmask 130048
  %s560 = scalar_lea.vmem %s1, 452
  %561 = vst.msk [vmem:[%s560] ss:$8 sm:$0xf] %vm559, %v558
  %s562 = scalar_lea.vmem %s1, 452
  %563 = vst.msk [vmem:[%s562] ss:$8 sm:$0xf0] %vm559, %v558
  %v564 = vld [vmem:[%s0] ss:$8 sm:$0xf]
  %s565 = scalar_lea.vmem %s0, 4294967265
  %v566 = vld [vmem:[%s565] ss:$8 sm:$0xf0]
  %vm567 = vcmask 1047556
  %v568 = vsel %vm567, %v566, %v564
  %569 = vrot.lane.b32.xlu0 %v568, 48
  %v570 = vpop.permute.xlu0 %569
  %vm571 = vcmask 130048
  %s572 = scalar_lea.vmem %s1, 5
  %573 = vst.msk [vmem:[%s572] ss:$8 sm:$0xf] %vm571, %v570
  %s574 = scalar_lea.vmem %s1, 5
  %575 = vst.msk [vmem:[%s574] ss:$8 sm:$0xf0] %vm571, %v570
  %s576 = scalar_lea.vmem %s0, 2
  %v577 = vld [vmem:[%s576] ss:$8 sm:$0xf]
  %s578 = scalar_lea.vmem %s0, 4294967267
  %v579 = vld [vmem:[%s578] ss:$8 sm:$0xf0]
  %vm580 = vcmask 1047556
  %v581 = vsel %vm580, %v579, %v577
  %582 = vrot.lane.b32.xlu0 %v581, 48
  %v583 = vpop.permute.xlu0 %582
  %vm584 = vcmask 130048
  %s585 = scalar_lea.vmem %s1, 69
  %586 = vst.msk [vmem:[%s585] ss:$8 sm:$0xf] %vm584, %v583
  %s587 = scalar_lea.vmem %s1, 69
  %588 = vst.msk [vmem:[%s587] ss:$8 sm:$0xf0] %vm584, %v583
  %s589 = scalar_lea.vmem %s0, 4
  %v590 = vld [vmem:[%s589] ss:$8 sm:$0xf]
  %s591 = scalar_lea.vmem %s0, 4294967269
  %v592 = vld [vmem:[%s591] ss:$8 sm:$0xf0]
  %vm593 = vcmask 1047556
  %v594 = vsel %vm593, %v592, %v590
  %595 = vrot.lane.b32.xlu0 %v594, 48
  %v596 = vpop.permute.xlu0 %595
  %vm597 = vcmask 130048
  %s598 = scalar_lea.vmem %s1, 133
  %599 = vst.msk [vmem:[%s598] ss:$8 sm:$0xf] %vm597, %v596
  %s600 = scalar_lea.vmem %s1, 133
  %601 = vst.msk [vmem:[%s600] ss:$8 sm:$0xf0] %vm597, %v596
  %s602 = scalar_lea.vmem %s0, 6
  %v603 = vld [vmem:[%s602] ss:$8 sm:$0xf]
  %s604 = scalar_lea.vmem %s0, 4294967271
  %v605 = vld [vmem:[%s604] ss:$8 sm:$0xf0]
  %vm606 = vcmask 1047556
  %v607 = vsel %vm606, %v605, %v603
  %608 = vrot.lane.b32.xlu0 %v607, 48
  %v609 = vpop.permute.xlu0 %608
  %vm610 = vcmask 130048
  %s611 = scalar_lea.vmem %s1, 197
  %612 = vst.msk [vmem:[%s611] ss:$8 sm:$0xf] %vm610, %v609
  %s613 = scalar_lea.vmem %s1, 197
  %614 = vst.msk [vmem:[%s613] ss:$8 sm:$0xf0] %vm610, %v609
  %s615 = scalar_lea.vmem %s0, 32
  %v616 = vld [vmem:[%s615] ss:$8 sm:$0xf]
  %s617 = scalar_lea.vmem %s0, 1
  %v618 = vld [vmem:[%s617] ss:$8 sm:$0xf0]
  %vm619 = vcmask 1047556
  %v620 = vsel %vm619, %v618, %v616
  %621 = vrot.lane.b32.xlu0 %v620, 48
  %v622 = vpop.permute.xlu0 %621
  %vm623 = vcmask 130048
  %s624 = scalar_lea.vmem %s1, 261
  %625 = vst.msk [vmem:[%s624] ss:$8 sm:$0xf] %vm623, %v622
  %s626 = scalar_lea.vmem %s1, 261
  %627 = vst.msk [vmem:[%s626] ss:$8 sm:$0xf0] %vm623, %v622
  %s628 = scalar_lea.vmem %s0, 34
  %v629 = vld [vmem:[%s628] ss:$8 sm:$0xf]
  %s630 = scalar_lea.vmem %s0, 3
  %v631 = vld [vmem:[%s630] ss:$8 sm:$0xf0]
  %vm632 = vcmask 1047556
  %v633 = vsel %vm632, %v631, %v629
  %634 = vrot.lane.b32.xlu0 %v633, 48
  %v635 = vpop.permute.xlu0 %634
  %vm636 = vcmask 130048
  %s637 = scalar_lea.vmem %s1, 325
  %638 = vst.msk [vmem:[%s637] ss:$8 sm:$0xf] %vm636, %v635
  %s639 = scalar_lea.vmem %s1, 325
  %640 = vst.msk [vmem:[%s639] ss:$8 sm:$0xf0] %vm636, %v635
  %s641 = scalar_lea.vmem %s0, 36
  %v642 = vld [vmem:[%s641] ss:$8 sm:$0xf]
  %s643 = scalar_lea.vmem %s0, 5
  %v644 = vld [vmem:[%s643] ss:$8 sm:$0xf0]
  %vm645 = vcmask 1047556
  %v646 = vsel %vm645, %v644, %v642
  %647 = vrot.lane.b32.xlu0 %v646, 48
  %v648 = vpop.permute.xlu0 %647
  %vm649 = vcmask 130048
  %s650 = scalar_lea.vmem %s1, 389
  %651 = vst.msk [vmem:[%s650] ss:$8 sm:$0xf] %vm649, %v648
  %s652 = scalar_lea.vmem %s1, 389
  %653 = vst.msk [vmem:[%s652] ss:$8 sm:$0xf0] %vm649, %v648
  %s654 = scalar_lea.vmem %s0, 38
  %v655 = vld [vmem:[%s654] ss:$8 sm:$0xf]
  %s656 = scalar_lea.vmem %s0, 7
  %v657 = vld [vmem:[%s656] ss:$8 sm:$0xf0]
  %vm658 = vcmask 1047556
  %v659 = vsel %vm658, %v657, %v655
  %660 = vrot.lane.b32.xlu0 %v659, 48
  %v661 = vpop.permute.xlu0 %660
  %vm662 = vcmask 130048
  %s663 = scalar_lea.vmem %s1, 453
  %664 = vst.msk [vmem:[%s663] ss:$8 sm:$0xf] %vm662, %v661
  %s665 = scalar_lea.vmem %s1, 453
  %666 = vst.msk [vmem:[%s665] ss:$8 sm:$0xf0] %vm662, %v661
  %v667 = vld [vmem:[%s0] ss:$8 sm:$0xf]
  %s668 = scalar_lea.vmem %s0, 4294967265
  %v669 = vld [vmem:[%s668] ss:$8 sm:$0xf0]
  %vm670 = vcmask 1047556
  %v671 = vsel %vm670, %v669, %v667
  %672 = vrot.lane.b32.xlu0 %v671, 32
  %v673 = vpop.permute.xlu0 %672
  %vm674 = vcmask 130048
  %s675 = scalar_lea.vmem %s1, 6
  %676 = vst.msk [vmem:[%s675] ss:$8 sm:$0xf] %vm674, %v673
  %s677 = scalar_lea.vmem %s1, 6
  %678 = vst.msk [vmem:[%s677] ss:$8 sm:$0xf0] %vm674, %v673
  %s679 = scalar_lea.vmem %s0, 2
  %v680 = vld [vmem:[%s679] ss:$8 sm:$0xf]
  %s681 = scalar_lea.vmem %s0, 4294967267
  %v682 = vld [vmem:[%s681] ss:$8 sm:$0xf0]
  %vm683 = vcmask 1047556
  %v684 = vsel %vm683, %v682, %v680
  %685 = vrot.lane.b32.xlu0 %v684, 32
  %v686 = vpop.permute.xlu0 %685
  %vm687 = vcmask 130048
  %s688 = scalar_lea.vmem %s1, 70
  %689 = vst.msk [vmem:[%s688] ss:$8 sm:$0xf] %vm687, %v686
  %s690 = scalar_lea.vmem %s1, 70
  %691 = vst.msk [vmem:[%s690] ss:$8 sm:$0xf0] %vm687, %v686
  %s692 = scalar_lea.vmem %s0, 4
  %v693 = vld [vmem:[%s692] ss:$8 sm:$0xf]
  %s694 = scalar_lea.vmem %s0, 4294967269
  %v695 = vld [vmem:[%s694] ss:$8 sm:$0xf0]
  %vm696 = vcmask 1047556
  %v697 = vsel %vm696, %v695, %v693
  %698 = vrot.lane.b32.xlu0 %v697, 32
  %v699 = vpop.permute.xlu0 %698
  %vm700 = vcmask 130048
  %s701 = scalar_lea.vmem %s1, 134
  %702 = vst.msk [vmem:[%s701] ss:$8 sm:$0xf] %vm700, %v699
  %s703 = scalar_lea.vmem %s1, 134
  %704 = vst.msk [vmem:[%s703] ss:$8 sm:$0xf0] %vm700, %v699
  %s705 = scalar_lea.vmem %s0, 6
  %v706 = vld [vmem:[%s705] ss:$8 sm:$0xf]
  %s707 = scalar_lea.vmem %s0, 4294967271
  %v708 = vld [vmem:[%s707] ss:$8 sm:$0xf0]
  %vm709 = vcmask 1047556
  %v710 = vsel %vm709, %v708, %v706
  %711 = vrot.lane.b32.xlu0 %v710, 32
  %v712 = vpop.permute.xlu0 %711
  %vm713 = vcmask 130048
  %s714 = scalar_lea.vmem %s1, 198
  %715 = vst.msk [vmem:[%s714] ss:$8 sm:$0xf] %vm713, %v712
  %s716 = scalar_lea.vmem %s1, 198
  %717 = vst.msk [vmem:[%s716] ss:$8 sm:$0xf0] %vm713, %v712
  %s718 = scalar_lea.vmem %s0, 32
  %v719 = vld [vmem:[%s718] ss:$8 sm:$0xf]
  %s720 = scalar_lea.vmem %s0, 1
  %v721 = vld [vmem:[%s720] ss:$8 sm:$0xf0]
  %vm722 = vcmask 1047556
  %v723 = vsel %vm722, %v721, %v719
  %724 = vrot.lane.b32.xlu0 %v723, 32
  %v725 = vpop.permute.xlu0 %724
  %vm726 = vcmask 130048
  %s727 = scalar_lea.vmem %s1, 262
  %728 = vst.msk [vmem:[%s727] ss:$8 sm:$0xf] %vm726, %v725
  %s729 = scalar_lea.vmem %s1, 262
  %730 = vst.msk [vmem:[%s729] ss:$8 sm:$0xf0] %vm726, %v725
  %s731 = scalar_lea.vmem %s0, 34
  %v732 = vld [vmem:[%s731] ss:$8 sm:$0xf]
  %s733 = scalar_lea.vmem %s0, 3
  %v734 = vld [vmem:[%s733] ss:$8 sm:$0xf0]
  %vm735 = vcmask 1047556
  %v736 = vsel %vm735, %v734, %v732
  %737 = vrot.lane.b32.xlu0 %v736, 32
  %v738 = vpop.permute.xlu0 %737
  %vm739 = vcmask 130048
  %s740 = scalar_lea.vmem %s1, 326
  %741 = vst.msk [vmem:[%s740] ss:$8 sm:$0xf] %vm739, %v738
  %s742 = scalar_lea.vmem %s1, 326
  %743 = vst.msk [vmem:[%s742] ss:$8 sm:$0xf0] %vm739, %v738
  %s744 = scalar_lea.vmem %s0, 36
  %v745 = vld [vmem:[%s744] ss:$8 sm:$0xf]
  %s746 = scalar_lea.vmem %s0, 5
  %v747 = vld [vmem:[%s746] ss:$8 sm:$0xf0]
  %vm748 = vcmask 1047556
  %v749 = vsel %vm748, %v747, %v745
  %750 = vrot.lane.b32.xlu0 %v749, 32
  %v751 = vpop.permute.xlu0 %750
  %vm752 = vcmask 130048
  %s753 = scalar_lea.vmem %s1, 390
  %754 = vst.msk [vmem:[%s753] ss:$8 sm:$0xf] %vm752, %v751
  %s755 = scalar_lea.vmem %s1, 390
  %756 = vst.msk [vmem:[%s755] ss:$8 sm:$0xf0] %vm752, %v751
  %s757 = scalar_lea.vmem %s0, 38
  %v758 = vld [vmem:[%s757] ss:$8 sm:$0xf]
  %s759 = scalar_lea.vmem %s0, 7
  %v760 = vld [vmem:[%s759] ss:$8 sm:$0xf0]
  %vm761 = vcmask 1047556
  %v762 = vsel %vm761, %v760, %v758
  %763 = vrot.lane.b32.xlu0 %v762, 32
  %v764 = vpop.permute.xlu0 %763
  %vm765 = vcmask 130048
  %s766 = scalar_lea.vmem %s1, 454
  %767 = vst.msk [vmem:[%s766] ss:$8 sm:$0xf] %vm765, %v764
  %s768 = scalar_lea.vmem %s1, 454
  %769 = vst.msk [vmem:[%s768] ss:$8 sm:$0xf0] %vm765, %v764
  %v770 = vld [vmem:[%s0] ss:$8 sm:$0xf]
  %s771 = scalar_lea.vmem %s0, 4294967265
  %v772 = vld [vmem:[%s771] ss:$8 sm:$0xf0]
  %vm773 = vcmask 1047556
  %v774 = vsel %vm773, %v772, %v770
  %775 = vrot.lane.b32.xlu0 %v774, 16
  %v776 = vpop.permute.xlu0 %775
  %vm777 = vcmask 130048
  %s778 = scalar_lea.vmem %s1, 7
  %779 = vst.msk [vmem:[%s778] ss:$8 sm:$0xf] %vm777, %v776
  %s780 = scalar_lea.vmem %s1, 7
  %781 = vst.msk [vmem:[%s780] ss:$8 sm:$0xf0] %vm777, %v776
  %s782 = scalar_lea.vmem %s0, 2
  %v783 = vld [vmem:[%s782] ss:$8 sm:$0xf]
  %s784 = scalar_lea.vmem %s0, 4294967267
  %v785 = vld [vmem:[%s784] ss:$8 sm:$0xf0]
  %vm786 = vcmask 1047556
  %v787 = vsel %vm786, %v785, %v783
  %788 = vrot.lane.b32.xlu0 %v787, 16
  %v789 = vpop.permute.xlu0 %788
  %vm790 = vcmask 130048
  %s791 = scalar_lea.vmem %s1, 71
  %792 = vst.msk [vmem:[%s791] ss:$8 sm:$0xf] %vm790, %v789
  %s793 = scalar_lea.vmem %s1, 71
  %794 = vst.msk [vmem:[%s793] ss:$8 sm:$0xf0] %vm790, %v789
  %s795 = scalar_lea.vmem %s0, 4
  %v796 = vld [vmem:[%s795] ss:$8 sm:$0xf]
  %s797 = scalar_lea.vmem %s0, 4294967269
  %v798 = vld [vmem:[%s797] ss:$8 sm:$0xf0]
  %vm799 = vcmask 1047556
  %v800 = vsel %vm799, %v798, %v796
  %801 = vrot.lane.b32.xlu0 %v800, 16
  %v802 = vpop.permute.xlu0 %801
  %vm803 = vcmask 130048
  %s804 = scalar_lea.vmem %s1, 135
  %805 = vst.msk [vmem:[%s804] ss:$8 sm:$0xf] %vm803, %v802
  %s806 = scalar_lea.vmem %s1, 135
  %807 = vst.msk [vmem:[%s806] ss:$8 sm:$0xf0] %vm803, %v802
  %s808 = scalar_lea.vmem %s0, 6
  %v809 = vld [vmem:[%s808] ss:$8 sm:$0xf]
  %s810 = scalar_lea.vmem %s0, 4294967271
  %v811 = vld [vmem:[%s810] ss:$8 sm:$0xf0]
  %vm812 = vcmask 1047556
  %v813 = vsel %vm812, %v811, %v809
  %814 = vrot.lane.b32.xlu0 %v813, 16
  %v815 = vpop.permute.xlu0 %814
  %vm816 = vcmask 130048
  %s817 = scalar_lea.vmem %s1, 199
  %818 = vst.msk [vmem:[%s817] ss:$8 sm:$0xf] %vm816, %v815
  %s819 = scalar_lea.vmem %s1, 199
  %820 = vst.msk [vmem:[%s819] ss:$8 sm:$0xf0] %vm816, %v815
  %s821 = scalar_lea.vmem %s0, 32
  %v822 = vld [vmem:[%s821] ss:$8 sm:$0xf]
  %s823 = scalar_lea.vmem %s0, 1
  %v824 = vld [vmem:[%s823] ss:$8 sm:$0xf0]
  %vm825 = vcmask 1047556
  %v826 = vsel %vm825, %v824, %v822
  %827 = vrot.lane.b32.xlu0 %v826, 16
  %v828 = vpop.permute.xlu0 %827
  %vm829 = vcmask 130048
  %s830 = scalar_lea.vmem %s1, 263
  %831 = vst.msk [vmem:[%s830] ss:$8 sm:$0xf] %vm829, %v828
  %s832 = scalar_lea.vmem %s1, 263
  %833 = vst.msk [vmem:[%s832] ss:$8 sm:$0xf0] %vm829, %v828
  %s834 = scalar_lea.vmem %s0, 34
  %v835 = vld [vmem:[%s834] ss:$8 sm:$0xf]
  %s836 = scalar_lea.vmem %s0, 3
  %v837 = vld [vmem:[%s836] ss:$8 sm:$0xf0]
  %vm838 = vcmask 1047556
  %v839 = vsel %vm838, %v837, %v835
  %840 = vrot.lane.b32.xlu0 %v839, 16
  %v841 = vpop.permute.xlu0 %840
  %vm842 = vcmask 130048
  %s843 = scalar_lea.vmem %s1, 327
  %844 = vst.msk [vmem:[%s843] ss:$8 sm:$0xf] %vm842, %v841
  %s845 = scalar_lea.vmem %s1, 327
  %846 = vst.msk [vmem:[%s845] ss:$8 sm:$0xf0] %vm842, %v841
  %s847 = scalar_lea.vmem %s0, 36
  %v848 = vld [vmem:[%s847] ss:$8 sm:$0xf]
  %s849 = scalar_lea.vmem %s0, 5
  %v850 = vld [vmem:[%s849] ss:$8 sm:$0xf0]
  %vm851 = vcmask 1047556
  %v852 = vsel %vm851, %v850, %v848
  %853 = vrot.lane.b32.xlu0 %v852, 16
  %v854 = vpop.permute.xlu0 %853
  %vm855 = vcmask 130048
  %s856 = scalar_lea.vmem %s1, 391
  %857 = vst.msk [vmem:[%s856] ss:$8 sm:$0xf] %vm855, %v854
  %s858 = scalar_lea.vmem %s1, 391
  %859 = vst.msk [vmem:[%s858] ss:$8 sm:$0xf0] %vm855, %v854
  %s860 = scalar_lea.vmem %s0, 38
  %v861 = vld [vmem:[%s860] ss:$8 sm:$0xf]
  %s862 = scalar_lea.vmem %s0, 7
  %v863 = vld [vmem:[%s862] ss:$8 sm:$0xf0]
  %vm864 = vcmask 1047556
  %v865 = vsel %vm864, %v863, %v861
  %866 = vrot.lane.b32.xlu0 %v865, 16
  %v867 = vpop.permute.xlu0 %866
  %vm868 = vcmask 130048
  %s869 = scalar_lea.vmem %s1, 455
  %870 = vst.msk [vmem:[%s869] ss:$8 sm:$0xf] %vm868, %v867
  %s871 = scalar_lea.vmem %s1, 455
  %872 = vst.msk [vmem:[%s871] ss:$8 sm:$0xf0] %vm868, %v867

// kernel: two_stream_split_forward.1
$region0: #{two_stream_split_forward.1}
  #allocation0 [shape = 'u32[]', space=smem, size = 0x4, offset = 0x4, fixed_abs, tag = 'smem constant byte address 0x4 - core index']
  #allocation1 [shape = 'u32[144,128]{1,0:T(1,128)}', space=vmem, size = 0x12000, scoped, tag = 'internal scratch']
  %s0 = inlined_call_operand.vmem [shape: f32[2,4,512], index: 0, kind: input, shape index: {}]
  %s1 = inlined_call_operand.vmem [shape: f32[2,3,20,4], index: 1, kind: input, shape index: {}]
  %s2 = inlined_call_operand.vmem [shape: f32[2,3,20,1], index: 2, kind: input, shape index: {}]
  %s3 = inlined_call_operand.vmem [shape: f32[2,3,20,20], index: 3, kind: input, shape index: {}]
  %s4 = inlined_call_operand.vmem [shape: f32[2,3,20,1], index: 4, kind: input, shape index: {}]
  %s5 = inlined_call_operand.vmem [shape: f32[2,3,8,20], index: 5, kind: input, shape index: {}]
  %s6 = inlined_call_operand.vmem [shape: f32[2,8,1], index: 6, kind: input, shape index: {}]
  %s7 = inlined_call_operand.vmem [shape: f32[2,3,20,8], index: 7, kind: input, shape index: {}]
  %s8 = inlined_call_operand.vmem [shape: f32[2,3,20,1], index: 8, kind: input, shape index: {}]
  %s9 = inlined_call_operand.vmem [shape: f32[2,3,20,20], index: 9, kind: input, shape index: {}]
  %s10 = inlined_call_operand.vmem [shape: f32[2,3,20,1], index: 10, kind: input, shape index: {}]
  %s11 = inlined_call_operand.vmem [shape: f32[2,3,16,20], index: 11, kind: input, shape index: {}]
  %s12 = inlined_call_operand.vmem [shape: f32[2,16,1], index: 12, kind: input, shape index: {}]
  %s13 = inlined_call_operand.vmem [shape: f32[2,16,16], index: 13, kind: input, shape index: {}]
  %s14 = inlined_call_operand.vmem [shape: f32[2,16,1], index: 14, kind: input, shape index: {}]
  %s15 = inlined_call_operand.vmem [shape: f32[2,16,512], index: 15, kind: output, shape index: {}]
  %s16 = sld [smem:[#allocation0]]
  $region112: #{two_stream_split_forward.1} parent=0
    _
  %s18 = ssub.s32 1, %s16
  %s19 = scalar_select 0, %s18, %s16
  $region1: #{two_stream_split_forward.1} parent=0
    #allocation2 [shape = 'u8[32768]{0}', space=vmem, size = 0x8000, scoped, tag = 'output window, operand 0']
    loop: start=0, step=1, limit=6
    $region2: #{two_stream_split_forward.1} parent=1 // loop_pre_header
      _
    $region3: #{two_stream_split_forward.1} parent=1 // loop_header
      %s21 = sphi 0, %s25
      %p22 = scmp.ge.s32.totalorder %s21, 6
      %s28 = sphi 0, %s40
      %s29 = sphi 0, %s36
      %s30 = sphi 0, %s28
      %s31 = sphi 0, %s29
      %s32 = sphi 0, %s30
      %s33 = sphi 0, %s31
      %s45 = sphi 0, %s47
      %s48 = sphi 0, %s45
      %s49 = sphi 0, %s48
      %s65 = sphi 0, %s49
      %s71 = sphi 0, %s73
      %s74 = sphi 0, %s71
      %s75 = sphi 0, %s74
      %s91 = sphi 0, %s75
      %s97 = sphi 0, %s99
      %s100 = sphi 0, %s97
      %s101 = sphi 0, %s100
      %s117 = sphi 0, %s101
      %s123 = sphi 0, %s125
      %s126 = sphi 0, %s123
      %s127 = sphi 0, %s126
      %s143 = sphi 0, %s127
      %s149 = sphi 0, %s151
      %s152 = sphi 0, %s149
      %s153 = sphi 0, %s152
      %s169 = sphi 0, %s153
      %s175 = sphi 0, %s177
      %s178 = sphi 0, %s175
      %s179 = sphi 0, %s178
      %s195 = sphi 0, %s179
      %s201 = sphi 0, %s203
      %s204 = sphi 0, %s201
      %s205 = sphi 0, %s204
      %s221 = sphi 0, %s205
      %s227 = sphi 0, %s229
      %s230 = sphi 0, %s227
      %s231 = sphi 0, %s230
      %s247 = sphi 0, %s231
      %s253 = sphi 0, %s255
      %s256 = sphi 0, %s253
      %s257 = sphi 0, %s256
      %s273 = sphi 0, %s257
      %s279 = sphi 0, %s281
      %s282 = sphi 0, %s279
      %s283 = sphi 0, %s282
      %s299 = sphi 0, %s283
      %s305 = sphi 0, %s307
      %s308 = sphi 0, %s305
      %s309 = sphi 0, %s308
      %s325 = sphi 0, %s309
      %s331 = sphi 0, %s333
      %s334 = sphi 0, %s331
      %s335 = sphi 0, %s334
      %s351 = sphi 0, %s335
      %s357 = sphi 0, %s359
      %s360 = sphi 0, %s357
      %s361 = sphi 0, %s360
      %s377 = sphi 0, %s361
      %s383 = sphi 0, %s385
      %s386 = sphi 0, %s383
      %s387 = sphi 0, %s386
      %s403 = sphi 0, %s387
      %s409 = sphi 0, %s411
      %s412 = sphi 0, %s409
      %s413 = sphi 0, %s412
      %s429 = sphi 0, %s413
      %s437 = sphi 0, %s439
      %s440 = sphi 0, %s437
      %s441 = sphi 0, %s440
      %s457 = sphi 0, %s441
    $region4: #{two_stream_split_forward.1} parent=1 // loop_header_branch
      %24 = sbr.rel (%p22) target = $region8
    $region5: #{two_stream_split_forward.1} parent=1 // loop_body
      %s26 = ssub.s32 %s21, 1
      %s27 = ssub.s32 %s21, 2
      %s34 = sadd.s32 1, %s29
      %p35 = scmp.ge.s32.totalorder %s34, 2
      %s36 = scalar_select %p35, 0, %s34
      %s37 = sadd.s32 1, %s28
      %s38 = scalar_select %p35, %s37, %s28
      %p39 = scmp.ge.s32.totalorder %s38, 2
      %s40 = scalar_select %p39, 0, %s38
      %s41 = ssub.s32 %s28, %s40
      %s42 = ssub.s32 %s29, %s36
      %s43 = sor.u32 %s41, %s42
      %p44 = scmp.eq.s32.totalorder %s43, 0
      %s46 = sadd.s32 %s45, 1
      %s47 = scalar_select %p44, %s45, %s46
      %p50 = pneg %p44
      %p51 = scmp.eq.s32.totalorder %s21, 3
      %p52 = por %p50, %p51
      %p53 = scmp.ne.s32.totalorder %s45, %s48
      %p54 = scmp.eq.s32.totalorder %s21, 0
      %p55 = por %p53, %p54
      %p56 = scmp.ne.s32.totalorder %s45, %s48
      %p57 = scmp.eq.s32.totalorder %s26, 3
      %p58 = por %p56, %p57
      %p59 = scmp.ne.s32.totalorder %s48, %s49
      %p60 = scmp.eq.s32.totalorder %s26, 0
      %p61 = por %p59, %p60
      %p62 = scmp.ne.s32.totalorder %s48, %s49
      %p63 = scmp.eq.s32.totalorder %s27, 3
      %p64 = por %p62, %p63
      %p66 = scmp.ne.s32.totalorder %s49, %s65
      %p67 = scmp.eq.s32.totalorder %s27, 0
      %p68 = por %p66, %p67
      %s69 = ssub.s32 %s28, %s40
      %p70 = scmp.eq.s32.totalorder %s69, 0
      %s72 = sadd.s32 %s71, 1
      %s73 = scalar_select %p70, %s71, %s72
      %p76 = pneg %p70
      %p77 = scmp.eq.s32.totalorder %s21, 3
      %p78 = por %p76, %p77
      %p79 = scmp.ne.s32.totalorder %s71, %s74
      %p80 = scmp.eq.s32.totalorder %s21, 0
      %p81 = por %p79, %p80
      %p82 = scmp.ne.s32.totalorder %s71, %s74
      %p83 = scmp.eq.s32.totalorder %s26, 3
      %p84 = por %p82, %p83
      %p85 = scmp.ne.s32.totalorder %s74, %s75
      %p86 = scmp.eq.s32.totalorder %s26, 0
      %p87 = por %p85, %p86
      %p88 = scmp.ne.s32.totalorder %s74, %s75
      %p89 = scmp.eq.s32.totalorder %s27, 3
      %p90 = por %p88, %p89
      %p92 = scmp.ne.s32.totalorder %s75, %s91
      %p93 = scmp.eq.s32.totalorder %s27, 0
      %p94 = por %p92, %p93
      %s95 = ssub.s32 %s28, %s40
      %p96 = scmp.eq.s32.totalorder %s95, 0
      %s98 = sadd.s32 %s97, 1
      %s99 = scalar_select %p96, %s97, %s98
      %p102 = pneg %p96
      %p103 = scmp.eq.s32.totalorder %s21, 3
      %p104 = por %p102, %p103
      %p105 = scmp.ne.s32.totalorder %s97, %s100
      %p106 = scmp.eq.s32.totalorder %s21, 0
      %p107 = por %p105, %p106
      %p108 = scmp.ne.s32.totalorder %s97, %s100
      %p109 = scmp.eq.s32.totalorder %s26, 3
      %p110 = por %p108, %p109
      %p111 = scmp.ne.s32.totalorder %s100, %s101
      %p112 = scmp.eq.s32.totalorder %s26, 0
      %p113 = por %p111, %p112
      %p114 = scmp.ne.s32.totalorder %s100, %s101
      %p115 = scmp.eq.s32.totalorder %s27, 3
      %p116 = por %p114, %p115
      %p118 = scmp.ne.s32.totalorder %s101, %s117
      %p119 = scmp.eq.s32.totalorder %s27, 0
      %p120 = por %p118, %p119
      %s121 = ssub.s32 %s28, %s40
      %p122 = scmp.eq.s32.totalorder %s121, 0
      %s124 = sadd.s32 %s123, 1
      %s125 = scalar_select %p122, %s123, %s124
      %p128 = pneg %p122
      %p129 = scmp.eq.s32.totalorder %s21, 3
      %p130 = por %p128, %p129
      %p131 = scmp.ne.s32.totalorder %s123, %s126
      %p132 = scmp.eq.s32.totalorder %s21, 0
      %p133 = por %p131, %p132
      %p134 = scmp.ne.s32.totalorder %s123, %s126
      %p135 = scmp.eq.s32.totalorder %s26, 3
      %p136 = por %p134, %p135
      %p137 = scmp.ne.s32.totalorder %s126, %s127
      %p138 = scmp.eq.s32.totalorder %s26, 0
      %p139 = por %p137, %p138
      %p140 = scmp.ne.s32.totalorder %s126, %s127
      %p141 = scmp.eq.s32.totalorder %s27, 3
      %p142 = por %p140, %p141
      %p144 = scmp.ne.s32.totalorder %s127, %s143
      %p145 = scmp.eq.s32.totalorder %s27, 0
      %p146 = por %p144, %p145
      %s147 = ssub.s32 %s28, %s40
      %p148 = scmp.eq.s32.totalorder %s147, 0
      %s150 = sadd.s32 %s149, 1
      %s151 = scalar_select %p148, %s149, %s150
      %p154 = pneg %p148
      %p155 = scmp.eq.s32.totalorder %s21, 3
      %p156 = por %p154, %p155
      %p157 = scmp.ne.s32.totalorder %s149, %s152
      %p158 = scmp.eq.s32.totalorder %s21, 0
      %p159 = por %p157, %p158
      %p160 = scmp.ne.s32.totalorder %s149, %s152
      %p161 = scmp.eq.s32.totalorder %s26, 3
      %p162 = por %p160, %p161
      %p163 = scmp.ne.s32.totalorder %s152, %s153
      %p164 = scmp.eq.s32.totalorder %s26, 0
      %p165 = por %p163, %p164
      %p166 = scmp.ne.s32.totalorder %s152, %s153
      %p167 = scmp.eq.s32.totalorder %s27, 3
      %p168 = por %p166, %p167
      %p170 = scmp.ne.s32.totalorder %s153, %s169
      %p171 = scmp.eq.s32.totalorder %s27, 0
      %p172 = por %p170, %p171
      %s173 = ssub.s32 %s28, %s40
      %p174 = scmp.eq.s32.totalorder %s173, 0
      %s176 = sadd.s32 %s175, 1
      %s177 = scalar_select %p174, %s175, %s176
      %p180 = pneg %p174
      %p181 = scmp.eq.s32.totalorder %s21, 3
      %p182 = por %p180, %p181
      %p183 = scmp.ne.s32.totalorder %s175, %s178
      %p184 = scmp.eq.s32.totalorder %s21, 0
      %p185 = por %p183, %p184
      %p186 = scmp.ne.s32.totalorder %s175, %s178
      %p187 = scmp.eq.s32.totalorder %s26, 3
      %p188 = por %p186, %p187
      %p189 = scmp.ne.s32.totalorder %s178, %s179
      %p190 = scmp.eq.s32.totalorder %s26, 0
      %p191 = por %p189, %p190
      %p192 = scmp.ne.s32.totalorder %s178, %s179
      %p193 = scmp.eq.s32.totalorder %s27, 3
      %p194 = por %p192, %p193
      %p196 = scmp.ne.s32.totalorder %s179, %s195
      %p197 = scmp.eq.s32.totalorder %s27, 0
      %p198 = por %p196, %p197
      %s199 = ssub.s32 %s28, %s40
      %p200 = scmp.eq.s32.totalorder %s199, 0
      %s202 = sadd.s32 %s201, 1
      %s203 = scalar_select %p200, %s201, %s202
      %p206 = pneg %p200
      %p207 = scmp.eq.s32.totalorder %s21, 3
      %p208 = por %p206, %p207
      %p209 = scmp.ne.s32.totalorder %s201, %s204
      %p210 = scmp.eq.s32.totalorder %s21, 0
      %p211 = por %p209, %p210
      %p212 = scmp.ne.s32.totalorder %s201, %s204
      %p213 = scmp.eq.s32.totalorder %s26, 3
      %p214 = por %p212, %p213
      %p215 = scmp.ne.s32.totalorder %s204, %s205
      %p216 = scmp.eq.s32.totalorder %s26, 0
      %p217 = por %p215, %p216
      %p218 = scmp.ne.s32.totalorder %s204, %s205
      %p219 = scmp.eq.s32.totalorder %s27, 3
      %p220 = por %p218, %p219
      %p222 = scmp.ne.s32.totalorder %s205, %s221
      %p223 = scmp.eq.s32.totalorder %s27, 0
      %p224 = por %p222, %p223
      %s225 = ssub.s32 %s28, %s40
      %p226 = scmp.eq.s32.totalorder %s225, 0
      %s228 = sadd.s32 %s227, 1
      %s229 = scalar_select %p226, %s227, %s228
      %p232 = pneg %p226
      %p233 = scmp.eq.s32.totalorder %s21, 3
      %p234 = por %p232, %p233
      %p235 = scmp.ne.s32.totalorder %s227, %s230
      %p236 = scmp.eq.s32.totalorder %s21, 0
      %p237 = por %p235, %p236
      %p238 = scmp.ne.s32.totalorder %s227, %s230
      %p239 = scmp.eq.s32.totalorder %s26, 3
      %p240 = por %p238, %p239
      %p241 = scmp.ne.s32.totalorder %s230, %s231
      %p242 = scmp.eq.s32.totalorder %s26, 0
      %p243 = por %p241, %p242
      %p244 = scmp.ne.s32.totalorder %s230, %s231
      %p245 = scmp.eq.s32.totalorder %s27, 3
      %p246 = por %p244, %p245
      %p248 = scmp.ne.s32.totalorder %s231, %s247
      %p249 = scmp.eq.s32.totalorder %s27, 0
      %p250 = por %p248, %p249
      %s251 = ssub.s32 %s28, %s40
      %p252 = scmp.eq.s32.totalorder %s251, 0
      %s254 = sadd.s32 %s253, 1
      %s255 = scalar_select %p252, %s253, %s254
      %p258 = pneg %p252
      %p259 = scmp.eq.s32.totalorder %s21, 3
      %p260 = por %p258, %p259
      %p261 = scmp.ne.s32.totalorder %s253, %s256
      %p262 = scmp.eq.s32.totalorder %s21, 0
      %p263 = por %p261, %p262
      %p264 = scmp.ne.s32.totalorder %s253, %s256
      %p265 = scmp.eq.s32.totalorder %s26, 3
      %p266 = por %p264, %p265
      %p267 = scmp.ne.s32.totalorder %s256, %s257
      %p268 = scmp.eq.s32.totalorder %s26, 0
      %p269 = por %p267, %p268
      %p270 = scmp.ne.s32.totalorder %s256, %s257
      %p271 = scmp.eq.s32.totalorder %s27, 3
      %p272 = por %p270, %p271
      %p274 = scmp.ne.s32.totalorder %s257, %s273
      %p275 = scmp.eq.s32.totalorder %s27, 0
      %p276 = por %p274, %p275
      %s277 = ssub.s32 %s28, %s40
      %p278 = scmp.eq.s32.totalorder %s277, 0
      %s280 = sadd.s32 %s279, 1
      %s281 = scalar_select %p278, %s279, %s280
      %p284 = pneg %p278
      %p285 = scmp.eq.s32.totalorder %s21, 3
      %p286 = por %p284, %p285
      %p287 = scmp.ne.s32.totalorder %s279, %s282
      %p288 = scmp.eq.s32.totalorder %s21, 0
      %p289 = por %p287, %p288
      %p290 = scmp.ne.s32.totalorder %s279, %s282
      %p291 = scmp.eq.s32.totalorder %s26, 3
      %p292 = por %p290, %p291
      %p293 = scmp.ne.s32.totalorder %s282, %s283
      %p294 = scmp.eq.s32.totalorder %s26, 0
      %p295 = por %p293, %p294
      %p296 = scmp.ne.s32.totalorder %s282, %s283
      %p297 = scmp.eq.s32.totalorder %s27, 3
      %p298 = por %p296, %p297
      %p300 = scmp.ne.s32.totalorder %s283, %s299
      %p301 = scmp.eq.s32.totalorder %s27, 0
      %p302 = por %p300, %p301
      %s303 = ssub.s32 %s28, %s40
      %p304 = scmp.eq.s32.totalorder %s303, 0
      %s306 = sadd.s32 %s305, 1
      %s307 = scalar_select %p304, %s305, %s306
      %p310 = pneg %p304
      %p311 = scmp.eq.s32.totalorder %s21, 3
      %p312 = por %p310, %p311
      %p313 = scmp.ne.s32.totalorder %s305, %s308
      %p314 = scmp.eq.s32.totalorder %s21, 0
      %p315 = por %p313, %p314
      %p316 = scmp.ne.s32.totalorder %s305, %s308
      %p317 = scmp.eq.s32.totalorder %s26, 3
      %p318 = por %p316, %p317
      %p319 = scmp.ne.s32.totalorder %s308, %s309
      %p320 = scmp.eq.s32.totalorder %s26, 0
      %p321 = por %p319, %p320
      %p322 = scmp.ne.s32.totalorder %s308, %s309
      %p323 = scmp.eq.s32.totalorder %s27, 3
      %p324 = por %p322, %p323
      %p326 = scmp.ne.s32.totalorder %s309, %s325
      %p327 = scmp.eq.s32.totalorder %s27, 0
      %p328 = por %p326, %p327
      %s329 = ssub.s32 %s28, %s40
      %p330 = scmp.eq.s32.totalorder %s329, 0
      %s332 = sadd.s32 %s331, 1
      %s333 = scalar_select %p330, %s331, %s332
      %p336 = pneg %p330
      %p337 = scmp.eq.s32.totalorder %s21, 3
      %p338 = por %p336, %p337
      %p339 = scmp.ne.s32.totalorder %s331, %s334
      %p340 = scmp.eq.s32.totalorder %s21, 0
      %p341 = por %p339, %p340
      %p342 = scmp.ne.s32.totalorder %s331, %s334
      %p343 = scmp.eq.s32.totalorder %s26, 3
      %p344 = por %p342, %p343
      %p345 = scmp.ne.s32.totalorder %s334, %s335
      %p346 = scmp.eq.s32.totalorder %s26, 0
      %p347 = por %p345, %p346
      %p348 = scmp.ne.s32.totalorder %s334, %s335
      %p349 = scmp.eq.s32.totalorder %s27, 3
      %p350 = por %p348, %p349
      %p352 = scmp.ne.s32.totalorder %s335, %s351
      %p353 = scmp.eq.s32.totalorder %s27, 0
      %p354 = por %p352, %p353
      %s355 = ssub.s32 %s28, %s40
      %p356 = scmp.eq.s32.totalorder %s355, 0
      %s358 = sadd.s32 %s357, 1
      %s359 = scalar_select %p356, %s357, %s358
      %p362 = pneg %p356
      %p363 = scmp.eq.s32.totalorder %s21, 3
      %p364 = por %p362, %p363
      %p365 = scmp.ne.s32.totalorder %s357, %s360
      %p366 = scmp.eq.s32.totalorder %s21, 0
      %p367 = por %p365, %p366
      %p368 = scmp.ne.s32.totalorder %s357, %s360
      %p369 = scmp.eq.s32.totalorder %s26, 3
      %p370 = por %p368, %p369
      %p371 = scmp.ne.s32.totalorder %s360, %s361
      %p372 = scmp.eq.s32.totalorder %s26, 0
      %p373 = por %p371, %p372
      %p374 = scmp.ne.s32.totalorder %s360, %s361
      %p375 = scmp.eq.s32.totalorder %s27, 3
      %p376 = por %p374, %p375
      %p378 = scmp.ne.s32.totalorder %s361, %s377
      %p379 = scmp.eq.s32.totalorder %s27, 0
      %p380 = por %p378, %p379
      %s381 = ssub.s32 %s28, %s40
      %p382 = scmp.eq.s32.totalorder %s381, 0
      %s384 = sadd.s32 %s383, 1
      %s385 = scalar_select %p382, %s383, %s384
      %p388 = pneg %p382
      %p389 = scmp.eq.s32.totalorder %s21, 3
      %p390 = por %p388, %p389
      %p391 = scmp.ne.s32.totalorder %s383, %s386
      %p392 = scmp.eq.s32.totalorder %s21, 0
      %p393 = por %p391, %p392
      %p394 = scmp.ne.s32.totalorder %s383, %s386
      %p395 = scmp.eq.s32.totalorder %s26, 3
      %p396 = por %p394, %p395
      %p397 = scmp.ne.s32.totalorder %s386, %s387
      %p398 = scmp.eq.s32.totalorder %s26, 0
      %p399 = por %p397, %p398
      %p400 = scmp.ne.s32.totalorder %s386, %s387
      %p401 = scmp.eq.s32.totalorder %s27, 3
      %p402 = por %p400, %p401
      %p404 = scmp.ne.s32.totalorder %s387, %s403
      %p405 = scmp.eq.s32.totalorder %s27, 0
      %p406 = por %p404, %p405
      %s407 = ssub.s32 %s28, %s40
      %p408 = scmp.eq.s32.totalorder %s407, 0
      %s410 = sadd.s32 %s409, 1
      %s411 = scalar_select %p408, %s409, %s410
      %p414 = pneg %p408
      %p415 = scmp.eq.s32.totalorder %s21, 3
      %p416 = por %p414, %p415
      %p417 = scmp.ne.s32.totalorder %s409, %s412
      %p418 = scmp.eq.s32.totalorder %s21, 0
      %p419 = por %p417, %p418
      %p420 = scmp.ne.s32.totalorder %s409, %s412
      %p421 = scmp.eq.s32.totalorder %s26, 3
      %p422 = por %p420, %p421
      %p423 = scmp.ne.s32.totalorder %s412, %s413
      %p424 = scmp.eq.s32.totalorder %s26, 0
      %p425 = por %p423, %p424
      %p426 = scmp.ne.s32.totalorder %s412, %s413
      %p427 = scmp.eq.s32.totalorder %s27, 3
      %p428 = por %p426, %p427
      %p430 = scmp.ne.s32.totalorder %s413, %s429
      %p431 = scmp.eq.s32.totalorder %s27, 0
      %p432 = por %p430, %p431
      %s433 = ssub.s32 %s28, %s40
      %s434 = ssub.s32 %s29, %s36
      %s435 = sor.u32 %s433, %s434
      %p436 = scmp.eq.s32.totalorder %s435, 0
      %s438 = sadd.s32 %s437, 1
      %s439 = scalar_select %p436, %s437, %s438
      %p442 = pneg %p436
      %p443 = scmp.eq.s32.totalorder %s21, 3
      %p444 = por %p442, %p443
      %p445 = scmp.ne.s32.totalorder %s437, %s440
      %p446 = scmp.eq.s32.totalorder %s21, 0
      %p447 = por %p445, %p446
      %p448 = scmp.ne.s32.totalorder %s437, %s440
      %p449 = scmp.eq.s32.totalorder %s26, 3
      %p450 = por %p448, %p449
      %p451 = scmp.ne.s32.totalorder %s440, %s441
      %p452 = scmp.eq.s32.totalorder %s26, 0
      %p453 = por %p451, %p452
      %p454 = scmp.ne.s32.totalorder %s440, %s441
      %p455 = scmp.eq.s32.totalorder %s27, 3
      %p456 = por %p454, %p455
      %p458 = scmp.ne.s32.totalorder %s441, %s457
      %p459 = scmp.eq.s32.totalorder %s27, 0
      %p460 = por %p458, %p459
      %p461 = scmp.le.s32.totalorder 1, %s21
      %p462 = scmp.lt.s32.totalorder %s21, 5
      %p463 = pnand %p461, %p462
      %p464 = pneg %p463
      // Predicated region
      $region9: #{two_stream_split_forward.1} parent=5 // pred_check
        _
      $region10: #{two_stream_split_forward.1} parent=5 // pred_check_branch
        %466 = sbr.rel (%p463) target = $region12
      $region11: #{two_stream_split_forward.1} parent=5 // pred_region
        %s467 = ssub.s32 %s21, 1
      $region12: #{two_stream_split_forward.1} parent=5 // pred_fallthru
        _
      %p468 = scmp.lt.s32.totalorder %s21, 4
      // Predicated region
      $region13: #{two_stream_split_forward.1} parent=5 // pred_check
        %p469 = pneg %p468
      $region14: #{two_stream_split_forward.1} parent=5 // pred_check_branch
        %471 = sbr.rel (%p469) target = $region16
      $region15: #{two_stream_split_forward.1} parent=5 // pred_region
        // Predicated region
        $region17: #{two_stream_split_forward.1} parent=15 // pred_check
          %p472 = pneg %p55
        $region18: #{two_stream_split_forward.1} parent=15 // pred_check_branch
          %474 = sbr.rel (%p472) target = $region20
        $region19: #{two_stream_split_forward.1} parent=15 // pred_region
          %s475 = smul.u32 2, %s29
          %p476 = scmp.lt.s32.totalorder %s28, 1
          %s477 = scalar_select %p476, %s28, 1
          %p478 = scmp.lt.s32.totalorder %s475, 3
          %s479 = scalar_select %p478, %s475, 3
          %s480 = smul.addr %s477, 4
          %s481 = sadd.s32 %s479, %s480
          %s482 = smul.addr %s481, 4
          %s483 = scalar_lea.vmem %s0, %s482
          %s484 = smul.u32 2, %s29
        $region20: #{two_stream_split_forward.1} parent=15 // pred_fallthru
          _
        // Predicated region
        $region21: #{two_stream_split_forward.1} parent=15 // pred_check
          %p485 = pneg %p81
        $region22: #{two_stream_split_forward.1} parent=15 // pred_check_branch
          %487 = sbr.rel (%p485) target = $region24
        $region23: #{two_stream_split_forward.1} parent=15 // pred_region
          %p488 = scmp.lt.s32.totalorder %s28, 1
          %s489 = scalar_select %p488, %s28, 1
          %s490 = smul.addr %s489, 9
          %s491 = smul.addr %s490, 8
          %s492 = scalar_lea.vmem %s1, %s491
        $region24: #{two_stream_split_forward.1} parent=15 // pred_fallthru
          _
        // Predicated region
        $region25: #{two_stream_split_forward.1} parent=15 // pred_check
          %p493 = pneg %p107
        $region26: #{two_stream_split_forward.1} parent=15 // pred_check_branch
          %495 = sbr.rel (%p493) target = $region28
        $region27: #{two_stream_split_forward.1} parent=15 // pred_region
          %p496 = scmp.lt.s32.totalorder %s28, 1
          %s497 = scalar_select %p496, %s28, 1
          %s498 = smul.addr %s497, 9
          %s499 = smul.addr %s498, 8
          %s500 = scalar_lea.vmem %s2, %s499
        $region28: #{two_stream_split_forward.1} parent=15 // pred_fallthru
          _
        // Predicated region
        $region29: #{two_stream_split_forward.1} parent=15 // pred_check
          %p501 = pneg %p133
        $region30: #{two_stream_split_forward.1} parent=15 // pred_check_branch
          %503 = sbr.rel (%p501) target = $region32
        $region31: #{two_stream_split_forward.1} parent=15 // pred_region
          %p504 = scmp.lt.s32.totalorder %s28, 1
          %s505 = scalar_select %p504, %s28, 1
          %s506 = smul.addr %s505, 9
          %s507 = smul.addr %s506, 8
          %s508 = scalar_lea.vmem %s3, %s507
        $region32: #{two_stream_split_forward.1} parent=15 // pred_fallthru
          _
        // Predicated region
        $region33: #{two_stream_split_forward.1} parent=15 // pred_check
          %p509 = pneg %p159
        $region34: #{two_stream_split_forward.1} parent=15 // pred_check_branch
          %511 = sbr.rel (%p509) target = $region36
        $region35: #{two_stream_split_forward.1} parent=15 // pred_region
          %p512 = scmp.lt.s32.totalorder %s28, 1
          %s513 = scalar_select %p512, %s28, 1
          %s514 = smul.addr %s513, 9
          %s515 = smul.addr %s514, 8
          %s516 = scalar_lea.vmem %s4, %s515
        $region36: #{two_stream_split_forward.1} parent=15 // pred_fallthru
          _
        // Predicated region
        $region37: #{two_stream_split_forward.1} parent=15 // pred_check
          %p517 = pneg %p185
        $region38: #{two_stream_split_forward.1} parent=15 // pred_check_branch
          %519 = sbr.rel (%p517) target = $region40
        $region39: #{two_stream_split_forward.1} parent=15 // pred_region
          %p520 = scmp.lt.s32.totalorder %s28, 1
          %s521 = scalar_select %p520, %s28, 1
          %s522 = smul.addr %s521, 3
          %s523 = smul.addr %s522, 8
          %s524 = scalar_lea.vmem %s5, %s523
        $region40: #{two_stream_split_forward.1} parent=15 // pred_fallthru
          _
        // Predicated region
        $region41: #{two_stream_split_forward.1} parent=15 // pred_check
          %p525 = pneg %p211
        $region42: #{two_stream_split_forward.1} parent=15 // pred_check_branch
          %527 = sbr.rel (%p525) target = $region44
        $region43: #{two_stream_split_forward.1} parent=15 // pred_region
          %p528 = scmp.lt.s32.totalorder %s28, 1
          %s529 = scalar_select %p528, %s28, 1
          %s530 = smul.addr %s529, 8
          %s531 = scalar_lea.vmem %s6, %s530
        $region44: #{two_stream_split_forward.1} parent=15 // pred_fallthru
          _
        // Predicated region
        $region45: #{two_stream_split_forward.1} parent=15 // pred_check
          %p532 = pneg %p237
        $region46: #{two_stream_split_forward.1} parent=15 // pred_check_branch
          %534 = sbr.rel (%p532) target = $region48
        $region47: #{two_stream_split_forward.1} parent=15 // pred_region
          %p535 = scmp.lt.s32.totalorder %s28, 1
          %s536 = scalar_select %p535, %s28, 1
          %s537 = smul.addr %s536, 9
          %s538 = smul.addr %s537, 8
          %s539 = scalar_lea.vmem %s7, %s538
        $region48: #{two_stream_split_forward.1} parent=15 // pred_fallthru
          _
        // Predicated region
        $region49: #{two_stream_split_forward.1} parent=15 // pred_check
          %p540 = pneg %p263
        $region50: #{two_stream_split_forward.1} parent=15 // pred_check_branch
          %542 = sbr.rel (%p540) target = $region52
        $region51: #{two_stream_split_forward.1} parent=15 // pred_region
          %p543 = scmp.lt.s32.totalorder %s28, 1
          %s544 = scalar_select %p543, %s28, 1
          %s545 = smul.addr %s544, 9
          %s546 = smul.addr %s545, 8
          %s547 = scalar_lea.vmem %s8, %s546
        $region52: #{two_stream_split_forward.1} parent=15 // pred_fallthru
          _
        // Predicated region
        $region53: #{two_stream_split_forward.1} parent=15 // pred_check
          %p548 = pneg %p289
        $region54: #{two_stream_split_forward.1} parent=15 // pred_check_branch
          %550 = sbr.rel (%p548) target = $region56
        $region55: #{two_stream_split_forward.1} parent=15 // pred_region
          %p551 = scmp.lt.s32.totalorder %s28, 1
          %s552 = scalar_select %p551, %s28, 1
          %s553 = smul.addr %s552, 9
          %s554 = smul.addr %s553, 8
          %s555 = scalar_lea.vmem %s9, %s554
        $region56: #{two_stream_split_forward.1} parent=15 // pred_fallthru
          _
        // Predicated region
        $region57: #{two_stream_split_forward.1} parent=15 // pred_check
          %p556 = pneg %p315
        $region58: #{two_stream_split_forward.1} parent=15 // pred_check_branch
          %558 = sbr.rel (%p556) target = $region60
        $region59: #{two_stream_split_forward.1} parent=15 // pred_region
          %p559 = scmp.lt.s32.totalorder %s28, 1
          %s560 = scalar_select %p559, %s28, 1
          %s561 = smul.addr %s560, 9
          %s562 = smul.addr %s561, 8
          %s563 = scalar_lea.vmem %s10, %s562
        $region60: #{two_stream_split_forward.1} parent=15 // pred_fallthru
          _
        // Predicated region
        $region61: #{two_stream_split_forward.1} parent=15 // pred_check
          %p564 = pneg %p341
        $region62: #{two_stream_split_forward.1} parent=15 // pred_check_branch
          %566 = sbr.rel (%p564) target = $region64
        $region63: #{two_stream_split_forward.1} parent=15 // pred_region
          %p567 = scmp.lt.s32.totalorder %s28, 1
          %s568 = scalar_select %p567, %s28, 1
          %s569 = smul.addr %s568, 6
          %s570 = smul.addr %s569, 8
          %s571 = scalar_lea.vmem %s11, %s570
        $region64: #{two_stream_split_forward.1} parent=15 // pred_fallthru
          _
        // Predicated region
        $region65: #{two_stream_split_forward.1} parent=15 // pred_check
          %p572 = pneg %p367
        $region66: #{two_stream_split_forward.1} parent=15 // pred_check_branch
          %574 = sbr.rel (%p572) target = $region68
        $region67: #{two_stream_split_forward.1} parent=15 // pred_region
          %p575 = scmp.lt.s32.totalorder %s28, 1
          %s576 = scalar_select %p575, %s28, 1
          %s577 = smul.addr %s576, 2
          %s578 = smul.addr %s577, 8
          %s579 = scalar_lea.vmem %s12, %s578
        $region68: #{two_stream_split_forward.1} parent=15 // pred_fallthru
          _
        // Predicated region
        $region69: #{two_stream_split_forward.1} parent=15 // pred_check
          %p580 = pneg %p393
        $region70: #{two_stream_split_forward.1} parent=15 // pred_check_branch
          %582 = sbr.rel (%p580) target = $region72
        $region71: #{two_stream_split_forward.1} parent=15 // pred_region
          %p583 = scmp.lt.s32.totalorder %s28, 1
          %s584 = scalar_select %p583, %s28, 1
          %s585 = smul.addr %s584, 2
          %s586 = smul.addr %s585, 8
          %s587 = scalar_lea.vmem %s13, %s586
        $region72: #{two_stream_split_forward.1} parent=15 // pred_fallthru
          _
        // Predicated region
        $region73: #{two_stream_split_forward.1} parent=15 // pred_check
          %p588 = pneg %p419
        $region74: #{two_stream_split_forward.1} parent=15 // pred_check_branch
          %590 = sbr.rel (%p588) target = $region76
        $region75: #{two_stream_split_forward.1} parent=15 // pred_region
          %p591 = scmp.lt.s32.totalorder %s28, 1
          %s592 = scalar_select %p591, %s28, 1
          %s593 = smul.addr %s592, 2
          %s594 = smul.addr %s593, 8
          %s595 = scalar_lea.vmem %s14, %s594
        $region76: #{two_stream_split_forward.1} parent=15 // pred_fallthru
          _
      $region16: #{two_stream_split_forward.1} parent=5 // pred_fallthru
        _
      %p596 = scmp.le.s32.totalorder 1, %s21
      %p597 = scmp.lt.s32.totalorder %s21, 5
      %p598 = pnand %p596, %p597
      %p599 = pneg %p598
      // Predicated region
      $region77: #{two_stream_split_forward.1} parent=5 // pred_check
        _
      $region78: #{two_stream_split_forward.1} parent=5 // pred_check_branch
        %601 = sbr.rel (%p598) target = $region80
      $region79: #{two_stream_split_forward.1} parent=5 // pred_region
        %s602 = ssub.s32 %s21, 1
        %s603 = smul.u32 2, %s31
        %p604 = scmp.lt.s32.totalorder %s30, 1
        %s605 = scalar_select %p604, %s30, 1
        %p606 = scmp.lt.s32.totalorder %s603, 3
        %s607 = scalar_select %p606, %s603, 3
        %s608 = smul.addr %s605, 4
        %s609 = sadd.s32 %s607, %s608
        %s610 = smul.addr %s609, 4
        %s611 = scalar_lea.vmem %s0, %s610
        %p612 = pneg %p61
        %p613 = pneg %p58
        %p614 = scmp.lt.s32.totalorder %s30, 1
        %s615 = scalar_select %p614, %s30, 1
        %s616 = smul.addr %s615, 9
        %s617 = smul.addr %s616, 8
        %s618 = scalar_lea.vmem %s1, %s617
        %p619 = pneg %p87
        %p620 = pneg %p84
        %p621 = scmp.lt.s32.totalorder %s30, 1
        %s622 = scalar_select %p621, %s30, 1
        %s623 = smul.addr %s622, 9
        %s624 = smul.addr %s623, 8
        %s625 = scalar_lea.vmem %s2, %s624
        %p626 = pneg %p113
        %p627 = pneg %p110
        %p628 = scmp.lt.s32.totalorder %s30, 1
        %s629 = scalar_select %p628, %s30, 1
        %s630 = smul.addr %s629, 9
        %s631 = smul.addr %s630, 8
        %s632 = scalar_lea.vmem %s3, %s631
        %p633 = pneg %p139
        %p634 = pneg %p136
        %p635 = scmp.lt.s32.totalorder %s30, 1
        %s636 = scalar_select %p635, %s30, 1
        %s637 = smul.addr %s636, 9
        %s638 = smul.addr %s637, 8
        %s639 = scalar_lea.vmem %s4, %s638
        %p640 = pneg %p165
        %p641 = pneg %p162
        %p642 = scmp.lt.s32.totalorder %s30, 1
        %s643 = scalar_select %p642, %s30, 1
        %s644 = smul.addr %s643, 3
        %s645 = smul.addr %s644, 8
        %s646 = scalar_lea.vmem %s5, %s645
        %p647 = pneg %p191
        %p648 = pneg %p188
        %p649 = scmp.lt.s32.totalorder %s30, 1
        %s650 = scalar_select %p649, %s30, 1
        %s651 = smul.addr %s650, 8
        %s652 = scalar_lea.vmem %s6, %s651
        %p653 = pneg %p217
        %p654 = pneg %p214
        %p655 = scmp.lt.s32.totalorder %s30, 1
        %s656 = scalar_select %p655, %s30, 1
        %s657 = smul.addr %s656, 9
        %s658 = smul.addr %s657, 8
        %s659 = scalar_lea.vmem %s7, %s658
        %p660 = pneg %p243
        %p661 = pneg %p240
        %p662 = scmp.lt.s32.totalorder %s30, 1
        %s663 = scalar_select %p662, %s30, 1
        %s664 = smul.addr %s663, 9
        %s665 = smul.addr %s664, 8
        %s666 = scalar_lea.vmem %s8, %s665
        %p667 = pneg %p269
        %p668 = pneg %p266
        %p669 = scmp.lt.s32.totalorder %s30, 1
        %s670 = scalar_select %p669, %s30, 1
        %s671 = smul.addr %s670, 9
        %s672 = smul.addr %s671, 8
        %s673 = scalar_lea.vmem %s9, %s672
        %p674 = pneg %p295
        %p675 = pneg %p292
        %p676 = scmp.lt.s32.totalorder %s30, 1
        %s677 = scalar_select %p676, %s30, 1
        %s678 = smul.addr %s677, 9
        %s679 = smul.addr %s678, 8
        %s680 = scalar_lea.vmem %s10, %s679
        %p681 = pneg %p321
        %p682 = pneg %p318
        %p683 = scmp.lt.s32.totalorder %s30, 1
        %s684 = scalar_select %p683, %s30, 1
        %s685 = smul.addr %s684, 6
        %s686 = smul.addr %s685, 8
        %s687 = scalar_lea.vmem %s11, %s686
        %p688 = pneg %p347
        %p689 = pneg %p344
        %p690 = scmp.lt.s32.totalorder %s30, 1
        %s691 = scalar_select %p690, %s30, 1
        %s692 = smul.addr %s691, 2
        %s693 = smul.addr %s692, 8
        %s694 = scalar_lea.vmem %s12, %s693
        %p695 = pneg %p373
        %p696 = pneg %p370
        %p697 = scmp.lt.s32.totalorder %s30, 1
        %s698 = scalar_select %p697, %s30, 1
        %s699 = smul.addr %s698, 2
        %s700 = smul.addr %s699, 8
        %s701 = scalar_lea.vmem %s13, %s700
        %p702 = pneg %p399
        %p703 = pneg %p396
        %p704 = scmp.lt.s32.totalorder %s30, 1
        %s705 = scalar_select %p704, %s30, 1
        %s706 = smul.addr %s705, 2
        %s707 = smul.addr %s706, 8
        %s708 = scalar_lea.vmem %s14, %s707
        %p709 = pneg %p425
        %p710 = pneg %p422
        %p711 = pneg %p453
        %p712 = pneg %p450
        %s713 = sand.u32 %s440, 1
        %s714 = sand.u32 %s440, 1
        %s715 = smul.addr %s714, 32
        %s716 = scalar_lea.vmem [#allocation2], %s715
        %s717 = smul.u32 2, %s31
        %p718 = scmp.lt.s32.totalorder %s30, 1
        %s719 = scalar_select %p718, %s30, 1
        %p720 = scmp.lt.s32.totalorder %s717, 3
        %s721 = scalar_select %p720, %s717, 3
        %s722 = smul.addr %s719, 4
        %s723 = sadd.s32 %s721, %s722
        %s724 = smul.addr %s723, 4
        %s725 = scalar_lea.vmem %s0, %s724
        %s726 = smul.u32 2, %s31
        %p727 = scmp.lt.s32.totalorder %s30, 1
        %s728 = scalar_select %p727, %s30, 1
        %s729 = smul.addr %s728, 9
        %s730 = smul.addr %s729, 8
        %s731 = scalar_lea.vmem %s1, %s730
        %p732 = scmp.lt.s32.totalorder %s30, 1
        %s733 = scalar_select %p732, %s30, 1
        %s734 = smul.addr %s733, 9
        %s735 = smul.addr %s734, 8
        %s736 = scalar_lea.vmem %s2, %s735
        %p737 = scmp.lt.s32.totalorder %s30, 1
        %s738 = scalar_select %p737, %s30, 1
        %s739 = smul.addr %s738, 9
        %s740 = smul.addr %s739, 8
        %s741 = scalar_lea.vmem %s3, %s740
        %p742 = scmp.lt.s32.totalorder %s30, 1
        %s743 = scalar_select %p742, %s30, 1
        %s744 = smul.addr %s743, 9
        %s745 = smul.addr %s744, 8
        %s746 = scalar_lea.vmem %s4, %s745
        %p747 = scmp.lt.s32.totalorder %s30, 1
        %s748 = scalar_select %p747, %s30, 1
        %s749 = smul.addr %s748, 3
        %s750 = smul.addr %s749, 8
        %s751 = scalar_lea.vmem %s5, %s750
        %p752 = scmp.lt.s32.totalorder %s30, 1
        %s753 = scalar_select %p752, %s30, 1
        %s754 = smul.addr %s753, 8
        %s755 = scalar_lea.vmem %s6, %s754
        %p756 = scmp.lt.s32.totalorder %s30, 1
        %s757 = scalar_select %p756, %s30, 1
        %s758 = smul.addr %s757, 9
        %s759 = smul.addr %s758, 8
        %s760 = scalar_lea.vmem %s7, %s759
        %p761 = scmp.lt.s32.totalorder %s30, 1
        %s762 = scalar_select %p761, %s30, 1
        %s763 = smul.addr %s762, 9
        %s764 = smul.addr %s763, 8
        %s765 = scalar_lea.vmem %s8, %s764
        %p766 = scmp.lt.s32.totalorder %s30, 1
        %s767 = scalar_select %p766, %s30, 1
        %s768 = smul.addr %s767, 9
        %s769 = smul.addr %s768, 8
        %s770 = scalar_lea.vmem %s9, %s769
        %p771 = scmp.lt.s32.totalorder %s30, 1
        %s772 = scalar_select %p771, %s30, 1
        %s773 = smul.addr %s772, 9
        %s774 = smul.addr %s773, 8
        %s775 = scalar_lea.vmem %s10, %s774
        %p776 = scmp.lt.s32.totalorder %s30, 1
        %s777 = scalar_select %p776, %s30, 1
        %s778 = smul.addr %s777, 6
        %s779 = smul.addr %s778, 8
        %s780 = scalar_lea.vmem %s11, %s779
        %p781 = scmp.lt.s32.totalorder %s30, 1
        %s782 = scalar_select %p781, %s30, 1
        %s783 = smul.addr %s782, 2
        %s784 = smul.addr %s783, 8
        %s785 = scalar_lea.vmem %s12, %s784
        %p786 = scmp.lt.s32.totalorder %s30, 1
        %s787 = scalar_select %p786, %s30, 1
        %s788 = smul.addr %s787, 2
        %s789 = smul.addr %s788, 8
        %s790 = scalar_lea.vmem %s13, %s789
        %p791 = scmp.lt.s32.totalorder %s30, 1
        %s792 = scalar_select %p791, %s30, 1
        %s793 = smul.addr %s792, 2
        %s794 = smul.addr %s793, 8
        %s795 = scalar_lea.vmem %s14, %s794
        %s796 = smul.u32 2, %s31
        %v797 = vld [vmem:[%s725] sm:$0xff]
        %v798 = vld [vmem:[%s731] sm:$0xff]
        %v799 = vld [vmem:[%s731 + $0x8] sm:$0xff]
        %v800 = vld [vmem:[%s731 + $0x10] sm:$0xf]
        %v801 = vld [vmem:[%s736] sm:$0xff]
        %v802 = vld [vmem:[%s736 + $0x8] sm:$0xff]
        %v803 = vld [vmem:[%s736 + $0x10] sm:$0xf]
        %805 = vset.pattern.permute.xlu0 0
        %806 = vperm.xlu0 %805, %v801
        %v807 = vpop.permute.xlu0 %806
        %810 = vset.pattern.permute.xlu0 0
        %811 = vperm.xlu0 %810, %v802
        %v812 = vpop.permute.xlu0 %811
        %815 = vset.pattern.permute.xlu0 0
        %816 = vperm.xlu0 %815, %v803
        %v817 = vpop.permute.xlu0 %816
        %v820 = vcombine.high %v797, %v797
        %vm821 = vcmask 31744
        %v823 = vsel %vm821, %v798, 0
        %v826 = vsel %vm821, %v799, 0
        %v829 = vsel %vm821, %v800, 0
        %vm831 = vcmask 1043456
        %v832 = vsel %vm831, %v797, 0
        %v834 = vsel %vm831, %v820, 0
        %836 = vmatprep.subr.mxu0 0.0
        %837 = vmatpush1.msra.mxu0 0.0
        %838 = vmatprep.subr.mxu0 0.0
        %839 = vmatpush1.msra.mxu0 0.0
        %840 = vmatprep.subr.mxu0 0.0
        %841 = vmatpush1.msra.mxu0 0.0
        %842 = vmatprep.subr.mxu0 0.0
        %843 = vmatpush1.msra.mxu0 0.0
        %844 = vmatprep.subr.mxu0 0.0
        %845 = vmatpush1.msra.mxu0 0.0
        %846 = vmatprep.subr.mxu0 0.0
        %847 = vmatpush1.msra.mxu0 0.0
        %848 = vmatprep.subr.mxu0 0.0
        %849 = vmatpush1.msra.mxu0 0.0
        %850 = vmatprep.subr.mxu0 0.0
        %851 = vmatpush1.msra.mxu0 0.0
        %852 = vmatprep.subr.mxu0 0.0
        %853 = vmatpush1.msra.mxu0 0.0
        %854 = vmatprep.subr.mxu0 0.0
        %855 = vmatpush1.msra.mxu0 0.0
        %856 = vmatprep.subr.mxu0 0.0
        %857 = vmatpush1.msra.mxu0 0.0
        %858 = vmatprep.subr.mxu0 0.0
        %859 = vmatpush1.msra.mxu0 0.0
        %860 = vmatprep.subr.mxu0 0.0
        %861 = vmatpush1.msra.mxu0 0.0
        %862 = vmatprep.subr.mxu0 0.0
        %863 = vmatpush1.msra.mxu0 0.0
        %864 = vmatprep.subr.mxu0 0.0
        %865 = vmatpush1.msra.mxu0 0.0
        %866 = vmatprep.subr.mxu0 %v834
        %867 = vmatpush1.msra.mxu0 %v832
        %868 = vmatprep.subr.mxu0 0.0
        %869 = vmatpush2.msra.mxu0 0.0
        %870 = vmatprep.subr.mxu0 0.0
        %871 = vmatpush2.msra.mxu0 0.0
        %872 = vmatprep.subr.mxu0 0.0
        %873 = vmatpush2.msra.mxu0 0.0
        %874 = vmatprep.subr.mxu0 0.0
        %875 = vmatpush2.msra.mxu0 0.0
        %876 = vmatprep.subr.mxu0 0.0
        %877 = vmatpush2.msra.mxu0 0.0
        %878 = vmatprep.subr.mxu0 0.0
        %879 = vmatpush2.msra.mxu0 0.0
        %880 = vmatprep.subr.mxu0 0.0
        %881 = vmatpush2.msra.mxu0 0.0
        %882 = vmatprep.subr.mxu0 0.0
        %883 = vmatpush2.msra.mxu0 0.0
        %884 = vmatprep.subr.mxu0 0.0
        %885 = vmatpush2.msra.mxu0 0.0
        %886 = vmatprep.subr.mxu0 0.0
        %887 = vmatpush2.msra.mxu0 0.0
        %888 = vmatprep.subr.mxu0 0.0
        %889 = vmatpush2.msra.mxu0 0.0
        %890 = vmatprep.subr.mxu0 0.0
        %891 = vmatpush2.msra.mxu0 0.0
        %892 = vmatprep.subr.mxu0 0.0
        %893 = vmatpush2.msra.mxu0 0.0
        %894 = vmatprep.subr.mxu0 0.0
        %895 = vmatpush2.msra.mxu0 0.0
        %896 = vmatprep.subr.mxu0 0.0
        %897 = vmatpush2.msra.mxu0 0.0
        %898 = vmatprep.subr.mxu0 0.0
        %899 = vmatpush2.msra.mxu0 0.0
        %900 = vmatprep.mubr.f32.mxu0 0.0
        %901 = vmatmul.mubr.f32.gmra.mxu0 %v823
        %v902 = vpop.f32.mrf.mxu0
        %v903 = vadd.f32 %v807, %v902
        %v904 = vpop.f32.mrf.mxu0
        %v905 = vadd.f32 %v807, %v904
        %906 = vmatprep.mubr.f32.mxu0 0.0
        %907 = vmatmul.mubr.f32.gmra.mxu0 %v826
        %v908 = vpop.f32.mrf.mxu0
        %v909 = vadd.f32 %v812, %v908
        %v910 = vpop.f32.mrf.mxu0
        %v911 = vadd.f32 %v812, %v910
        %912 = vmatprep.mubr.f32.mxu0 0.0
        %913 = vmatmul.mubr.f32.gmra.mxu0 %v829
        %v914 = vpop.f32.mrf.mxu0
        %v915 = vadd.f32 %v817, %v914
        %v916 = vpop.f32.mrf.mxu0
        %v917 = vadd.f32 %v817, %v916
        %918 = vdwg.mxu0
        %v919 = vmul.f32 %v903, 0.2
        %v920 = vmul.f32 %v905, 0.2
        %v921 = vmul.f32 %v909, 0.2
        %v922 = vmul.f32 %v911, 0.2
        %v923 = vmul.f32 %v915, 0.2
        %v924 = vmul.f32 %v917, 0.2
        %v925 = vmax.f32 %v903, %v919
        %v926 = vmax.f32 %v905, %v920
        %v927 = vmax.f32 %v909, %v921
        %v928 = vmax.f32 %v911, %v922
        %v929 = vmax.f32 %v915, %v923
        %v930 = vmax.f32 %v917, %v924
        %s931 = scalar_lea.vmem %s731, 24
        %v932 = vld [vmem:[%s931] sm:$0xff]
        %v933 = vld [vmem:[%s931 + $0x8] sm:$0xff]
        %v934 = vld [vmem:[%s931 + $0x10] sm:$0xf]
        %s935 = scalar_lea.vmem %s736, 24
        %v936 = vld [vmem:[%s935] sm:$0xff]
        %v937 = vld [vmem:[%s935 + $0x8] sm:$0xff]
        %v938 = vld [vmem:[%s935 + $0x10] sm:$0xf]
        %940 = vset.pattern.permute.xlu0 0
        %941 = vperm.xlu0 %940, %v936
        %v942 = vpop.permute.xlu0 %941
        %945 = vset.pattern.permute.xlu0 0
        %946 = vperm.xlu0 %945, %v937
        %v947 = vpop.permute.xlu0 %946
        %950 = vset.pattern.permute.xlu0 0
        %951 = vperm.xlu0 %950, %v938
        %v952 = vpop.permute.xlu0 %951
        %v955 = vsel %vm821, %v932, 0
        %v958 = vsel %vm821, %v933, 0
        %v961 = vsel %vm821, %v934, 0
        %963 = vmatprep.subr.mxu0 0.0
        %964 = vmatpush1.msra.mxu0 0.0
        %965 = vmatprep.subr.mxu0 0.0
        %966 = vmatpush1.msra.mxu0 0.0
        %967 = vmatprep.subr.mxu0 0.0
        %968 = vmatpush1.msra.mxu0 0.0
        %969 = vmatprep.subr.mxu0 0.0
        %970 = vmatpush1.msra.mxu0 0.0
        %971 = vmatprep.subr.mxu0 0.0
        %972 = vmatpush1.msra.mxu0 0.0
        %973 = vmatprep.subr.mxu0 0.0
        %974 = vmatpush1.msra.mxu0 0.0
        %975 = vmatprep.subr.mxu0 0.0
        %976 = vmatpush1.msra.mxu0 0.0
        %977 = vmatprep.subr.mxu0 0.0
        %978 = vmatpush1.msra.mxu0 0.0
        %979 = vmatprep.subr.mxu0 0.0
        %980 = vmatpush1.msra.mxu0 0.0
        %981 = vmatprep.subr.mxu0 0.0
        %982 = vmatpush1.msra.mxu0 0.0
        %983 = vmatprep.subr.mxu0 0.0
        %984 = vmatpush1.msra.mxu0 0.0
        %985 = vmatprep.subr.mxu0 0.0
        %986 = vmatpush1.msra.mxu0 0.0
        %987 = vmatprep.subr.mxu0 0.0
        %988 = vmatpush1.msra.mxu0 0.0
        %989 = vmatprep.subr.mxu0 0.0
        %990 = vmatpush1.msra.mxu0 0.0
        %991 = vmatprep.subr.mxu0 0.0
        %992 = vmatpush1.msra.mxu0 0.0
        %993 = vmatprep.subr.mxu0 %v834
        %994 = vmatpush1.msra.mxu0 %v832
        %995 = vmatprep.subr.mxu0 0.0
        %996 = vmatpush2.msra.mxu0 0.0
        %997 = vmatprep.subr.mxu0 0.0
        %998 = vmatpush2.msra.mxu0 0.0
        %999 = vmatprep.subr.mxu0 0.0
        %1000 = vmatpush2.msra.mxu0 0.0
        %1001 = vmatprep.subr.mxu0 0.0
        %1002 = vmatpush2.msra.mxu0 0.0
        %1003 = vmatprep.subr.mxu0 0.0
        %1004 = vmatpush2.msra.mxu0 0.0
        %1005 = vmatprep.subr.mxu0 0.0
        %1006 = vmatpush2.msra.mxu0 0.0
        %1007 = vmatprep.subr.mxu0 0.0
        %1008 = vmatpush2.msra.mxu0 0.0
        %1009 = vmatprep.subr.mxu0 0.0
        %1010 = vmatpush2.msra.mxu0 0.0
        %1011 = vmatprep.subr.mxu0 0.0
        %1012 = vmatpush2.msra.mxu0 0.0
        %1013 = vmatprep.subr.mxu0 0.0
        %1014 = vmatpush2.msra.mxu0 0.0
        %1015 = vmatprep.subr.mxu0 0.0
        %1016 = vmatpush2.msra.mxu0 0.0
        %1017 = vmatprep.subr.mxu0 0.0
        %1018 = vmatpush2.msra.mxu0 0.0
        %1019 = vmatprep.subr.mxu0 0.0
        %1020 = vmatpush2.msra.mxu0 0.0
        %1021 = vmatprep.subr.mxu0 0.0
        %1022 = vmatpush2.msra.mxu0 0.0
        %1023 = vmatprep.subr.mxu0 0.0
        %1024 = vmatpush2.msra.mxu0 0.0
        %1025 = vmatprep.subr.mxu0 0.0
        %1026 = vmatpush2.msra.mxu0 0.0
        %1027 = vmatprep.mubr.f32.mxu0 0.0
        %1028 = vmatmul.mubr.f32.gmra.mxu0 %v955
        %v1029 = vpop.f32.mrf.mxu0
        %v1030 = vadd.f32 %v942, %v1029
        %v1031 = vpop.f32.mrf.mxu0
        %v1032 = vadd.f32 %v942, %v1031
        %1033 = vmatprep.mubr.f32.mxu0 0.0
        %1034 = vmatmul.mubr.f32.gmra.mxu0 %v958
        %v1035 = vpop.f32.mrf.mxu0
        %v1036 = vadd.f32 %v947, %v1035
        %v1037 = vpop.f32.mrf.mxu0
        %v1038 = vadd.f32 %v947, %v1037
        %1039 = vmatprep.mubr.f32.mxu0 0.0
        %1040 = vmatmul.mubr.f32.gmra.mxu0 %v961
        %v1041 = vpop.f32.mrf.mxu0
        %v1042 = vadd.f32 %v952, %v1041
        %v1043 = vpop.f32.mrf.mxu0
        %v1044 = vadd.f32 %v952, %v1043
        %1045 = vdwg.mxu0
        %v1046 = vmul.f32 %v1030, 0.2
        %v1047 = vmul.f32 %v1032, 0.2
        %v1048 = vmul.f32 %v1036, 0.2
        %v1049 = vmul.f32 %v1038, 0.2
        %v1050 = vmul.f32 %v1042, 0.2
        %v1051 = vmul.f32 %v1044, 0.2
        %v1052 = vmax.f32 %v1030, %v1046
        %v1053 = vmax.f32 %v1032, %v1047
        %v1054 = vmax.f32 %v1036, %v1048
        %v1055 = vmax.f32 %v1038, %v1049
        %v1056 = vmax.f32 %v1042, %v1050
        %v1057 = vmax.f32 %v1044, %v1051
        %s1058 = scalar_lea.vmem %s731, 48
        %v1059 = vld [vmem:[%s1058] sm:$0xff]
        %v1060 = vld [vmem:[%s1058 + $0x8] sm:$0xff]
        %v1061 = vld [vmem:[%s1058 + $0x10] sm:$0xf]
        %s1062 = scalar_lea.vmem %s736, 48
        %v1063 = vld [vmem:[%s1062] sm:$0xff]
        %v1064 = vld [vmem:[%s1062 + $0x8] sm:$0xff]
        %v1065 = vld [vmem:[%s1062 + $0x10] sm:$0xf]
        %1067 = vset.pattern.permute.xlu0 0
        %1068 = vperm.xlu0 %1067, %v1063
        %v1069 = vpop.permute.xlu0 %1068
        %1072 = vset.pattern.permute.xlu0 0
        %1073 = vperm.xlu0 %1072, %v1064
        %v1074 = vpop.permute.xlu0 %1073
        %1077 = vset.pattern.permute.xlu0 0
        %1078 = vperm.xlu0 %1077, %v1065
        %v1079 = vpop.permute.xlu0 %1078
        %v1082 = vsel %vm821, %v1059, 0
        %v1085 = vsel %vm821, %v1060, 0
        %v1088 = vsel %vm821, %v1061, 0
        %1090 = vmatprep.subr.mxu0 0.0
        %1091 = vmatpush1.msra.mxu0 0.0
        %1092 = vmatprep.subr.mxu0 0.0
        %1093 = vmatpush1.msra.mxu0 0.0
        %1094 = vmatprep.subr.mxu0 0.0
        %1095 = vmatpush1.msra.mxu0 0.0
        %1096 = vmatprep.subr.mxu0 0.0
        %1097 = vmatpush1.msra.mxu0 0.0
        %1098 = vmatprep.subr.mxu0 0.0
        %1099 = vmatpush1.msra.mxu0 0.0
        %1100 = vmatprep.subr.mxu0 0.0
        %1101 = vmatpush1.msra.mxu0 0.0
        %1102 = vmatprep.subr.mxu0 0.0
        %1103 = vmatpush1.msra.mxu0 0.0
        %1104 = vmatprep.subr.mxu0 0.0
        %1105 = vmatpush1.msra.mxu0 0.0
        %1106 = vmatprep.subr.mxu0 0.0
        %1107 = vmatpush1.msra.mxu0 0.0
        %1108 = vmatprep.subr.mxu0 0.0
        %1109 = vmatpush1.msra.mxu0 0.0
        %1110 = vmatprep.subr.mxu0 0.0
        %1111 = vmatpush1.msra.mxu0 0.0
        %1112 = vmatprep.subr.mxu0 0.0
        %1113 = vmatpush1.msra.mxu0 0.0
        %1114 = vmatprep.subr.mxu0 0.0
        %1115 = vmatpush1.msra.mxu0 0.0
        %1116 = vmatprep.subr.mxu0 0.0
        %1117 = vmatpush1.msra.mxu0 0.0
        %1118 = vmatprep.subr.mxu0 0.0
        %1119 = vmatpush1.msra.mxu0 0.0
        %1120 = vmatprep.subr.mxu0 %v834
        %1121 = vmatpush1.msra.mxu0 %v832
        %1122 = vmatprep.subr.mxu0 0.0
        %1123 = vmatpush2.msra.mxu0 0.0
        %1124 = vmatprep.subr.mxu0 0.0
        %1125 = vmatpush2.msra.mxu0 0.0
        %1126 = vmatprep.subr.mxu0 0.0
        %1127 = vmatpush2.msra.mxu0 0.0
        %1128 = vmatprep.subr.mxu0 0.0
        %1129 = vmatpush2.msra.mxu0 0.0
        %1130 = vmatprep.subr.mxu0 0.0
        %1131 = vmatpush2.msra.mxu0 0.0
        %1132 = vmatprep.subr.mxu0 0.0
        %1133 = vmatpush2.msra.mxu0 0.0
        %1134 = vmatprep.subr.mxu0 0.0
        %1135 = vmatpush2.msra.mxu0 0.0
        %1136 = vmatprep.subr.mxu0 0.0
        %1137 = vmatpush2.msra.mxu0 0.0
        %1138 = vmatprep.subr.mxu0 0.0
        %1139 = vmatpush2.msra.mxu0 0.0
        %1140 = vmatprep.subr.mxu0 0.0
        %1141 = vmatpush2.msra.mxu0 0.0
        %1142 = vmatprep.subr.mxu0 0.0
        %1143 = vmatpush2.msra.mxu0 0.0
        %1144 = vmatprep.subr.mxu0 0.0
        %1145 = vmatpush2.msra.mxu0 0.0
        %1146 = vmatprep.subr.mxu0 0.0
        %1147 = vmatpush2.msra.mxu0 0.0
        %1148 = vmatprep.subr.mxu0 0.0
        %1149 = vmatpush2.msra.mxu0 0.0
        %1150 = vmatprep.subr.mxu0 0.0
        %1151 = vmatpush2.msra.mxu0 0.0
        %1152 = vmatprep.subr.mxu0 0.0
        %1153 = vmatpush2.msra.mxu0 0.0
        %1154 = vmatprep.mubr.f32.mxu0 0.0
        %1155 = vmatmul.mubr.f32.gmra.mxu0 %v1082
        %v1156 = vpop.f32.mrf.mxu0
        %v1157 = vadd.f32 %v1069, %v1156
        %v1158 = vpop.f32.mrf.mxu0
        %v1159 = vadd.f32 %v1069, %v1158
        %1160 = vmatprep.mubr.f32.mxu0 0.0
        %1161 = vmatmul.mubr.f32.gmra.mxu0 %v1085
        %v1162 = vpop.f32.mrf.mxu0
        %v1163 = vadd.f32 %v1074, %v1162
        %v1164 = vpop.f32.mrf.mxu0
        %v1165 = vadd.f32 %v1074, %v1164
        %1166 = vmatprep.mubr.f32.mxu0 0.0
        %1167 = vmatmul.mubr.f32.gmra.mxu0 %v1088
        %v1168 = vpop.f32.mrf.mxu0
        %v1169 = vadd.f32 %v1079, %v1168
        %v1170 = vpop.f32.mrf.mxu0
        %v1171 = vadd.f32 %v1079, %v1170
        %1172 = vdwg.mxu0
        %v1173 = vmul.f32 %v1157, 0.2
        %v1174 = vmul.f32 %v1159, 0.2
        %v1175 = vmul.f32 %v1163, 0.2
        %v1176 = vmul.f32 %v1165, 0.2
        %v1177 = vmul.f32 %v1169, 0.2
        %v1178 = vmul.f32 %v1171, 0.2
        %v1179 = vmax.f32 %v1157, %v1173
        %v1180 = vmax.f32 %v1159, %v1174
        %v1181 = vmax.f32 %v1163, %v1175
        %v1182 = vmax.f32 %v1165, %v1176
        %v1183 = vmax.f32 %v1169, %v1177
        %v1184 = vmax.f32 %v1171, %v1178
        %v1185 = vld [vmem:[%s741] sm:$0xff]
        %v1186 = vld [vmem:[%s741 + $0x8] sm:$0xff]
        %v1187 = vld [vmem:[%s741 + $0x10] sm:$0xf]
        %v1188 = vld [vmem:[%s746] sm:$0xff]
        %v1189 = vld [vmem:[%s746 + $0x8] sm:$0xff]
        %v1190 = vld [vmem:[%s746 + $0x10] sm:$0xf]
        %1192 = vset.pattern.permute.xlu0 0
        %1193 = vperm.xlu0 %1192, %v1188
        %v1194 = vpop.permute.xlu0 %1193
        %1197 = vset.pattern.permute.xlu0 0
        %1198 = vperm.xlu0 %1197, %v1189
        %v1199 = vpop.permute.xlu0 %1198
        %1202 = vset.pattern.permute.xlu0 0
        %1203 = vperm.xlu0 %1202, %v1190
        %v1204 = vpop.permute.xlu0 %1203
        %vm1206 = vcmask 162816
        %v1208 = vsel %vm1206, %v1185, 0
        %v1211 = vsel %vm1206, %v1186, 0
        %v1214 = vsel %vm1206, %v1187, 0
        %v1217 = vsel %vm831, %v929, 0
        %v1220 = vsel %vm831, %v930, 0
        %1222 = vmatprep.subr.mxu0 0.0
        %1223 = vmatpush1.msra.mxu0 0.0
        %1224 = vmatprep.subr.mxu0 0.0
        %1225 = vmatpush1.msra.mxu0 0.0
        %1226 = vmatprep.subr.mxu0 0.0
        %1227 = vmatpush1.msra.mxu0 0.0
        %1228 = vmatprep.subr.mxu0 0.0
        %1229 = vmatpush1.msra.mxu0 0.0
        %1230 = vmatprep.subr.mxu0 0.0
        %1231 = vmatpush1.msra.mxu0 0.0
        %1232 = vmatprep.subr.mxu0 0.0
        %1233 = vmatpush1.msra.mxu0 0.0
        %1234 = vmatprep.subr.mxu0 0.0
        %1235 = vmatpush1.msra.mxu0 0.0
        %1236 = vmatprep.subr.mxu0 0.0
        %1237 = vmatpush1.msra.mxu0 0.0
        %1238 = vmatprep.subr.mxu0 0.0
        %1239 = vmatpush1.msra.mxu0 0.0
        %1240 = vmatprep.subr.mxu0 0.0
        %1241 = vmatpush1.msra.mxu0 0.0
        %1242 = vmatprep.subr.mxu0 0.0
        %1243 = vmatpush1.msra.mxu0 0.0
        %1244 = vmatprep.subr.mxu0 0.0
        %1245 = vmatpush1.msra.mxu0 0.0
        %1246 = vmatprep.subr.mxu0 0.0
        %1247 = vmatpush1.msra.mxu0 0.0
        %1248 = vmatprep.subr.mxu0 %v1220
        %1249 = vmatpush1.msra.mxu0 %v1217
        %1250 = vmatprep.subr.mxu0 %v928
        %1251 = vmatpush1.msra.mxu0 %v927
        %1252 = vmatprep.subr.mxu0 %v926
        %1253 = vmatpush1.msra.mxu0 %v925
        %1254 = vmatprep.subr.mxu0 0.0
        %1255 = vmatpush2.msra.mxu0 0.0
        %1256 = vmatprep.subr.mxu0 0.0
        %1257 = vmatpush2.msra.mxu0 0.0
        %1258 = vmatprep.subr.mxu0 0.0
        %1259 = vmatpush2.msra.mxu0 0.0
        %1260 = vmatprep.subr.mxu0 0.0
        %1261 = vmatpush2.msra.mxu0 0.0
        %1262 = vmatprep.subr.mxu0 0.0
        %1263 = vmatpush2.msra.mxu0 0.0
        %1264 = vmatprep.subr.mxu0 0.0
        %1265 = vmatpush2.msra.mxu0 0.0
        %1266 = vmatprep.subr.mxu0 0.0
        %1267 = vmatpush2.msra.mxu0 0.0
        %1268 = vmatprep.subr.mxu0 0.0
        %1269 = vmatpush2.msra.mxu0 0.0
        %1270 = vmatprep.subr.mxu0 0.0
        %1271 = vmatpush2.msra.mxu0 0.0
        %1272 = vmatprep.subr.mxu0 0.0
        %1273 = vmatpush2.msra.mxu0 0.0
        %1274 = vmatprep.subr.mxu0 0.0
        %1275 = vmatpush2.msra.mxu0 0.0
        %1276 = vmatprep.subr.mxu0 0.0
        %1277 = vmatpush2.msra.mxu0 0.0
        %1278 = vmatprep.subr.mxu0 0.0
        %1279 = vmatpush2.msra.mxu0 0.0
        %1280 = vmatprep.subr.mxu0 0.0
        %1281 = vmatpush2.msra.mxu0 0.0
        %1282 = vmatprep.subr.mxu0 0.0
        %1283 = vmatpush2.msra.mxu0 0.0
        %1284 = vmatprep.subr.mxu0 0.0
        %1285 = vmatpush2.msra.mxu0 0.0
        %1286 = vmatprep.mubr.f32.mxu0 0.0
        %1287 = vmatmul.mubr.f32.gmra.mxu0 %v1208
        %v1288 = vpop.f32.mrf.mxu0
        %v1289 = vadd.f32 %v1194, %v1288
        %v1290 = vpop.f32.mrf.mxu0
        %v1291 = vadd.f32 %v1194, %v1290
        %1292 = vmatprep.mubr.f32.mxu0 0.0
        %1293 = vmatmul.mubr.f32.gmra.mxu0 %v1211
        %v1294 = vpop.f32.mrf.mxu0
        %v1295 = vadd.f32 %v1199, %v1294
        %v1296 = vpop.f32.mrf.mxu0
        %v1297 = vadd.f32 %v1199, %v1296
        %1298 = vmatprep.mubr.f32.mxu0 0.0
        %1299 = vmatmul.mubr.f32.gmra.mxu0 %v1214
        %v1300 = vpop.f32.mrf.mxu0
        %v1301 = vadd.f32 %v1204, %v1300
        %v1302 = vpop.f32.mrf.mxu0
        %v1303 = vadd.f32 %v1204, %v1302
        %1304 = vdwg.mxu0
        %v1305 = vmul.f32 %v1289, 0.2
        %v1306 = vmul.f32 %v1291, 0.2
        %v1307 = vmul.f32 %v1295, 0.2
        %v1308 = vmul.f32 %v1297, 0.2
        %v1309 = vmul.f32 %v1301, 0.2
        %v1310 = vmul.f32 %v1303, 0.2
        %v1311 = vmax.f32 %v1289, %v1305
        %v1312 = vmax.f32 %v1291, %v1306
        %v1313 = vmax.f32 %v1295, %v1307
        %v1314 = vmax.f32 %v1297, %v1308
        %v1315 = vmax.f32 %v1301, %v1309
        %v1316 = vmax.f32 %v1303, %v1310
        %s1317 = scalar_lea.vmem %s741, 24
        %v1318 = vld [vmem:[%s1317] sm:$0xff]
        %v1319 = vld [vmem:[%s1317 + $0x8] sm:$0xff]
        %v1320 = vld [vmem:[%s1317 + $0x10] sm:$0xf]
        %v1321 = vadd.f32 %v1052, %v1311
        %v1322 = vadd.f32 %v1053, %v1312
        %v1323 = vadd.f32 %v1054, %v1313
        %v1324 = vadd.f32 %v1055, %v1314
        %v1325 = vadd.f32 %v1056, %v1315
        %v1326 = vadd.f32 %v1057, %v1316
        %s1327 = scalar_lea.vmem %s746, 24
        %v1328 = vld [vmem:[%s1327] sm:$0xff]
        %v1329 = vld [vmem:[%s1327 + $0x8] sm:$0xff]
        %v1330 = vld [vmem:[%s1327 + $0x10] sm:$0xf]
        %1332 = vset.pattern.permute.xlu0 0
        %1333 = vperm.xlu0 %1332, %v1328
        %v1334 = vpop.permute.xlu0 %1333
        %1337 = vset.pattern.permute.xlu0 0
        %1338 = vperm.xlu0 %1337, %v1329
        %v1339 = vpop.permute.xlu0 %1338
        %1342 = vset.pattern.permute.xlu0 0
        %1343 = vperm.xlu0 %1342, %v1330
        %v1344 = vpop.permute.xlu0 %1343
        %v1347 = vsel %vm1206, %v1318, 0
        %v1350 = vsel %vm1206, %v1319, 0
        %v1353 = vsel %vm1206, %v1320, 0
        %v1356 = vsel %vm831, %v1325, 0
        %v1359 = vsel %vm831, %v1326, 0
        %1361 = vmatprep.subr.mxu0 0.0
        %1362 = vmatpush1.msra.mxu0 0.0
        %1363 = vmatprep.subr.mxu0 0.0
        %1364 = vmatpush1.msra.mxu0 0.0
        %1365 = vmatprep.subr.mxu0 0.0
        %1366 = vmatpush1.msra.mxu0 0.0
        %1367 = vmatprep.subr.mxu0 0.0
        %1368 = vmatpush1.msra.mxu0 0.0
        %1369 = vmatprep.subr.mxu0 0.0
        %1370 = vmatpush1.msra.mxu0 0.0
        %1371 = vmatprep.subr.mxu0 0.0
        %1372 = vmatpush1.msra.mxu0 0.0
        %1373 = vmatprep.subr.mxu0 0.0
        %1374 = vmatpush1.msra.mxu0 0.0
        %1375 = vmatprep.subr.mxu0 0.0
        %1376 = vmatpush1.msra.mxu0 0.0
        %1377 = vmatprep.subr.mxu0 0.0
        %1378 = vmatpush1.msra.mxu0 0.0
        %1379 = vmatprep.subr.mxu0 0.0
        %1380 = vmatpush1.msra.mxu0 0.0
        %1381 = vmatprep.subr.mxu0 0.0
        %1382 = vmatpush1.msra.mxu0 0.0
        %1383 = vmatprep.subr.mxu0 0.0
        %1384 = vmatpush1.msra.mxu0 0.0
        %1385 = vmatprep.subr.mxu0 0.0
        %1386 = vmatpush1.msra.mxu0 0.0
        %1387 = vmatprep.subr.mxu0 %v1359
        %1388 = vmatpush1.msra.mxu0 %v1356
        %1389 = vmatprep.subr.mxu0 %v1324
        %1390 = vmatpush1.msra.mxu0 %v1323
        %1391 = vmatprep.subr.mxu0 %v1322
        %1392 = vmatpush1.msra.mxu0 %v1321
        %1393 = vmatprep.subr.mxu0 0.0
        %1394 = vmatpush2.msra.mxu0 0.0
        %1395 = vmatprep.subr.mxu0 0.0
        %1396 = vmatpush2.msra.mxu0 0.0
        %1397 = vmatprep.subr.mxu0 0.0
        %1398 = vmatpush2.msra.mxu0 0.0
        %1399 = vmatprep.subr.mxu0 0.0
        %1400 = vmatpush2.msra.mxu0 0.0
        %1401 = vmatprep.subr.mxu0 0.0
        %1402 = vmatpush2.msra.mxu0 0.0
        %1403 = vmatprep.subr.mxu0 0.0
        %1404 = vmatpush2.msra.mxu0 0.0
        %1405 = vmatprep.subr.mxu0 0.0
        %1406 = vmatpush2.msra.mxu0 0.0
        %1407 = vmatprep.subr.mxu0 0.0
        %1408 = vmatpush2.msra.mxu0 0.0
        %1409 = vmatprep.subr.mxu0 0.0
        %1410 = vmatpush2.msra.mxu0 0.0
        %1411 = vmatprep.subr.mxu0 0.0
        %1412 = vmatpush2.msra.mxu0 0.0
        %1413 = vmatprep.subr.mxu0 0.0
        %1414 = vmatpush2.msra.mxu0 0.0
        %1415 = vmatprep.subr.mxu0 0.0
        %1416 = vmatpush2.msra.mxu0 0.0
        %1417 = vmatprep.subr.mxu0 0.0
        %1418 = vmatpush2.msra.mxu0 0.0
        %1419 = vmatprep.subr.mxu0 0.0
        %1420 = vmatpush2.msra.mxu0 0.0
        %1421 = vmatprep.subr.mxu0 0.0
        %1422 = vmatpush2.msra.mxu0 0.0
        %1423 = vmatprep.subr.mxu0 0.0
        %1424 = vmatpush2.msra.mxu0 0.0
        %1425 = vmatprep.mubr.f32.mxu0 0.0
        %1426 = vmatmul.mubr.f32.gmra.mxu0 %v1347
        %v1427 = vpop.f32.mrf.mxu0
        %v1428 = vadd.f32 %v1334, %v1427
        %v1429 = vpop.f32.mrf.mxu0
        %v1430 = vadd.f32 %v1334, %v1429
        %1431 = vmatprep.mubr.f32.mxu0 0.0
        %1432 = vmatmul.mubr.f32.gmra.mxu0 %v1350
        %v1433 = vpop.f32.mrf.mxu0
        %v1434 = vadd.f32 %v1339, %v1433
        %v1435 = vpop.f32.mrf.mxu0
        %v1436 = vadd.f32 %v1339, %v1435
        %1437 = vmatprep.mubr.f32.mxu0 0.0
        %1438 = vmatmul.mubr.f32.gmra.mxu0 %v1353
        %v1439 = vpop.f32.mrf.mxu0
        %v1440 = vadd.f32 %v1344, %v1439
        %v1441 = vpop.f32.mrf.mxu0
        %v1442 = vadd.f32 %v1344, %v1441
        %1443 = vdwg.mxu0
        %v1444 = vmul.f32 %v1428, 0.2
        %v1445 = vmul.f32 %v1430, 0.2
        %v1446 = vmul.f32 %v1434, 0.2
        %v1447 = vmul.f32 %v1436, 0.2
        %v1448 = vmul.f32 %v1440, 0.2
        %v1449 = vmul.f32 %v1442, 0.2
        %v1450 = vmax.f32 %v1428, %v1444
        %v1451 = vmax.f32 %v1430, %v1445
        %v1452 = vmax.f32 %v1434, %v1446
        %v1453 = vmax.f32 %v1436, %v1447
        %v1454 = vmax.f32 %v1440, %v1448
        %v1455 = vmax.f32 %v1442, %v1449
        %s1456 = scalar_lea.vmem %s741, 48
        %v1457 = vld [vmem:[%s1456] sm:$0xff]
        %v1458 = vld [vmem:[%s1456 + $0x8] sm:$0xff]
        %v1459 = vld [vmem:[%s1456 + $0x10] sm:$0xf]
        %v1460 = vadd.f32 %v1179, %v1450
        %v1461 = vadd.f32 %v1180, %v1451
        %v1462 = vadd.f32 %v1181, %v1452
        %v1463 = vadd.f32 %v1182, %v1453
        %v1464 = vadd.f32 %v1183, %v1454
        %v1465 = vadd.f32 %v1184, %v1455
        %s1466 = scalar_lea.vmem %s746, 48
        %v1467 = vld [vmem:[%s1466] sm:$0xff]
        %v1468 = vld [vmem:[%s1466 + $0x8] sm:$0xff]
        %v1469 = vld [vmem:[%s1466 + $0x10] sm:$0xf]
        %1471 = vset.pattern.permute.xlu0 0
        %1472 = vperm.xlu0 %1471, %v1467
        %v1473 = vpop.permute.xlu0 %1472
        %1476 = vset.pattern.permute.xlu0 0
        %1477 = vperm.xlu0 %1476, %v1468
        %v1478 = vpop.permute.xlu0 %1477
        %1481 = vset.pattern.permute.xlu0 0
        %1482 = vperm.xlu0 %1481, %v1469
        %v1483 = vpop.permute.xlu0 %1482
        %v1486 = vsel %vm1206, %v1457, 0
        %v1489 = vsel %vm1206, %v1458, 0
        %v1492 = vsel %vm1206, %v1459, 0
        %v1495 = vsel %vm831, %v1464, 0
        %v1498 = vsel %vm831, %v1465, 0
        %1500 = vmatprep.subr.mxu0 0.0
        %1501 = vmatpush1.msra.mxu0 0.0
        %1502 = vmatprep.subr.mxu0 0.0
        %1503 = vmatpush1.msra.mxu0 0.0
        %1504 = vmatprep.subr.mxu0 0.0
        %1505 = vmatpush1.msra.mxu0 0.0
        %1506 = vmatprep.subr.mxu0 0.0
        %1507 = vmatpush1.msra.mxu0 0.0
        %1508 = vmatprep.subr.mxu0 0.0
        %1509 = vmatpush1.msra.mxu0 0.0
        %1510 = vmatprep.subr.mxu0 0.0
        %1511 = vmatpush1.msra.mxu0 0.0
        %1512 = vmatprep.subr.mxu0 0.0
        %1513 = vmatpush1.msra.mxu0 0.0
        %1514 = vmatprep.subr.mxu0 0.0
        %1515 = vmatpush1.msra.mxu0 0.0
        %1516 = vmatprep.subr.mxu0 0.0
        %1517 = vmatpush1.msra.mxu0 0.0
        %1518 = vmatprep.subr.mxu0 0.0
        %1519 = vmatpush1.msra.mxu0 0.0
        %1520 = vmatprep.subr.mxu0 0.0
        %1521 = vmatpush1.msra.mxu0 0.0
        %1522 = vmatprep.subr.mxu0 0.0
        %1523 = vmatpush1.msra.mxu0 0.0
        %1524 = vmatprep.subr.mxu0 0.0
        %1525 = vmatpush1.msra.mxu0 0.0
        %1526 = vmatprep.subr.mxu0 %v1498
        %1527 = vmatpush1.msra.mxu0 %v1495
        %1528 = vmatprep.subr.mxu0 %v1463
        %1529 = vmatpush1.msra.mxu0 %v1462
        %1530 = vmatprep.subr.mxu0 %v1461
        %1531 = vmatpush1.msra.mxu0 %v1460
        %1532 = vmatprep.subr.mxu0 0.0
        %1533 = vmatpush2.msra.mxu0 0.0
        %1534 = vmatprep.subr.mxu0 0.0
        %1535 = vmatpush2.msra.mxu0 0.0
        %1536 = vmatprep.subr.mxu0 0.0
        %1537 = vmatpush2.msra.mxu0 0.0
        %1538 = vmatprep.subr.mxu0 0.0
        %1539 = vmatpush2.msra.mxu0 0.0
        %1540 = vmatprep.subr.mxu0 0.0
        %1541 = vmatpush2.msra.mxu0 0.0
        %1542 = vmatprep.subr.mxu0 0.0
        %1543 = vmatpush2.msra.mxu0 0.0
        %1544 = vmatprep.subr.mxu0 0.0
        %1545 = vmatpush2.msra.mxu0 0.0
        %1546 = vmatprep.subr.mxu0 0.0
        %1547 = vmatpush2.msra.mxu0 0.0
        %1548 = vmatprep.subr.mxu0 0.0
        %1549 = vmatpush2.msra.mxu0 0.0
        %1550 = vmatprep.subr.mxu0 0.0
        %1551 = vmatpush2.msra.mxu0 0.0
        %1552 = vmatprep.subr.mxu0 0.0
        %1553 = vmatpush2.msra.mxu0 0.0
        %1554 = vmatprep.subr.mxu0 0.0
        %1555 = vmatpush2.msra.mxu0 0.0
        %1556 = vmatprep.subr.mxu0 0.0
        %1557 = vmatpush2.msra.mxu0 0.0
        %1558 = vmatprep.subr.mxu0 0.0
        %1559 = vmatpush2.msra.mxu0 0.0
        %1560 = vmatprep.subr.mxu0 0.0
        %1561 = vmatpush2.msra.mxu0 0.0
        %1562 = vmatprep.subr.mxu0 0.0
        %1563 = vmatpush2.msra.mxu0 0.0
        %1564 = vmatprep.mubr.f32.mxu0 0.0
        %1565 = vmatmul.mubr.f32.gmra.mxu0 %v1486
        %v1566 = vpop.f32.mrf.mxu0
        %v1567 = vadd.f32 %v1473, %v1566
        %v1568 = vpop.f32.mrf.mxu0
        %v1569 = vadd.f32 %v1473, %v1568
        %1570 = vmatprep.mubr.f32.mxu0 0.0
        %1571 = vmatmul.mubr.f32.gmra.mxu0 %v1489
        %v1572 = vpop.f32.mrf.mxu0
        %v1573 = vadd.f32 %v1478, %v1572
        %v1574 = vpop.f32.mrf.mxu0
        %v1575 = vadd.f32 %v1478, %v1574
        %1576 = vmatprep.mubr.f32.mxu0 0.0
        %1577 = vmatmul.mubr.f32.gmra.mxu0 %v1492
        %v1578 = vpop.f32.mrf.mxu0
        %v1579 = vadd.f32 %v1483, %v1578
        %v1580 = vpop.f32.mrf.mxu0
        %v1581 = vadd.f32 %v1483, %v1580
        %1582 = vdwg.mxu0
        %v1583 = vmul.f32 %v1567, 0.2
        %v1584 = vmul.f32 %v1569, 0.2
        %v1585 = vmul.f32 %v1573, 0.2
        %v1586 = vmul.f32 %v1575, 0.2
        %v1587 = vmul.f32 %v1579, 0.2
        %v1588 = vmul.f32 %v1581, 0.2
        %v1589 = vmax.f32 %v1567, %v1583
        %v1590 = vmax.f32 %v1569, %v1584
        %v1591 = vmax.f32 %v1573, %v1585
        %v1592 = vmax.f32 %v1575, %v1586
        %v1593 = vmax.f32 %v1579, %v1587
        %v1594 = vmax.f32 %v1581, %v1588
        %v1595 = vld [vmem:[%s751] sm:$0xff]
        %v1596 = vadd.f32 %v925, %v1311
        %v1597 = vadd.f32 %v926, %v1312
        %v1598 = vadd.f32 %v927, %v1313
        %v1599 = vadd.f32 %v928, %v1314
        %v1600 = vadd.f32 %v929, %v1315
        %v1601 = vadd.f32 %v930, %v1316
        %s1602 = scalar_lea.vmem %s751, 8
        %v1603 = vld [vmem:[%s1602] sm:$0xff]
        %v1604 = vadd.f32 %v1052, %v1450
        %v1605 = vadd.f32 %v1053, %v1451
        %v1606 = vadd.f32 %v1054, %v1452
        %v1607 = vadd.f32 %v1055, %v1453
        %v1608 = vadd.f32 %v1056, %v1454
        %v1609 = vadd.f32 %v1057, %v1455
        %v1611 = vsel %vm1206, %v1603, 0
        %v1614 = vsel %vm831, %v1608, 0
        %v1617 = vsel %vm831, %v1609, 0
        %1619 = vmatprep.subr.mxu0 0.0
        %1620 = vmatpush1.msra.mxu0 0.0
        %1621 = vmatprep.subr.mxu0 0.0
        %1622 = vmatpush1.msra.mxu0 0.0
        %1623 = vmatprep.subr.mxu0 0.0
        %1624 = vmatpush1.msra.mxu0 0.0
        %1625 = vmatprep.subr.mxu0 0.0
        %1626 = vmatpush1.msra.mxu0 0.0
        %1627 = vmatprep.subr.mxu0 0.0
        %1628 = vmatpush1.msra.mxu0 0.0
        %1629 = vmatprep.subr.mxu0 0.0
        %1630 = vmatpush1.msra.mxu0 0.0
        %1631 = vmatprep.subr.mxu0 0.0
        %1632 = vmatpush1.msra.mxu0 0.0
        %1633 = vmatprep.subr.mxu0 0.0
        %1634 = vmatpush1.msra.mxu0 0.0
        %1635 = vmatprep.subr.mxu0 0.0
        %1636 = vmatpush1.msra.mxu0 0.0
        %1637 = vmatprep.subr.mxu0 0.0
        %1638 = vmatpush1.msra.mxu0 0.0
        %1639 = vmatprep.subr.mxu0 0.0
        %1640 = vmatpush1.msra.mxu0 0.0
        %1641 = vmatprep.subr.mxu0 0.0
        %1642 = vmatpush1.msra.mxu0 0.0
        %1643 = vmatprep.subr.mxu0 0.0
        %1644 = vmatpush1.msra.mxu0 0.0
        %1645 = vmatprep.subr.mxu0 %v1617
        %1646 = vmatpush1.msra.mxu0 %v1614
        %1647 = vmatprep.subr.mxu0 %v1607
        %1648 = vmatpush1.msra.mxu0 %v1606
        %1649 = vmatprep.subr.mxu0 %v1605
        %1650 = vmatpush1.msra.mxu0 %v1604
        %1651 = vmatprep.subr.mxu0 0.0
        %1652 = vmatpush2.msra.mxu0 0.0
        %1653 = vmatprep.subr.mxu0 0.0
        %1654 = vmatpush2.msra.mxu0 0.0
        %1655 = vmatprep.subr.mxu0 0.0
        %1656 = vmatpush2.msra.mxu0 0.0
        %1657 = vmatprep.subr.mxu0 0.0
        %1658 = vmatpush2.msra.mxu0 0.0
        %1659 = vmatprep.subr.mxu0 0.0
        %1660 = vmatpush2.msra.mxu0 0.0
        %1661 = vmatprep.subr.mxu0 0.0
        %1662 = vmatpush2.msra.mxu0 0.0
        %1663 = vmatprep.subr.mxu0 0.0
        %1664 = vmatpush2.msra.mxu0 0.0
        %1665 = vmatprep.subr.mxu0 0.0
        %1666 = vmatpush2.msra.mxu0 0.0
        %1667 = vmatprep.subr.mxu0 0.0
        %1668 = vmatpush2.msra.mxu0 0.0
        %1669 = vmatprep.subr.mxu0 0.0
        %1670 = vmatpush2.msra.mxu0 0.0
        %1671 = vmatprep.subr.mxu0 0.0
        %1672 = vmatpush2.msra.mxu0 0.0
        %1673 = vmatprep.subr.mxu0 0.0
        %1674 = vmatpush2.msra.mxu0 0.0
        %1675 = vmatprep.subr.mxu0 0.0
        %1676 = vmatpush2.msra.mxu0 0.0
        %1677 = vmatprep.subr.mxu0 0.0
        %1678 = vmatpush2.msra.mxu0 0.0
        %1679 = vmatprep.subr.mxu0 0.0
        %1680 = vmatpush2.msra.mxu0 0.0
        %1681 = vmatprep.subr.mxu0 0.0
        %1682 = vmatpush2.msra.mxu0 0.0
        %1683 = vmatprep.mubr.f32.mxu0 0.0
        %1684 = vmatmul.mubr.f32.gmra.mxu0 %v1611
        %v1685 = vpop.f32.mrf.mxu0
        %v1686 = vadd.f32 0.0, %v1685
        %v1687 = vpop.f32.mrf.mxu0
        %v1688 = vadd.f32 0.0, %v1687
        %1689 = vdwg.mxu0
        %v1691 = vsel %vm1206, %v1595, 0
        %v1694 = vsel %vm831, %v1600, 0
        %v1697 = vsel %vm831, %v1601, 0
        %1699 = vmatprep.subr.mxu0 0.0
        %1700 = vmatpush1.msra.mxu0 0.0
        %1701 = vmatprep.subr.mxu0 0.0
        %1702 = vmatpush1.msra.mxu0 0.0
        %1703 = vmatprep.subr.mxu0 0.0
        %1704 = vmatpush1.msra.mxu0 0.0
        %1705 = vmatprep.subr.mxu0 0.0
        %1706 = vmatpush1.msra.mxu0 0.0
        %1707 = vmatprep.subr.mxu0 0.0
        %1708 = vmatpush1.msra.mxu0 0.0
        %1709 = vmatprep.subr.mxu0 0.0
        %1710 = vmatpush1.msra.mxu0 0.0
        %1711 = vmatprep.subr.mxu0 0.0
        %1712 = vmatpush1.msra.mxu0 0.0
        %1713 = vmatprep.subr.mxu0 0.0
        %1714 = vmatpush1.msra.mxu0 0.0
        %1715 = vmatprep.subr.mxu0 0.0
        %1716 = vmatpush1.msra.mxu0 0.0
        %1717 = vmatprep.subr.mxu0 0.0
        %1718 = vmatpush1.msra.mxu0 0.0
        %1719 = vmatprep.subr.mxu0 0.0
        %1720 = vmatpush1.msra.mxu0 0.0
        %1721 = vmatprep.subr.mxu0 0.0
        %1722 = vmatpush1.msra.mxu0 0.0
        %1723 = vmatprep.subr.mxu0 0.0
        %1724 = vmatpush1.msra.mxu0 0.0
        %1725 = vmatprep.subr.mxu0 %v1697
        %1726 = vmatpush1.msra.mxu0 %v1694
        %1727 = vmatprep.subr.mxu0 %v1599
        %1728 = vmatpush1.msra.mxu0 %v1598
        %1729 = vmatprep.subr.mxu0 %v1597
        %1730 = vmatpush1.msra.mxu0 %v1596
        %1731 = vmatprep.subr.mxu0 0.0
        %1732 = vmatpush2.msra.mxu0 0.0
        %1733 = vmatprep.subr.mxu0 0.0
        %1734 = vmatpush2.msra.mxu0 0.0
        %1735 = vmatprep.subr.mxu0 0.0
        %1736 = vmatpush2.msra.mxu0 0.0
        %1737 = vmatprep.subr.mxu0 0.0
        %1738 = vmatpush2.msra.mxu0 0.0
        %1739 = vmatprep.subr.mxu0 0.0
        %1740 = vmatpush2.msra.mxu0 0.0
        %1741 = vmatprep.subr.mxu0 0.0
        %1742 = vmatpush2.msra.mxu0 0.0
        %1743 = vmatprep.subr.mxu0 0.0
        %1744 = vmatpush2.msra.mxu0 0.0
        %1745 = vmatprep.subr.mxu0 0.0
        %1746 = vmatpush2.msra.mxu0 0.0
        %1747 = vmatprep.subr.mxu0 0.0
        %1748 = vmatpush2.msra.mxu0 0.0
        %1749 = vmatprep.subr.mxu0 0.0
        %1750 = vmatpush2.msra.mxu0 0.0
        %1751 = vmatprep.subr.mxu0 0.0
        %1752 = vmatpush2.msra.mxu0 0.0
        %1753 = vmatprep.subr.mxu0 0.0
        %1754 = vmatpush2.msra.mxu0 0.0
        %1755 = vmatprep.subr.mxu0 0.0
        %1756 = vmatpush2.msra.mxu0 0.0
        %1757 = vmatprep.subr.mxu0 0.0
        %1758 = vmatpush2.msra.mxu0 0.0
        %1759 = vmatprep.subr.mxu0 0.0
        %1760 = vmatpush2.msra.mxu0 0.0
        %1761 = vmatprep.subr.mxu0 0.0
        %1762 = vmatpush2.msra.mxu0 0.0
        %1763 = vmatprep.mubr.f32.mxu0 0.0
        %1764 = vmatmul.mubr.f32.gmra.mxu0 %v1691
        %v1765 = vpop.f32.mrf.mxu0
        %v1766 = vadd.f32 %v1686, %v1765
        %v1767 = vpop.f32.mrf.mxu0
        %v1768 = vadd.f32 %v1688, %v1767
        %1769 = vdwg.mxu0
        %s1770 = scalar_lea.vmem %s751, 16
        %v1771 = vld [vmem:[%s1770] sm:$0xff]
        %v1772 = vadd.f32 %v1179, %v1589
        %v1773 = vadd.f32 %v1180, %v1590
        %v1774 = vadd.f32 %v1181, %v1591
        %v1775 = vadd.f32 %v1182, %v1592
        %v1776 = vadd.f32 %v1183, %v1593
        %v1777 = vadd.f32 %v1184, %v1594
        %v1779 = vsel %vm1206, %v1771, 0
        %v1782 = vsel %vm831, %v1776, 0
        %v1785 = vsel %vm831, %v1777, 0
        %1787 = vmatprep.subr.mxu0 0.0
        %1788 = vmatpush1.msra.mxu0 0.0
        %1789 = vmatprep.subr.mxu0 0.0
        %1790 = vmatpush1.msra.mxu0 0.0
        %1791 = vmatprep.subr.mxu0 0.0
        %1792 = vmatpush1.msra.mxu0 0.0
        %1793 = vmatprep.subr.mxu0 0.0
        %1794 = vmatpush1.msra.mxu0 0.0
        %1795 = vmatprep.subr.mxu0 0.0
        %1796 = vmatpush1.msra.mxu0 0.0
        %1797 = vmatprep.subr.mxu0 0.0
        %1798 = vmatpush1.msra.mxu0 0.0
        %1799 = vmatprep.subr.mxu0 0.0
        %1800 = vmatpush1.msra.mxu0 0.0
        %1801 = vmatprep.subr.mxu0 0.0
        %1802 = vmatpush1.msra.mxu0 0.0
        %1803 = vmatprep.subr.mxu0 0.0
        %1804 = vmatpush1.msra.mxu0 0.0
        %1805 = vmatprep.subr.mxu0 0.0
        %1806 = vmatpush1.msra.mxu0 0.0
        %1807 = vmatprep.subr.mxu0 0.0
        %1808 = vmatpush1.msra.mxu0 0.0
        %1809 = vmatprep.subr.mxu0 0.0
        %1810 = vmatpush1.msra.mxu0 0.0
        %1811 = vmatprep.subr.mxu0 0.0
        %1812 = vmatpush1.msra.mxu0 0.0
        %1813 = vmatprep.subr.mxu0 %v1785
        %1814 = vmatpush1.msra.mxu0 %v1782
        %1815 = vmatprep.subr.mxu0 %v1775
        %1816 = vmatpush1.msra.mxu0 %v1774
        %1817 = vmatprep.subr.mxu0 %v1773
        %1818 = vmatpush1.msra.mxu0 %v1772
        %1819 = vmatprep.subr.mxu0 0.0
        %1820 = vmatpush2.msra.mxu0 0.0
        %1821 = vmatprep.subr.mxu0 0.0
        %1822 = vmatpush2.msra.mxu0 0.0
        %1823 = vmatprep.subr.mxu0 0.0
        %1824 = vmatpush2.msra.mxu0 0.0
        %1825 = vmatprep.subr.mxu0 0.0
        %1826 = vmatpush2.msra.mxu0 0.0
        %1827 = vmatprep.subr.mxu0 0.0
        %1828 = vmatpush2.msra.mxu0 0.0
        %1829 = vmatprep.subr.mxu0 0.0
        %1830 = vmatpush2.msra.mxu0 0.0
        %1831 = vmatprep.subr.mxu0 0.0
        %1832 = vmatpush2.msra.mxu0 0.0
        %1833 = vmatprep.subr.mxu0 0.0
        %1834 = vmatpush2.msra.mxu0 0.0
        %1835 = vmatprep.subr.mxu0 0.0
        %1836 = vmatpush2.msra.mxu0 0.0
        %1837 = vmatprep.subr.mxu0 0.0
        %1838 = vmatpush2.msra.mxu0 0.0
        %1839 = vmatprep.subr.mxu0 0.0
        %1840 = vmatpush2.msra.mxu0 0.0
        %1841 = vmatprep.subr.mxu0 0.0
        %1842 = vmatpush2.msra.mxu0 0.0
        %1843 = vmatprep.subr.mxu0 0.0
        %1844 = vmatpush2.msra.mxu0 0.0
        %1845 = vmatprep.subr.mxu0 0.0
        %1846 = vmatpush2.msra.mxu0 0.0
        %1847 = vmatprep.subr.mxu0 0.0
        %1848 = vmatpush2.msra.mxu0 0.0
        %1849 = vmatprep.subr.mxu0 0.0
        %1850 = vmatpush2.msra.mxu0 0.0
        %1851 = vmatprep.mubr.f32.mxu0 0.0
        %1852 = vmatmul.mubr.f32.gmra.mxu0 %v1779
        %v1853 = vpop.f32.mrf.mxu0
        %v1854 = vadd.f32 0.0, %v1853
        %v1855 = vpop.f32.mrf.mxu0
        %v1856 = vadd.f32 0.0, %v1855
        %1857 = vdwg.mxu0
        %v1858 = vadd.f32 %v1766, %v1854
        %v1859 = vadd.f32 %v1768, %v1856
        %v1860 = vld [vmem:[%s755] sm:$0xff]
        %1862 = vset.pattern.permute.xlu0 0
        %1863 = vperm.xlu0 %1862, %v1860
        %v1864 = vpop.permute.xlu0 %1863
        %v1866 = vadd.f32 %v1858, %v1864
        %v1867 = vadd.f32 %v1859, %v1864
        %v1868 = vmul.f32 %v1866, 0.2
        %v1869 = vmul.f32 %v1867, 0.2
        %v1870 = vmax.f32 %v1866, %v1868
        %v1871 = vmax.f32 %v1867, %v1869
        %v1872 = vld [vmem:[%s760] sm:$0xff]
        %v1873 = vld [vmem:[%s760 + $0x8] sm:$0xff]
        %v1874 = vld [vmem:[%s760 + $0x10] sm:$0xf]
        %v1875 = vld [vmem:[%s765] sm:$0xff]
        %v1876 = vld [vmem:[%s765 + $0x8] sm:$0xff]
        %v1877 = vld [vmem:[%s765 + $0x10] sm:$0xf]
        %1879 = vset.pattern.permute.xlu0 0
        %1880 = vperm.xlu0 %1879, %v1875
        %v1881 = vpop.permute.xlu0 %1880
        %1884 = vset.pattern.permute.xlu0 0
        %1885 = vperm.xlu0 %1884, %v1876
        %v1886 = vpop.permute.xlu0 %1885
        %1889 = vset.pattern.permute.xlu0 0
        %1890 = vperm.xlu0 %1889, %v1877
        %v1891 = vpop.permute.xlu0 %1890
        %vm1893 = vcmask 64512
        %v1895 = vsel %vm1893, %v1872, 0
        %v1898 = vsel %vm1893, %v1873, 0
        %v1901 = vsel %vm1893, %v1874, 0
        %1903 = vmatprep.subr.mxu0 0.0
        %1904 = vmatpush1.msra.mxu0 0.0
        %1905 = vmatprep.subr.mxu0 0.0
        %1906 = vmatpush1.msra.mxu0 0.0
        %1907 = vmatprep.subr.mxu0 0.0
        %1908 = vmatpush1.msra.mxu0 0.0
        %1909 = vmatprep.subr.mxu0 0.0
        %1910 = vmatpush1.msra.mxu0 0.0
        %1911 = vmatprep.subr.mxu0 0.0
        %1912 = vmatpush1.msra.mxu0 0.0
        %1913 = vmatprep.subr.mxu0 0.0
        %1914 = vmatpush1.msra.mxu0 0.0
        %1915 = vmatprep.subr.mxu0 0.0
        %1916 = vmatpush1.msra.mxu0 0.0
        %1917 = vmatprep.subr.mxu0 0.0
        %1918 = vmatpush1.msra.mxu0 0.0
        %1919 = vmatprep.subr.mxu0 0.0
        %1920 = vmatpush1.msra.mxu0 0.0
        %1921 = vmatprep.subr.mxu0 0.0
        %1922 = vmatpush1.msra.mxu0 0.0
        %1923 = vmatprep.subr.mxu0 0.0
        %1924 = vmatpush1.msra.mxu0 0.0
        %1925 = vmatprep.subr.mxu0 0.0
        %1926 = vmatpush1.msra.mxu0 0.0
        %1927 = vmatprep.subr.mxu0 0.0
        %1928 = vmatpush1.msra.mxu0 0.0
        %1929 = vmatprep.subr.mxu0 0.0
        %1930 = vmatpush1.msra.mxu0 0.0
        %1931 = vmatprep.subr.mxu0 0.0
        %1932 = vmatpush1.msra.mxu0 0.0
        %1933 = vmatprep.subr.mxu0 %v1871
        %1934 = vmatpush1.msra.mxu0 %v1870
        %1935 = vmatprep.subr.mxu0 0.0
        %1936 = vmatpush2.msra.mxu0 0.0
        %1937 = vmatprep.subr.mxu0 0.0
        %1938 = vmatpush2.msra.mxu0 0.0
        %1939 = vmatprep.subr.mxu0 0.0
        %1940 = vmatpush2.msra.mxu0 0.0
        %1941 = vmatprep.subr.mxu0 0.0
        %1942 = vmatpush2.msra.mxu0 0.0
        %1943 = vmatprep.subr.mxu0 0.0
        %1944 = vmatpush2.msra.mxu0 0.0
        %1945 = vmatprep.subr.mxu0 0.0
        %1946 = vmatpush2.msra.mxu0 0.0
        %1947 = vmatprep.subr.mxu0 0.0
        %1948 = vmatpush2.msra.mxu0 0.0
        %1949 = vmatprep.subr.mxu0 0.0
        %1950 = vmatpush2.msra.mxu0 0.0
        %1951 = vmatprep.subr.mxu0 0.0
        %1952 = vmatpush2.msra.mxu0 0.0
        %1953 = vmatprep.subr.mxu0 0.0
        %1954 = vmatpush2.msra.mxu0 0.0
        %1955 = vmatprep.subr.mxu0 0.0
        %1956 = vmatpush2.msra.mxu0 0.0
        %1957 = vmatprep.subr.mxu0 0.0
        %1958 = vmatpush2.msra.mxu0 0.0
        %1959 = vmatprep.subr.mxu0 0.0
        %1960 = vmatpush2.msra.mxu0 0.0
        %1961 = vmatprep.subr.mxu0 0.0
        %1962 = vmatpush2.msra.mxu0 0.0
        %1963 = vmatprep.subr.mxu0 0.0
        %1964 = vmatpush2.msra.mxu0 0.0
        %1965 = vmatprep.subr.mxu0 0.0
        %1966 = vmatpush2.msra.mxu0 0.0
        %1967 = vmatprep.mubr.f32.mxu0 0.0
        %1968 = vmatmul.mubr.f32.gmra.mxu0 %v1895
        %v1969 = vpop.f32.mrf.mxu0
        %v1970 = vadd.f32 %v1881, %v1969
        %v1971 = vpop.f32.mrf.mxu0
        %v1972 = vadd.f32 %v1881, %v1971
        %1973 = vmatprep.mubr.f32.mxu0 0.0
        %1974 = vmatmul.mubr.f32.gmra.mxu0 %v1898
        %v1975 = vpop.f32.mrf.mxu0
        %v1976 = vadd.f32 %v1886, %v1975
        %v1977 = vpop.f32.mrf.mxu0
        %v1978 = vadd.f32 %v1886, %v1977
        %1979 = vmatprep.mubr.f32.mxu0 0.0
        %1980 = vmatmul.mubr.f32.gmra.mxu0 %v1901
        %v1981 = vpop.f32.mrf.mxu0
        %v1982 = vadd.f32 %v1891, %v1981
        %v1983 = vpop.f32.mrf.mxu0
        %v1984 = vadd.f32 %v1891, %v1983
        %1985 = vdwg.mxu0
        %v1986 = vmul.f32 %v1970, 0.2
        %v1987 = vmul.f32 %v1972, 0.2
        %v1988 = vmul.f32 %v1976, 0.2
        %v1989 = vmul.f32 %v1978, 0.2
        %v1990 = vmul.f32 %v1982, 0.2
        %v1991 = vmul.f32 %v1984, 0.2
        %v1992 = vmax.f32 %v1970, %v1986
        %v1993 = vmax.f32 %v1972, %v1987
        %v1994 = vmax.f32 %v1976, %v1988
        %v1995 = vmax.f32 %v1978, %v1989
        %v1996 = vmax.f32 %v1982, %v1990
        %v1997 = vmax.f32 %v1984, %v1991
        %s1998 = scalar_lea.vmem %s760, 24
        %v1999 = vld [vmem:[%s1998] sm:$0xff]
        %v2000 = vld [vmem:[%s1998 + $0x8] sm:$0xff]
        %v2001 = vld [vmem:[%s1998 + $0x10] sm:$0xf]
        %s2002 = scalar_lea.vmem %s765, 24
        %v2003 = vld [vmem:[%s2002] sm:$0xff]
        %v2004 = vld [vmem:[%s2002 + $0x8] sm:$0xff]
        %v2005 = vld [vmem:[%s2002 + $0x10] sm:$0xf]
        %2007 = vset.pattern.permute.xlu0 0
        %2008 = vperm.xlu0 %2007, %v2003
        %v2009 = vpop.permute.xlu0 %2008
        %2012 = vset.pattern.permute.xlu0 0
        %2013 = vperm.xlu0 %2012, %v2004
        %v2014 = vpop.permute.xlu0 %2013
        %2017 = vset.pattern.permute.xlu0 0
        %2018 = vperm.xlu0 %2017, %v2005
        %v2019 = vpop.permute.xlu0 %2018
        %v2022 = vsel %vm1893, %v1999, 0
        %v2025 = vsel %vm1893, %v2000, 0
        %v2028 = vsel %vm1893, %v2001, 0
        %2030 = vmatprep.subr.mxu0 0.0
        %2031 = vmatpush1.msra.mxu0 0.0
        %2032 = vmatprep.subr.mxu0 0.0
        %2033 = vmatpush1.msra.mxu0 0.0
        %2034 = vmatprep.subr.mxu0 0.0
        %2035 = vmatpush1.msra.mxu0 0.0
        %2036 = vmatprep.subr.mxu0 0.0
        %2037 = vmatpush1.msra.mxu0 0.0
        %2038 = vmatprep.subr.mxu0 0.0
        %2039 = vmatpush1.msra.mxu0 0.0
        %2040 = vmatprep.subr.mxu0 0.0
        %2041 = vmatpush1.msra.mxu0 0.0
        %2042 = vmatprep.subr.mxu0 0.0
        %2043 = vmatpush1.msra.mxu0 0.0
        %2044 = vmatprep.subr.mxu0 0.0
        %2045 = vmatpush1.msra.mxu0 0.0
        %2046 = vmatprep.subr.mxu0 0.0
        %2047 = vmatpush1.msra.mxu0 0.0
        %2048 = vmatprep.subr.mxu0 0.0
        %2049 = vmatpush1.msra.mxu0 0.0
        %2050 = vmatprep.subr.mxu0 0.0
        %2051 = vmatpush1.msra.mxu0 0.0
        %2052 = vmatprep.subr.mxu0 0.0
        %2053 = vmatpush1.msra.mxu0 0.0
        %2054 = vmatprep.subr.mxu0 0.0
        %2055 = vmatpush1.msra.mxu0 0.0
        %2056 = vmatprep.subr.mxu0 0.0
        %2057 = vmatpush1.msra.mxu0 0.0
        %2058 = vmatprep.subr.mxu0 0.0
        %2059 = vmatpush1.msra.mxu0 0.0
        %2060 = vmatprep.subr.mxu0 %v1871
        %2061 = vmatpush1.msra.mxu0 %v1870
        %2062 = vmatprep.subr.mxu0 0.0
        %2063 = vmatpush2.msra.mxu0 0.0
        %2064 = vmatprep.subr.mxu0 0.0
        %2065 = vmatpush2.msra.mxu0 0.0
        %2066 = vmatprep.subr.mxu0 0.0
        %2067 = vmatpush2.msra.mxu0 0.0
        %2068 = vmatprep.subr.mxu0 0.0
        %2069 = vmatpush2.msra.mxu0 0.0
        %2070 = vmatprep.subr.mxu0 0.0
        %2071 = vmatpush2.msra.mxu0 0.0
        %2072 = vmatprep.subr.mxu0 0.0
        %2073 = vmatpush2.msra.mxu0 0.0
        %2074 = vmatprep.subr.mxu0 0.0
        %2075 = vmatpush2.msra.mxu0 0.0
        %2076 = vmatprep.subr.mxu0 0.0
        %2077 = vmatpush2.msra.mxu0 0.0
        %2078 = vmatprep.subr.mxu0 0.0
        %2079 = vmatpush2.msra.mxu0 0.0
        %2080 = vmatprep.subr.mxu0 0.0
        %2081 = vmatpush2.msra.mxu0 0.0
        %2082 = vmatprep.subr.mxu0 0.0
        %2083 = vmatpush2.msra.mxu0 0.0
        %2084 = vmatprep.subr.mxu0 0.0
        %2085 = vmatpush2.msra.mxu0 0.0
        %2086 = vmatprep.subr.mxu0 0.0
        %2087 = vmatpush2.msra.mxu0 0.0
        %2088 = vmatprep.subr.mxu0 0.0
        %2089 = vmatpush2.msra.mxu0 0.0
        %2090 = vmatprep.subr.mxu0 0.0
        %2091 = vmatpush2.msra.mxu0 0.0
        %2092 = vmatprep.subr.mxu0 0.0
        %2093 = vmatpush2.msra.mxu0 0.0
        %2094 = vmatprep.mubr.f32.mxu0 0.0
        %2095 = vmatmul.mubr.f32.gmra.mxu0 %v2022
        %v2096 = vpop.f32.mrf.mxu0
        %v2097 = vadd.f32 %v2009, %v2096
        %v2098 = vpop.f32.mrf.mxu0
        %v2099 = vadd.f32 %v2009, %v2098
        %2100 = vmatprep.mubr.f32.mxu0 0.0
        %2101 = vmatmul.mubr.f32.gmra.mxu0 %v2025
        %v2102 = vpop.f32.mrf.mxu0
        %v2103 = vadd.f32 %v2014, %v2102
        %v2104 = vpop.f32.mrf.mxu0
        %v2105 = vadd.f32 %v2014, %v2104
        %2106 = vmatprep.mubr.f32.mxu0 0.0
        %2107 = vmatmul.mubr.f32.gmra.mxu0 %v2028
        %v2108 = vpop.f32.mrf.mxu0
        %v2109 = vadd.f32 %v2019, %v2108
        %v2110 = vpop.f32.mrf.mxu0
        %v2111 = vadd.f32 %v2019, %v2110
        %2112 = vdwg.mxu0
        %v2113 = vmul.f32 %v2097, 0.2
        %v2114 = vmul.f32 %v2099, 0.2
        %v2115 = vmul.f32 %v2103, 0.2
        %v2116 = vmul.f32 %v2105, 0.2
        %v2117 = vmul.f32 %v2109, 0.2
        %v2118 = vmul.f32 %v2111, 0.2
        %v2119 = vmax.f32 %v2097, %v2113
        %v2120 = vmax.f32 %v2099, %v2114
        %v2121 = vmax.f32 %v2103, %v2115
        %v2122 = vmax.f32 %v2105, %v2116
        %v2123 = vmax.f32 %v2109, %v2117
        %v2124 = vmax.f32 %v2111, %v2118
        %s2125 = scalar_lea.vmem %s760, 48
        %v2126 = vld [vmem:[%s2125] sm:$0xff]
        %v2127 = vld [vmem:[%s2125 + $0x8] sm:$0xff]
        %v2128 = vld [vmem:[%s2125 + $0x10] sm:$0xf]
        %s2129 = scalar_lea.vmem %s765, 48
        %v2130 = vld [vmem:[%s2129] sm:$0xff]
        %v2131 = vld [vmem:[%s2129 + $0x8] sm:$0xff]
        %v2132 = vld [vmem:[%s2129 + $0x10] sm:$0xf]
        %2134 = vset.pattern.permute.xlu0 0
        %2135 = vperm.xlu0 %2134, %v2130
        %v2136 = vpop.permute.xlu0 %2135
        %2139 = vset.pattern.permute.xlu0 0
        %2140 = vperm.xlu0 %2139, %v2131
        %v2141 = vpop.permute.xlu0 %2140
        %2144 = vset.pattern.permute.xlu0 0
        %2145 = vperm.xlu0 %2144, %v2132
        %v2146 = vpop.permute.xlu0 %2145
        %v2149 = vsel %vm1893, %v2126, 0
        %v2152 = vsel %vm1893, %v2127, 0
        %v2155 = vsel %vm1893, %v2128, 0
        %2157 = vmatprep.subr.mxu0 0.0
        %2158 = vmatpush1.msra.mxu0 0.0
        %2159 = vmatprep.subr.mxu0 0.0
        %2160 = vmatpush1.msra.mxu0 0.0
        %2161 = vmatprep.subr.mxu0 0.0
        %2162 = vmatpush1.msra.mxu0 0.0
        %2163 = vmatprep.subr.mxu0 0.0
        %2164 = vmatpush1.msra.mxu0 0.0
        %2165 = vmatprep.subr.mxu0 0.0
        %2166 = vmatpush1.msra.mxu0 0.0
        %2167 = vmatprep.subr.mxu0 0.0
        %2168 = vmatpush1.msra.mxu0 0.0
        %2169 = vmatprep.subr.mxu0 0.0
        %2170 = vmatpush1.msra.mxu0 0.0
        %2171 = vmatprep.subr.mxu0 0.0
        %2172 = vmatpush1.msra.mxu0 0.0
        %2173 = vmatprep.subr.mxu0 0.0
        %2174 = vmatpush1.msra.mxu0 0.0
        %2175 = vmatprep.subr.mxu0 0.0
        %2176 = vmatpush1.msra.mxu0 0.0
        %2177 = vmatprep.subr.mxu0 0.0
        %2178 = vmatpush1.msra.mxu0 0.0
        %2179 = vmatprep.subr.mxu0 0.0
        %2180 = vmatpush1.msra.mxu0 0.0
        %2181 = vmatprep.subr.mxu0 0.0
        %2182 = vmatpush1.msra.mxu0 0.0
        %2183 = vmatprep.subr.mxu0 0.0
        %2184 = vmatpush1.msra.mxu0 0.0
        %2185 = vmatprep.subr.mxu0 0.0
        %2186 = vmatpush1.msra.mxu0 0.0
        %2187 = vmatprep.subr.mxu0 %v1871
        %2188 = vmatpush1.msra.mxu0 %v1870
        %2189 = vmatprep.subr.mxu0 0.0
        %2190 = vmatpush2.msra.mxu0 0.0
        %2191 = vmatprep.subr.mxu0 0.0
        %2192 = vmatpush2.msra.mxu0 0.0
        %2193 = vmatprep.subr.mxu0 0.0
        %2194 = vmatpush2.msra.mxu0 0.0
        %2195 = vmatprep.subr.mxu0 0.0
        %2196 = vmatpush2.msra.mxu0 0.0
        %2197 = vmatprep.subr.mxu0 0.0
        %2198 = vmatpush2.msra.mxu0 0.0
        %2199 = vmatprep.subr.mxu0 0.0
        %2200 = vmatpush2.msra.mxu0 0.0
        %2201 = vmatprep.subr.mxu0 0.0
        %2202 = vmatpush2.msra.mxu0 0.0
        %2203 = vmatprep.subr.mxu0 0.0
        %2204 = vmatpush2.msra.mxu0 0.0
        %2205 = vmatprep.subr.mxu0 0.0
        %2206 = vmatpush2.msra.mxu0 0.0
        %2207 = vmatprep.subr.mxu0 0.0
        %2208 = vmatpush2.msra.mxu0 0.0
        %2209 = vmatprep.subr.mxu0 0.0
        %2210 = vmatpush2.msra.mxu0 0.0
        %2211 = vmatprep.subr.mxu0 0.0
        %2212 = vmatpush2.msra.mxu0 0.0
        %2213 = vmatprep.subr.mxu0 0.0
        %2214 = vmatpush2.msra.mxu0 0.0
        %2215 = vmatprep.subr.mxu0 0.0
        %2216 = vmatpush2.msra.mxu0 0.0
        %2217 = vmatprep.subr.mxu0 0.0
        %2218 = vmatpush2.msra.mxu0 0.0
        %2219 = vmatprep.subr.mxu0 0.0
        %2220 = vmatpush2.msra.mxu0 0.0
        %2221 = vmatprep.mubr.f32.mxu0 0.0
        %2222 = vmatmul.mubr.f32.gmra.mxu0 %v2149
        %v2223 = vpop.f32.mrf.mxu0
        %v2224 = vadd.f32 %v2136, %v2223
        %v2225 = vpop.f32.mrf.mxu0
        %v2226 = vadd.f32 %v2136, %v2225
        %2227 = vmatprep.mubr.f32.mxu0 0.0
        %2228 = vmatmul.mubr.f32.gmra.mxu0 %v2152
        %v2229 = vpop.f32.mrf.mxu0
        %v2230 = vadd.f32 %v2141, %v2229
        %v2231 = vpop.f32.mrf.mxu0
        %v2232 = vadd.f32 %v2141, %v2231
        %2233 = vmatprep.mubr.f32.mxu0 0.0
        %2234 = vmatmul.mubr.f32.gmra.mxu0 %v2155
        %v2235 = vpop.f32.mrf.mxu0
        %v2236 = vadd.f32 %v2146, %v2235
        %v2237 = vpop.f32.mrf.mxu0
        %v2238 = vadd.f32 %v2146, %v2237
        %2239 = vdwg.mxu0
        %v2240 = vmul.f32 %v2224, 0.2
        %v2241 = vmul.f32 %v2226, 0.2
        %v2242 = vmul.f32 %v2230, 0.2
        %v2243 = vmul.f32 %v2232, 0.2
        %v2244 = vmul.f32 %v2236, 0.2
        %v2245 = vmul.f32 %v2238, 0.2
        %v2246 = vmax.f32 %v2224, %v2240
        %v2247 = vmax.f32 %v2226, %v2241
        %v2248 = vmax.f32 %v2230, %v2242
        %v2249 = vmax.f32 %v2232, %v2243
        %v2250 = vmax.f32 %v2236, %v2244
        %v2251 = vmax.f32 %v2238, %v2245
        %v2252 = vld [vmem:[%s770] sm:$0xff]
        %v2253 = vld [vmem:[%s770 + $0x8] sm:$0xff]
        %v2254 = vld [vmem:[%s770 + $0x10] sm:$0xf]
        %v2255 = vld [vmem:[%s775] sm:$0xff]
        %v2256 = vld [vmem:[%s775 + $0x8] sm:$0xff]
        %v2257 = vld [vmem:[%s775 + $0x10] sm:$0xf]
        %2259 = vset.pattern.permute.xlu0 0
        %2260 = vperm.xlu0 %2259, %v2255
        %v2261 = vpop.permute.xlu0 %2260
        %2264 = vset.pattern.permute.xlu0 0
        %2265 = vperm.xlu0 %2264, %v2256
        %v2266 = vpop.permute.xlu0 %2265
        %2269 = vset.pattern.permute.xlu0 0
        %2270 = vperm.xlu0 %2269, %v2257
        %v2271 = vpop.permute.xlu0 %2270
        %v2274 = vsel %vm1206, %v2252, 0
        %v2277 = vsel %vm1206, %v2253, 0
        %v2280 = vsel %vm1206, %v2254, 0
        %v2283 = vsel %vm831, %v1996, 0
        %v2286 = vsel %vm831, %v1997, 0
        %2288 = vmatprep.subr.mxu0 0.0
        %2289 = vmatpush1.msra.mxu0 0.0
        %2290 = vmatprep.subr.mxu0 0.0
        %2291 = vmatpush1.msra.mxu0 0.0
        %2292 = vmatprep.subr.mxu0 0.0
        %2293 = vmatpush1.msra.mxu0 0.0
        %2294 = vmatprep.subr.mxu0 0.0
        %2295 = vmatpush1.msra.mxu0 0.0
        %2296 = vmatprep.subr.mxu0 0.0
        %2297 = vmatpush1.msra.mxu0 0.0
        %2298 = vmatprep.subr.mxu0 0.0
        %2299 = vmatpush1.msra.mxu0 0.0
        %2300 = vmatprep.subr.mxu0 0.0
        %2301 = vmatpush1.msra.mxu0 0.0
        %2302 = vmatprep.subr.mxu0 0.0
        %2303 = vmatpush1.msra.mxu0 0.0
        %2304 = vmatprep.subr.mxu0 0.0
        %2305 = vmatpush1.msra.mxu0 0.0
        %2306 = vmatprep.subr.mxu0 0.0
        %2307 = vmatpush1.msra.mxu0 0.0
        %2308 = vmatprep.subr.mxu0 0.0
        %2309 = vmatpush1.msra.mxu0 0.0
        %2310 = vmatprep.subr.mxu0 0.0
        %2311 = vmatpush1.msra.mxu0 0.0
        %2312 = vmatprep.subr.mxu0 0.0
        %2313 = vmatpush1.msra.mxu0 0.0
        %2314 = vmatprep.subr.mxu0 %v2286
        %2315 = vmatpush1.msra.mxu0 %v2283
        %2316 = vmatprep.subr.mxu0 %v1995
        %2317 = vmatpush1.msra.mxu0 %v1994
        %2318 = vmatprep.subr.mxu0 %v1993
        %2319 = vmatpush1.msra.mxu0 %v1992
        %2320 = vmatprep.subr.mxu0 0.0
        %2321 = vmatpush2.msra.mxu0 0.0
        %2322 = vmatprep.subr.mxu0 0.0
        %2323 = vmatpush2.msra.mxu0 0.0
        %2324 = vmatprep.subr.mxu0 0.0
        %2325 = vmatpush2.msra.mxu0 0.0
        %2326 = vmatprep.subr.mxu0 0.0
        %2327 = vmatpush2.msra.mxu0 0.0
        %2328 = vmatprep.subr.mxu0 0.0
        %2329 = vmatpush2.msra.mxu0 0.0
        %2330 = vmatprep.subr.mxu0 0.0
        %2331 = vmatpush2.msra.mxu0 0.0
        %2332 = vmatprep.subr.mxu0 0.0
        %2333 = vmatpush2.msra.mxu0 0.0
        %2334 = vmatprep.subr.mxu0 0.0
        %2335 = vmatpush2.msra.mxu0 0.0
        %2336 = vmatprep.subr.mxu0 0.0
        %2337 = vmatpush2.msra.mxu0 0.0
        %2338 = vmatprep.subr.mxu0 0.0
        %2339 = vmatpush2.msra.mxu0 0.0
        %2340 = vmatprep.subr.mxu0 0.0
        %2341 = vmatpush2.msra.mxu0 0.0
        %2342 = vmatprep.subr.mxu0 0.0
        %2343 = vmatpush2.msra.mxu0 0.0
        %2344 = vmatprep.subr.mxu0 0.0
        %2345 = vmatpush2.msra.mxu0 0.0
        %2346 = vmatprep.subr.mxu0 0.0
        %2347 = vmatpush2.msra.mxu0 0.0
        %2348 = vmatprep.subr.mxu0 0.0
        %2349 = vmatpush2.msra.mxu0 0.0
        %2350 = vmatprep.subr.mxu0 0.0
        %2351 = vmatpush2.msra.mxu0 0.0
        %2352 = vmatprep.mubr.f32.mxu0 0.0
        %2353 = vmatmul.mubr.f32.gmra.mxu0 %v2274
        %v2354 = vpop.f32.mrf.mxu0
        %v2355 = vadd.f32 %v2261, %v2354
        %v2356 = vpop.f32.mrf.mxu0
        %v2357 = vadd.f32 %v2261, %v2356
        %2358 = vmatprep.mubr.f32.mxu0 0.0
        %2359 = vmatmul.mubr.f32.gmra.mxu0 %v2277
        %v2360 = vpop.f32.mrf.mxu0
        %v2361 = vadd.f32 %v2266, %v2360
        %v2362 = vpop.f32.mrf.mxu0
        %v2363 = vadd.f32 %v2266, %v2362
        %2364 = vmatprep.mubr.f32.mxu0 0.0
        %2365 = vmatmul.mubr.f32.gmra.mxu0 %v2280
        %v2366 = vpop.f32.mrf.mxu0
        %v2367 = vadd.f32 %v2271, %v2366
        %v2368 = vpop.f32.mrf.mxu0
        %v2369 = vadd.f32 %v2271, %v2368
        %2370 = vdwg.mxu0
        %v2371 = vmul.f32 %v2355, 0.2
        %v2372 = vmul.f32 %v2357, 0.2
        %v2373 = vmul.f32 %v2361, 0.2
        %v2374 = vmul.f32 %v2363, 0.2
        %v2375 = vmul.f32 %v2367, 0.2
        %v2376 = vmul.f32 %v2369, 0.2
        %v2377 = vmax.f32 %v2355, %v2371
        %v2378 = vmax.f32 %v2357, %v2372
        %v2379 = vmax.f32 %v2361, %v2373
        %v2380 = vmax.f32 %v2363, %v2374
        %v2381 = vmax.f32 %v2367, %v2375
        %v2382 = vmax.f32 %v2369, %v2376
        %s2383 = scalar_lea.vmem %s770, 24
        %v2384 = vld [vmem:[%s2383] sm:$0xff]
        %v2385 = vld [vmem:[%s2383 + $0x8] sm:$0xff]
        %v2386 = vld [vmem:[%s2383 + $0x10] sm:$0xf]
        %v2387 = vadd.f32 %v2119, %v2377
        %v2388 = vadd.f32 %v2120, %v2378
        %v2389 = vadd.f32 %v2121, %v2379
        %v2390 = vadd.f32 %v2122, %v2380
        %v2391 = vadd.f32 %v2123, %v2381
        %v2392 = vadd.f32 %v2124, %v2382
        %s2393 = scalar_lea.vmem %s775, 24
        %v2394 = vld [vmem:[%s2393] sm:$0xff]
        %v2395 = vld [vmem:[%s2393 + $0x8] sm:$0xff]
        %v2396 = vld [vmem:[%s2393 + $0x10] sm:$0xf]
        %2398 = vset.pattern.permute.xlu0 0
        %2399 = vperm.xlu0 %2398, %v2394
        %v2400 = vpop.permute.xlu0 %2399
        %2403 = vset.pattern.permute.xlu0 0
        %2404 = vperm.xlu0 %2403, %v2395
        %v2405 = vpop.permute.xlu0 %2404
        %2408 = vset.pattern.permute.xlu0 0
        %2409 = vperm.xlu0 %2408, %v2396
        %v2410 = vpop.permute.xlu0 %2409
        %v2413 = vsel %vm1206, %v2384, 0
        %v2416 = vsel %vm1206, %v2385, 0
        %v2419 = vsel %vm1206, %v2386, 0
        %v2422 = vsel %vm831, %v2391, 0
        %v2425 = vsel %vm831, %v2392, 0
        %2427 = vmatprep.subr.mxu0 0.0
        %2428 = vmatpush1.msra.mxu0 0.0
        %2429 = vmatprep.subr.mxu0 0.0
        %2430 = vmatpush1.msra.mxu0 0.0
        %2431 = vmatprep.subr.mxu0 0.0
        %2432 = vmatpush1.msra.mxu0 0.0
        %2433 = vmatprep.subr.mxu0 0.0
        %2434 = vmatpush1.msra.mxu0 0.0
        %2435 = vmatprep.subr.mxu0 0.0
        %2436 = vmatpush1.msra.mxu0 0.0
        %2437 = vmatprep.subr.mxu0 0.0
        %2438 = vmatpush1.msra.mxu0 0.0
        %2439 = vmatprep.subr.mxu0 0.0
        %2440 = vmatpush1.msra.mxu0 0.0
        %2441 = vmatprep.subr.mxu0 0.0
        %2442 = vmatpush1.msra.mxu0 0.0
        %2443 = vmatprep.subr.mxu0 0.0
        %2444 = vmatpush1.msra.mxu0 0.0
        %2445 = vmatprep.subr.mxu0 0.0
        %2446 = vmatpush1.msra.mxu0 0.0
        %2447 = vmatprep.subr.mxu0 0.0
        %2448 = vmatpush1.msra.mxu0 0.0
        %2449 = vmatprep.subr.mxu0 0.0
        %2450 = vmatpush1.msra.mxu0 0.0
        %2451 = vmatprep.subr.mxu0 0.0
        %2452 = vmatpush1.msra.mxu0 0.0
        %2453 = vmatprep.subr.mxu0 %v2425
        %2454 = vmatpush1.msra.mxu0 %v2422
        %2455 = vmatprep.subr.mxu0 %v2390
        %2456 = vmatpush1.msra.mxu0 %v2389
        %2457 = vmatprep.subr.mxu0 %v2388
        %2458 = vmatpush1.msra.mxu0 %v2387
        %2459 = vmatprep.subr.mxu0 0.0
        %2460 = vmatpush2.msra.mxu0 0.0
        %2461 = vmatprep.subr.mxu0 0.0
        %2462 = vmatpush2.msra.mxu0 0.0
        %2463 = vmatprep.subr.mxu0 0.0
        %2464 = vmatpush2.msra.mxu0 0.0
        %2465 = vmatprep.subr.mxu0 0.0
        %2466 = vmatpush2.msra.mxu0 0.0
        %2467 = vmatprep.subr.mxu0 0.0
        %2468 = vmatpush2.msra.mxu0 0.0
        %2469 = vmatprep.subr.mxu0 0.0
        %2470 = vmatpush2.msra.mxu0 0.0
        %2471 = vmatprep.subr.mxu0 0.0
        %2472 = vmatpush2.msra.mxu0 0.0
        %2473 = vmatprep.subr.mxu0 0.0
        %2474 = vmatpush2.msra.mxu0 0.0
        %2475 = vmatprep.subr.mxu0 0.0
        %2476 = vmatpush2.msra.mxu0 0.0
        %2477 = vmatprep.subr.mxu0 0.0
        %2478 = vmatpush2.msra.mxu0 0.0
        %2479 = vmatprep.subr.mxu0 0.0
        %2480 = vmatpush2.msra.mxu0 0.0
        %2481 = vmatprep.subr.mxu0 0.0
        %2482 = vmatpush2.msra.mxu0 0.0
        %2483 = vmatprep.subr.mxu0 0.0
        %2484 = vmatpush2.msra.mxu0 0.0
        %2485 = vmatprep.subr.mxu0 0.0
        %2486 = vmatpush2.msra.mxu0 0.0
        %2487 = vmatprep.subr.mxu0 0.0
        %2488 = vmatpush2.msra.mxu0 0.0
        %2489 = vmatprep.subr.mxu0 0.0
        %2490 = vmatpush2.msra.mxu0 0.0
        %2491 = vmatprep.mubr.f32.mxu0 0.0
        %2492 = vmatmul.mubr.f32.gmra.mxu0 %v2413
        %v2493 = vpop.f32.mrf.mxu0
        %v2494 = vadd.f32 %v2400, %v2493
        %v2495 = vpop.f32.mrf.mxu0
        %v2496 = vadd.f32 %v2400, %v2495
        %2497 = vmatprep.mubr.f32.mxu0 0.0
        %2498 = vmatmul.mubr.f32.gmra.mxu0 %v2416
        %v2499 = vpop.f32.mrf.mxu0
        %v2500 = vadd.f32 %v2405, %v2499
        %v2501 = vpop.f32.mrf.mxu0
        %v2502 = vadd.f32 %v2405, %v2501
        %2503 = vmatprep.mubr.f32.mxu0 0.0
        %2504 = vmatmul.mubr.f32.gmra.mxu0 %v2419
        %v2505 = vpop.f32.mrf.mxu0
        %v2506 = vadd.f32 %v2410, %v2505
        %v2507 = vpop.f32.mrf.mxu0
        %v2508 = vadd.f32 %v2410, %v2507
        %2509 = vdwg.mxu0
        %v2510 = vmul.f32 %v2494, 0.2
        %v2511 = vmul.f32 %v2496, 0.2
        %v2512 = vmul.f32 %v2500, 0.2
        %v2513 = vmul.f32 %v2502, 0.2
        %v2514 = vmul.f32 %v2506, 0.2
        %v2515 = vmul.f32 %v2508, 0.2
        %v2516 = vmax.f32 %v2494, %v2510
        %v2517 = vmax.f32 %v2496, %v2511
        %v2518 = vmax.f32 %v2500, %v2512
        %v2519 = vmax.f32 %v2502, %v2513
        %v2520 = vmax.f32 %v2506, %v2514
        %v2521 = vmax.f32 %v2508, %v2515
        %s2522 = scalar_lea.vmem %s770, 48
        %v2523 = vld [vmem:[%s2522] sm:$0xff]
        %v2524 = vld [vmem:[%s2522 + $0x8] sm:$0xff]
        %v2525 = vld [vmem:[%s2522 + $0x10] sm:$0xf]
        %v2526 = vadd.f32 %v2246, %v2516
        %v2527 = vadd.f32 %v2247, %v2517
        %v2528 = vadd.f32 %v2248, %v2518
        %v2529 = vadd.f32 %v2249, %v2519
        %v2530 = vadd.f32 %v2250, %v2520
        %v2531 = vadd.f32 %v2251, %v2521
        %s2532 = scalar_lea.vmem %s775, 48
        %v2533 = vld [vmem:[%s2532] sm:$0xff]
        %v2534 = vld [vmem:[%s2532 + $0x8] sm:$0xff]
        %v2535 = vld [vmem:[%s2532 + $0x10] sm:$0xf]
        %2537 = vset.pattern.permute.xlu0 0
        %2538 = vperm.xlu0 %2537, %v2533
        %v2539 = vpop.permute.xlu0 %2538
        %2542 = vset.pattern.permute.xlu0 0
        %2543 = vperm.xlu0 %2542, %v2534
        %v2544 = vpop.permute.xlu0 %2543
        %2547 = vset.pattern.permute.xlu0 0
        %2548 = vperm.xlu0 %2547, %v2535
        %v2549 = vpop.permute.xlu0 %2548
        %v2552 = vsel %vm1206, %v2523, 0
        %v2555 = vsel %vm1206, %v2524, 0
        %v2558 = vsel %vm1206, %v2525, 0
        %v2561 = vsel %vm831, %v2530, 0
        %v2564 = vsel %vm831, %v2531, 0
        %2566 = vmatprep.subr.mxu0 0.0
        %2567 = vmatpush1.msra.mxu0 0.0
        %2568 = vmatprep.subr.mxu0 0.0
        %2569 = vmatpush1.msra.mxu0 0.0
        %2570 = vmatprep.subr.mxu0 0.0
        %2571 = vmatpush1.msra.mxu0 0.0
        %2572 = vmatprep.subr.mxu0 0.0
        %2573 = vmatpush1.msra.mxu0 0.0
        %2574 = vmatprep.subr.mxu0 0.0
        %2575 = vmatpush1.msra.mxu0 0.0
        %2576 = vmatprep.subr.mxu0 0.0
        %2577 = vmatpush1.msra.mxu0 0.0
        %2578 = vmatprep.subr.mxu0 0.0
        %2579 = vmatpush1.msra.mxu0 0.0
        %2580 = vmatprep.subr.mxu0 0.0
        %2581 = vmatpush1.msra.mxu0 0.0
        %2582 = vmatprep.subr.mxu0 0.0
        %2583 = vmatpush1.msra.mxu0 0.0
        %2584 = vmatprep.subr.mxu0 0.0
        %2585 = vmatpush1.msra.mxu0 0.0
        %2586 = vmatprep.subr.mxu0 0.0
        %2587 = vmatpush1.msra.mxu0 0.0
        %2588 = vmatprep.subr.mxu0 0.0
        %2589 = vmatpush1.msra.mxu0 0.0
        %2590 = vmatprep.subr.mxu0 0.0
        %2591 = vmatpush1.msra.mxu0 0.0
        %2592 = vmatprep.subr.mxu0 %v2564
        %2593 = vmatpush1.msra.mxu0 %v2561
        %2594 = vmatprep.subr.mxu0 %v2529
        %2595 = vmatpush1.msra.mxu0 %v2528
        %2596 = vmatprep.subr.mxu0 %v2527
        %2597 = vmatpush1.msra.mxu0 %v2526
        %2598 = vmatprep.subr.mxu0 0.0
        %2599 = vmatpush2.msra.mxu0 0.0
        %2600 = vmatprep.subr.mxu0 0.0
        %2601 = vmatpush2.msra.mxu0 0.0
        %2602 = vmatprep.subr.mxu0 0.0
        %2603 = vmatpush2.msra.mxu0 0.0
        %2604 = vmatprep.subr.mxu0 0.0
        %2605 = vmatpush2.msra.mxu0 0.0
        %2606 = vmatprep.subr.mxu0 0.0
        %2607 = vmatpush2.msra.mxu0 0.0
        %2608 = vmatprep.subr.mxu0 0.0
        %2609 = vmatpush2.msra.mxu0 0.0
        %2610 = vmatprep.subr.mxu0 0.0
        %2611 = vmatpush2.msra.mxu0 0.0
        %2612 = vmatprep.subr.mxu0 0.0
        %2613 = vmatpush2.msra.mxu0 0.0
        %2614 = vmatprep.subr.mxu0 0.0
        %2615 = vmatpush2.msra.mxu0 0.0
        %2616 = vmatprep.subr.mxu0 0.0
        %2617 = vmatpush2.msra.mxu0 0.0
        %2618 = vmatprep.subr.mxu0 0.0
        %2619 = vmatpush2.msra.mxu0 0.0
        %2620 = vmatprep.subr.mxu0 0.0
        %2621 = vmatpush2.msra.mxu0 0.0
        %2622 = vmatprep.subr.mxu0 0.0
        %2623 = vmatpush2.msra.mxu0 0.0
        %2624 = vmatprep.subr.mxu0 0.0
        %2625 = vmatpush2.msra.mxu0 0.0
        %2626 = vmatprep.subr.mxu0 0.0
        %2627 = vmatpush2.msra.mxu0 0.0
        %2628 = vmatprep.subr.mxu0 0.0
        %2629 = vmatpush2.msra.mxu0 0.0
        %2630 = vmatprep.mubr.f32.mxu0 0.0
        %2631 = vmatmul.mubr.f32.gmra.mxu0 %v2552
        %v2632 = vpop.f32.mrf.mxu0
        %v2633 = vadd.f32 %v2539, %v2632
        %v2634 = vpop.f32.mrf.mxu0
        %v2635 = vadd.f32 %v2539, %v2634
        %2636 = vmatprep.mubr.f32.mxu0 0.0
        %2637 = vmatmul.mubr.f32.gmra.mxu0 %v2555
        %v2638 = vpop.f32.mrf.mxu0
        %v2639 = vadd.f32 %v2544, %v2638
        %v2640 = vpop.f32.mrf.mxu0
        %v2641 = vadd.f32 %v2544, %v2640
        %2642 = vmatprep.mubr.f32.mxu0 0.0
        %2643 = vmatmul.mubr.f32.gmra.mxu0 %v2558
        %v2644 = vpop.f32.mrf.mxu0
        %v2645 = vadd.f32 %v2549, %v2644
        %v2646 = vpop.f32.mrf.mxu0
        %v2647 = vadd.f32 %v2549, %v2646
        %2648 = vdwg.mxu0
        %v2649 = vmul.f32 %v2633, 0.2
        %v2650 = vmul.f32 %v2635, 0.2
        %v2651 = vmul.f32 %v2639, 0.2
        %v2652 = vmul.f32 %v2641, 0.2
        %v2653 = vmul.f32 %v2645, 0.2
        %v2654 = vmul.f32 %v2647, 0.2
        %v2655 = vmax.f32 %v2633, %v2649
        %v2656 = vmax.f32 %v2635, %v2650
        %v2657 = vmax.f32 %v2639, %v2651
        %v2658 = vmax.f32 %v2641, %v2652
        %v2659 = vmax.f32 %v2645, %v2653
        %v2660 = vmax.f32 %v2647, %v2654
        %v2661 = vld [vmem:[%s780] sm:$0xff]
        %v2662 = vld [vmem:[%s780 + $0x8] sm:$0xff]
        %v2663 = vadd.f32 %v1992, %v2377
        %v2664 = vadd.f32 %v1993, %v2378
        %v2665 = vadd.f32 %v1994, %v2379
        %v2666 = vadd.f32 %v1995, %v2380
        %v2667 = vadd.f32 %v1996, %v2381
        %v2668 = vadd.f32 %v1997, %v2382
        %s2669 = scalar_lea.vmem %s780, 16
        %v2670 = vld [vmem:[%s2669] sm:$0xff]
        %v2671 = vld [vmem:[%s2669 + $0x8] sm:$0xff]
        %v2672 = vadd.f32 %v2119, %v2516
        %v2673 = vadd.f32 %v2120, %v2517
        %v2674 = vadd.f32 %v2121, %v2518
        %v2675 = vadd.f32 %v2122, %v2519
        %v2676 = vadd.f32 %v2123, %v2520
        %v2677 = vadd.f32 %v2124, %v2521
        %v2679 = vsel %vm1206, %v2670, 0
        %v2682 = vsel %vm1206, %v2671, 0
        %v2685 = vsel %vm831, %v2676, 0
        %v2688 = vsel %vm831, %v2677, 0
        %2690 = vmatprep.subr.mxu0 0.0
        %2691 = vmatpush1.msra.mxu0 0.0
        %2692 = vmatprep.subr.mxu0 0.0
        %2693 = vmatpush1.msra.mxu0 0.0
        %2694 = vmatprep.subr.mxu0 0.0
        %2695 = vmatpush1.msra.mxu0 0.0
        %2696 = vmatprep.subr.mxu0 0.0
        %2697 = vmatpush1.msra.mxu0 0.0
        %2698 = vmatprep.subr.mxu0 0.0
        %2699 = vmatpush1.msra.mxu0 0.0
        %2700 = vmatprep.subr.mxu0 0.0
        %2701 = vmatpush1.msra.mxu0 0.0
        %2702 = vmatprep.subr.mxu0 0.0
        %2703 = vmatpush1.msra.mxu0 0.0
        %2704 = vmatprep.subr.mxu0 0.0
        %2705 = vmatpush1.msra.mxu0 0.0
        %2706 = vmatprep.subr.mxu0 0.0
        %2707 = vmatpush1.msra.mxu0 0.0
        %2708 = vmatprep.subr.mxu0 0.0
        %2709 = vmatpush1.msra.mxu0 0.0
        %2710 = vmatprep.subr.mxu0 0.0
        %2711 = vmatpush1.msra.mxu0 0.0
        %2712 = vmatprep.subr.mxu0 0.0
        %2713 = vmatpush1.msra.mxu0 0.0
        %2714 = vmatprep.subr.mxu0 0.0
        %2715 = vmatpush1.msra.mxu0 0.0
        %2716 = vmatprep.subr.mxu0 %v2688
        %2717 = vmatpush1.msra.mxu0 %v2685
        %2718 = vmatprep.subr.mxu0 %v2675
        %2719 = vmatpush1.msra.mxu0 %v2674
        %2720 = vmatprep.subr.mxu0 %v2673
        %2721 = vmatpush1.msra.mxu0 %v2672
        %2722 = vmatprep.subr.mxu0 0.0
        %2723 = vmatpush2.msra.mxu0 0.0
        %2724 = vmatprep.subr.mxu0 0.0
        %2725 = vmatpush2.msra.mxu0 0.0
        %2726 = vmatprep.subr.mxu0 0.0
        %2727 = vmatpush2.msra.mxu0 0.0
        %2728 = vmatprep.subr.mxu0 0.0
        %2729 = vmatpush2.msra.mxu0 0.0
        %2730 = vmatprep.subr.mxu0 0.0
        %2731 = vmatpush2.msra.mxu0 0.0
        %2732 = vmatprep.subr.mxu0 0.0
        %2733 = vmatpush2.msra.mxu0 0.0
        %2734 = vmatprep.subr.mxu0 0.0
        %2735 = vmatpush2.msra.mxu0 0.0
        %2736 = vmatprep.subr.mxu0 0.0
        %2737 = vmatpush2.msra.mxu0 0.0
        %2738 = vmatprep.subr.mxu0 0.0
        %2739 = vmatpush2.msra.mxu0 0.0
        %2740 = vmatprep.subr.mxu0 0.0
        %2741 = vmatpush2.msra.mxu0 0.0
        %2742 = vmatprep.subr.mxu0 0.0
        %2743 = vmatpush2.msra.mxu0 0.0
        %2744 = vmatprep.subr.mxu0 0.0
        %2745 = vmatpush2.msra.mxu0 0.0
        %2746 = vmatprep.subr.mxu0 0.0
        %2747 = vmatpush2.msra.mxu0 0.0
        %2748 = vmatprep.subr.mxu0 0.0
        %2749 = vmatpush2.msra.mxu0 0.0
        %2750 = vmatprep.subr.mxu0 0.0
        %2751 = vmatpush2.msra.mxu0 0.0
        %2752 = vmatprep.subr.mxu0 0.0
        %2753 = vmatpush2.msra.mxu0 0.0
        %2754 = vmatprep.mubr.f32.mxu0 0.0
        %2755 = vmatmul.mubr.f32.gmra.mxu0 %v2679
        %v2756 = vpop.f32.mrf.mxu0
        %v2757 = vadd.f32 0.0, %v2756
        %v2758 = vpop.f32.mrf.mxu0
        %v2759 = vadd.f32 0.0, %v2758
        %2760 = vmatprep.mubr.f32.mxu0 0.0
        %2761 = vmatmul.mubr.f32.gmra.mxu0 %v2682
        %v2762 = vpop.f32.mrf.mxu0
        %v2763 = vadd.f32 0.0, %v2762
        %v2764 = vpop.f32.mrf.mxu0
        %v2765 = vadd.f32 0.0, %v2764
        %2766 = vdwg.mxu0
        %v2768 = vsel %vm1206, %v2661, 0
        %v2771 = vsel %vm1206, %v2662, 0
        %v2774 = vsel %vm831, %v2667, 0
        %v2777 = vsel %vm831, %v2668, 0
        %2779 = vmatprep.subr.mxu0 0.0
        %2780 = vmatpush1.msra.mxu0 0.0
        %2781 = vmatprep.subr.mxu0 0.0
        %2782 = vmatpush1.msra.mxu0 0.0
        %2783 = vmatprep.subr.mxu0 0.0
        %2784 = vmatpush1.msra.mxu0 0.0
        %2785 = vmatprep.subr.mxu0 0.0
        %2786 = vmatpush1.msra.mxu0 0.0
        %2787 = vmatprep.subr.mxu0 0.0
        %2788 = vmatpush1.msra.mxu0 0.0
        %2789 = vmatprep.subr.mxu0 0.0
        %2790 = vmatpush1.msra.mxu0 0.0
        %2791 = vmatprep.subr.mxu0 0.0
        %2792 = vmatpush1.msra.mxu0 0.0
        %2793 = vmatprep.subr.mxu0 0.0
        %2794 = vmatpush1.msra.mxu0 0.0
        %2795 = vmatprep.subr.mxu0 0.0
        %2796 = vmatpush1.msra.mxu0 0.0
        %2797 = vmatprep.subr.mxu0 0.0
        %2798 = vmatpush1.msra.mxu0 0.0
        %2799 = vmatprep.subr.mxu0 0.0
        %2800 = vmatpush1.msra.mxu0 0.0
        %2801 = vmatprep.subr.mxu0 0.0
        %2802 = vmatpush1.msra.mxu0 0.0
        %2803 = vmatprep.subr.mxu0 0.0
        %2804 = vmatpush1.msra.mxu0 0.0
        %2805 = vmatprep.subr.mxu0 %v2777
        %2806 = vmatpush1.msra.mxu0 %v2774
        %2807 = vmatprep.subr.mxu0 %v2666
        %2808 = vmatpush1.msra.mxu0 %v2665
        %2809 = vmatprep.subr.mxu0 %v2664
        %2810 = vmatpush1.msra.mxu0 %v2663
        %2811 = vmatprep.subr.mxu0 0.0
        %2812 = vmatpush2.msra.mxu0 0.0
        %2813 = vmatprep.subr.mxu0 0.0
        %2814 = vmatpush2.msra.mxu0 0.0
        %2815 = vmatprep.subr.mxu0 0.0
        %2816 = vmatpush2.msra.mxu0 0.0
        %2817 = vmatprep.subr.mxu0 0.0
        %2818 = vmatpush2.msra.mxu0 0.0
        %2819 = vmatprep.subr.mxu0 0.0
        %2820 = vmatpush2.msra.mxu0 0.0
        %2821 = vmatprep.subr.mxu0 0.0
        %2822 = vmatpush2.msra.mxu0 0.0
        %2823 = vmatprep.subr.mxu0 0.0
        %2824 = vmatpush2.msra.mxu0 0.0
        %2825 = vmatprep.subr.mxu0 0.0
        %2826 = vmatpush2.msra.mxu0 0.0
        %2827 = vmatprep.subr.mxu0 0.0
        %2828 = vmatpush2.msra.mxu0 0.0
        %2829 = vmatprep.subr.mxu0 0.0
        %2830 = vmatpush2.msra.mxu0 0.0
        %2831 = vmatprep.subr.mxu0 0.0
        %2832 = vmatpush2.msra.mxu0 0.0
        %2833 = vmatprep.subr.mxu0 0.0
        %2834 = vmatpush2.msra.mxu0 0.0
        %2835 = vmatprep.subr.mxu0 0.0
        %2836 = vmatpush2.msra.mxu0 0.0
        %2837 = vmatprep.subr.mxu0 0.0
        %2838 = vmatpush2.msra.mxu0 0.0
        %2839 = vmatprep.subr.mxu0 0.0
        %2840 = vmatpush2.msra.mxu0 0.0
        %2841 = vmatprep.subr.mxu0 0.0
        %2842 = vmatpush2.msra.mxu0 0.0
        %2843 = vmatprep.mubr.f32.mxu0 0.0
        %2844 = vmatmul.mubr.f32.gmra.mxu0 %v2768
        %v2845 = vpop.f32.mrf.mxu0
        %v2846 = vadd.f32 %v2757, %v2845
        %v2847 = vpop.f32.mrf.mxu0
        %v2848 = vadd.f32 %v2759, %v2847
        %2849 = vmatprep.mubr.f32.mxu0 0.0
        %2850 = vmatmul.mubr.f32.gmra.mxu0 %v2771
        %v2851 = vpop.f32.mrf.mxu0
        %v2852 = vadd.f32 %v2763, %v2851
        %v2853 = vpop.f32.mrf.mxu0
        %v2854 = vadd.f32 %v2765, %v2853
        %2855 = vdwg.mxu0
        %s2856 = scalar_lea.vmem %s780, 32
        %v2857 = vld [vmem:[%s2856] sm:$0xff]
        %v2858 = vld [vmem:[%s2856 + $0x8] sm:$0xff]
        %v2859 = vadd.f32 %v2246, %v2655
        %v2860 = vadd.f32 %v2247, %v2656
        %v2861 = vadd.f32 %v2248, %v2657
        %v2862 = vadd.f32 %v2249, %v2658
        %v2863 = vadd.f32 %v2250, %v2659
        %v2864 = vadd.f32 %v2251, %v2660
        %v2866 = vsel %vm1206, %v2857, 0
        %v2869 = vsel %vm1206, %v2858, 0
        %v2872 = vsel %vm831, %v2863, 0
        %v2875 = vsel %vm831, %v2864, 0
        %2877 = vmatprep.subr.mxu0 0.0
        %2878 = vmatpush1.msra.mxu0 0.0
        %2879 = vmatprep.subr.mxu0 0.0
        %2880 = vmatpush1.msra.mxu0 0.0
        %2881 = vmatprep.subr.mxu0 0.0
        %2882 = vmatpush1.msra.mxu0 0.0
        %2883 = vmatprep.subr.mxu0 0.0
        %2884 = vmatpush1.msra.mxu0 0.0
        %2885 = vmatprep.subr.mxu0 0.0
        %2886 = vmatpush1.msra.mxu0 0.0
        %2887 = vmatprep.subr.mxu0 0.0
        %2888 = vmatpush1.msra.mxu0 0.0
        %2889 = vmatprep.subr.mxu0 0.0
        %2890 = vmatpush1.msra.mxu0 0.0
        %2891 = vmatprep.subr.mxu0 0.0
        %2892 = vmatpush1.msra.mxu0 0.0
        %2893 = vmatprep.subr.mxu0 0.0
        %2894 = vmatpush1.msra.mxu0 0.0
        %2895 = vmatprep.subr.mxu0 0.0
        %2896 = vmatpush1.msra.mxu0 0.0
        %2897 = vmatprep.subr.mxu0 0.0
        %2898 = vmatpush1.msra.mxu0 0.0
        %2899 = vmatprep.subr.mxu0 0.0
        %2900 = vmatpush1.msra.mxu0 0.0
        %2901 = vmatprep.subr.mxu0 0.0
        %2902 = vmatpush1.msra.mxu0 0.0
        %2903 = vmatprep.subr.mxu0 %v2875
        %2904 = vmatpush1.msra.mxu0 %v2872
        %2905 = vmatprep.subr.mxu0 %v2862
        %2906 = vmatpush1.msra.mxu0 %v2861
        %2907 = vmatprep.subr.mxu0 %v2860
        %2908 = vmatpush1.msra.mxu0 %v2859
        %2909 = vmatprep.subr.mxu0 0.0
        %2910 = vmatpush2.msra.mxu0 0.0
        %2911 = vmatprep.subr.mxu0 0.0
        %2912 = vmatpush2.msra.mxu0 0.0
        %2913 = vmatprep.subr.mxu0 0.0
        %2914 = vmatpush2.msra.mxu0 0.0
        %2915 = vmatprep.subr.mxu0 0.0
        %2916 = vmatpush2.msra.mxu0 0.0
        %2917 = vmatprep.subr.mxu0 0.0
        %2918 = vmatpush2.msra.mxu0 0.0
        %2919 = vmatprep.subr.mxu0 0.0
        %2920 = vmatpush2.msra.mxu0 0.0
        %2921 = vmatprep.subr.mxu0 0.0
        %2922 = vmatpush2.msra.mxu0 0.0
        %2923 = vmatprep.subr.mxu0 0.0
        %2924 = vmatpush2.msra.mxu0 0.0
        %2925 = vmatprep.subr.mxu0 0.0
        %2926 = vmatpush2.msra.mxu0 0.0
        %2927 = vmatprep.subr.mxu0 0.0
        %2928 = vmatpush2.msra.mxu0 0.0
        %2929 = vmatprep.subr.mxu0 0.0
        %2930 = vmatpush2.msra.mxu0 0.0
        %2931 = vmatprep.subr.mxu0 0.0
        %2932 = vmatpush2.msra.mxu0 0.0
        %2933 = vmatprep.subr.mxu0 0.0
        %2934 = vmatpush2.msra.mxu0 0.0
        %2935 = vmatprep.subr.mxu0 0.0
        %2936 = vmatpush2.msra.mxu0 0.0
        %2937 = vmatprep.subr.mxu0 0.0
        %2938 = vmatpush2.msra.mxu0 0.0
        %2939 = vmatprep.subr.mxu0 0.0
        %2940 = vmatpush2.msra.mxu0 0.0
        %2941 = vmatprep.mubr.f32.mxu0 0.0
        %2942 = vmatmul.mubr.f32.gmra.mxu0 %v2866
        %v2943 = vpop.f32.mrf.mxu0
        %v2944 = vadd.f32 0.0, %v2943
        %v2945 = vpop.f32.mrf.mxu0
        %v2946 = vadd.f32 0.0, %v2945
        %2947 = vmatprep.mubr.f32.mxu0 0.0
        %2948 = vmatmul.mubr.f32.gmra.mxu0 %v2869
        %v2949 = vpop.f32.mrf.mxu0
        %v2950 = vadd.f32 0.0, %v2949
        %v2951 = vpop.f32.mrf.mxu0
        %v2952 = vadd.f32 0.0, %v2951
        %2953 = vdwg.mxu0
        %v2954 = vadd.f32 %v2846, %v2944
        %v2955 = vadd.f32 %v2848, %v2946
        %v2956 = vadd.f32 %v2852, %v2950
        %v2957 = vadd.f32 %v2854, %v2952
        %v2958 = vld [vmem:[%s785] sm:$0xff]
        %v2959 = vld [vmem:[%s785 + $0x8] sm:$0xff]
        %2961 = vset.pattern.permute.xlu0 0
        %2962 = vperm.xlu0 %2961, %v2958
        %v2963 = vpop.permute.xlu0 %2962
        %2966 = vset.pattern.permute.xlu0 0
        %2967 = vperm.xlu0 %2966, %v2959
        %v2968 = vpop.permute.xlu0 %2967
        %v2970 = vadd.f32 %v2954, %v2963
        %v2971 = vadd.f32 %v2955, %v2963
        %v2972 = vadd.f32 %v2956, %v2968
        %v2973 = vadd.f32 %v2957, %v2968
        %v2974 = vmul.f32 %v2970, 0.2
        %v2975 = vmul.f32 %v2971, 0.2
        %v2976 = vmul.f32 %v2972, 0.2
        %v2977 = vmul.f32 %v2973, 0.2
        %v2978 = vmax.f32 %v2970, %v2974
        %v2979 = vmax.f32 %v2971, %v2975
        %v2980 = vmax.f32 %v2972, %v2976
        %v2981 = vmax.f32 %v2973, %v2977
        %v2982 = vld [vmem:[%s790] sm:$0xff]
        %v2983 = vld [vmem:[%s790 + $0x8] sm:$0xff]
        %v2984 = vld [vmem:[%s795] sm:$0xff]
        %v2985 = vld [vmem:[%s795 + $0x8] sm:$0xff]
        %2987 = vset.pattern.permute.xlu0 0
        %2988 = vperm.xlu0 %2987, %v2984
        %v2989 = vpop.permute.xlu0 %2988
        %2992 = vset.pattern.permute.xlu0 0
        %2993 = vperm.xlu0 %2992, %v2985
        %v2994 = vpop.permute.xlu0 %2993
        %vm2996 = vcmask 130048
        %v2998 = vsel %vm2996, %v2982, 0
        %v3001 = vsel %vm2996, %v2983, 0
        %3003 = vmatprep.subr.mxu0 0.0
        %3004 = vmatpush1.msra.mxu0 0.0
        %3005 = vmatprep.subr.mxu0 0.0
        %3006 = vmatpush1.msra.mxu0 0.0
        %3007 = vmatprep.subr.mxu0 0.0
        %3008 = vmatpush1.msra.mxu0 0.0
        %3009 = vmatprep.subr.mxu0 0.0
        %3010 = vmatpush1.msra.mxu0 0.0
        %3011 = vmatprep.subr.mxu0 0.0
        %3012 = vmatpush1.msra.mxu0 0.0
        %3013 = vmatprep.subr.mxu0 0.0
        %3014 = vmatpush1.msra.mxu0 0.0
        %3015 = vmatprep.subr.mxu0 0.0
        %3016 = vmatpush1.msra.mxu0 0.0
        %3017 = vmatprep.subr.mxu0 0.0
        %3018 = vmatpush1.msra.mxu0 0.0
        %3019 = vmatprep.subr.mxu0 0.0
        %3020 = vmatpush1.msra.mxu0 0.0
        %3021 = vmatprep.subr.mxu0 0.0
        %3022 = vmatpush1.msra.mxu0 0.0
        %3023 = vmatprep.subr.mxu0 0.0
        %3024 = vmatpush1.msra.mxu0 0.0
        %3025 = vmatprep.subr.mxu0 0.0
        %3026 = vmatpush1.msra.mxu0 0.0
        %3027 = vmatprep.subr.mxu0 0.0
        %3028 = vmatpush1.msra.mxu0 0.0
        %3029 = vmatprep.subr.mxu0 0.0
        %3030 = vmatpush1.msra.mxu0 0.0
        %3031 = vmatprep.subr.mxu0 %v2981
        %3032 = vmatpush1.msra.mxu0 %v2980
        %3033 = vmatprep.subr.mxu0 %v2979
        %3034 = vmatpush1.msra.mxu0 %v2978
        %3035 = vmatprep.subr.mxu0 0.0
        %3036 = vmatpush2.msra.mxu0 0.0
        %3037 = vmatprep.subr.mxu0 0.0
        %3038 = vmatpush2.msra.mxu0 0.0
        %3039 = vmatprep.subr.mxu0 0.0
        %3040 = vmatpush2.msra.mxu0 0.0
        %3041 = vmatprep.subr.mxu0 0.0
        %3042 = vmatpush2.msra.mxu0 0.0
        %3043 = vmatprep.subr.mxu0 0.0
        %3044 = vmatpush2.msra.mxu0 0.0
        %3045 = vmatprep.subr.mxu0 0.0
        %3046 = vmatpush2.msra.mxu0 0.0
        %3047 = vmatprep.subr.mxu0 0.0
        %3048 = vmatpush2.msra.mxu0 0.0
        %3049 = vmatprep.subr.mxu0 0.0
        %3050 = vmatpush2.msra.mxu0 0.0
        %3051 = vmatprep.subr.mxu0 0.0
        %3052 = vmatpush2.msra.mxu0 0.0
        %3053 = vmatprep.subr.mxu0 0.0
        %3054 = vmatpush2.msra.mxu0 0.0
        %3055 = vmatprep.subr.mxu0 0.0
        %3056 = vmatpush2.msra.mxu0 0.0
        %3057 = vmatprep.subr.mxu0 0.0
        %3058 = vmatpush2.msra.mxu0 0.0
        %3059 = vmatprep.subr.mxu0 0.0
        %3060 = vmatpush2.msra.mxu0 0.0
        %3061 = vmatprep.subr.mxu0 0.0
        %3062 = vmatpush2.msra.mxu0 0.0
        %3063 = vmatprep.subr.mxu0 0.0
        %3064 = vmatpush2.msra.mxu0 0.0
        %3065 = vmatprep.subr.mxu0 0.0
        %3066 = vmatpush2.msra.mxu0 0.0
        %3067 = vmatprep.mubr.f32.mxu0 0.0
        %3068 = vmatmul.mubr.f32.gmra.mxu0 %v2998
        %v3069 = vpop.f32.mrf.mxu0
        %v3070 = vadd.f32 %v2989, %v3069
        %v3071 = vpop.f32.mrf.mxu0
        %v3072 = vadd.f32 %v2989, %v3071
        %3073 = vmatprep.mubr.f32.mxu0 0.0
        %3074 = vmatmul.mubr.f32.gmra.mxu0 %v3001
        %v3075 = vpop.f32.mrf.mxu0
        %v3076 = vadd.f32 %v2994, %v3075
        %v3077 = vpop.f32.mrf.mxu0
        %v3078 = vadd.f32 %v2994, %v3077
        %3079 = vdwg.mxu0
        %v3080 = vmul.f32 %v3070, 0.2
        %v3081 = vmul.f32 %v3072, 0.2
        %v3082 = vmul.f32 %v3076, 0.2
        %v3083 = vmul.f32 %v3078, 0.2
        %v3084 = vmax.f32 %v3070, %v3080
        %v3085 = vmax.f32 %v3072, %v3081
        %v3086 = vmax.f32 %v3076, %v3082
        %v3087 = vmax.f32 %v3078, %v3083
        %3088 = vst [vmem:[%s716] sm:$0xff] %v3084
        %3089 = vst [vmem:[%s716 + $0x8] sm:$0xff] %v3085
        %3090 = vst [vmem:[%s716 + $0x10] sm:$0xff] %v3086
        %3091 = vst [vmem:[%s716 + $0x18] sm:$0xff] %v3087
        %s3092 = sand.u32 %s440, 1
        %s3093 = sand.u32 %s440, 1
        %s3094 = smul.addr %s3093, 32
        %s3095 = scalar_lea.vmem [#allocation2], %s3094
        // Predicated region
        $region81: #{two_stream_split_forward.1} parent=79 // pred_check
          %p3096 = pneg %p450
        $region82: #{two_stream_split_forward.1} parent=79 // pred_check_branch
          %3098 = sbr.rel (%p3096) target = $region84
        $region83: #{two_stream_split_forward.1} parent=79 // pred_region
          %s3099 = smul.u32 2, %s31
          %s3100 = smul.addr %s30, 8
          %s3101 = sadd.s32 %s3099, %s3100
          %s3102 = smul.addr %s3101, 8
          %s3103 = scalar_lea.vmem %s15, %s3102
          // Predicated region
          $region85: #{two_stream_split_forward.1} parent=83 // pred_check
            _
          $region86: #{two_stream_split_forward.1} parent=83 // pred_check_branch
            %3105 = sbr.rel (0) target = $region88
          $region87: #{two_stream_split_forward.1} parent=83 // pred_region
            // Predicated region
            $region89: #{two_stream_split_forward.1} parent=87 // pred_check
              _
            $region90: #{two_stream_split_forward.1} parent=87 // pred_check_branch
              %3107 = sbr.rel (0) target = $region92
            $region91: #{two_stream_split_forward.1} parent=87 // pred_region
              loop: start=0, step=1, limit=1
              $region93: #{two_stream_split_forward.1} parent=91 // loop_pre_header
                _
              $region94: #{two_stream_split_forward.1} parent=91 // loop_header
                %s3109 = sphi 0, %s3113
                %p3110 = scmp.ge.s32.totalorder %s3109, 1
                %s3114 = sphi %s3095, %s3095
                %s3115 = sphi %s3103, %s3103
              $region95: #{two_stream_split_forward.1} parent=91 // loop_header_branch
                %3112 = sbr.rel (%p3110) target = $region99
              $region96: #{two_stream_split_forward.1} parent=91 // loop_body
                %v3116 = vld [vmem:[%s3114] sm:$0xff]
                %3117 = vst [vmem:[%s3115] sm:$0xff] %v3116
                %v3118 = vld [vmem:[%s3114 + $0x8] sm:$0xff]
                %3119 = vst [vmem:[%s3115 + $0x8] sm:$0xff] %v3118
                %v3120 = vld [vmem:[%s3114 + $0x10] sm:$0xff]
                %3121 = vst [vmem:[%s3115 + $0x20] sm:$0xff] %v3120
                %v3122 = vld [vmem:[%s3114 + $0x18] sm:$0xff]
                %3123 = vst [vmem:[%s3115 + $0x28] sm:$0xff] %v3122
              $region97: #{two_stream_split_forward.1} parent=91 // loop_footer
                %s3113 = sadd.s32 1, %s3109
              $region98: #{two_stream_split_forward.1} parent=91 // loop_footer_branch
                %3108 = sbr.rel target = $region94
              $region99: #{two_stream_split_forward.1} parent=91 // loop_exit
                _
            $region92: #{two_stream_split_forward.1} parent=87 // pred_fallthru
              _
            // Predicated region
            $region100: #{two_stream_split_forward.1} parent=87 // pred_check
              _
            $region101: #{two_stream_split_forward.1} parent=87 // pred_check_branch
              %3125 = sbr.rel target = $region103
            $region102: #{two_stream_split_forward.1} parent=87 // pred_region
              _
            $region103: #{two_stream_split_forward.1} parent=87 // pred_fallthru
              _
          $region88: #{two_stream_split_forward.1} parent=83 // pred_fallthru
            _
          %3126 = vnop
        $region84: #{two_stream_split_forward.1} parent=79 // pred_fallthru
          _
      $region80: #{two_stream_split_forward.1} parent=5 // pred_fallthru
        _
      %p3127 = scmp.le.s32.totalorder 2, %s21
      // Predicated region
      $region104: #{two_stream_split_forward.1} parent=5 // pred_check
        %p3128 = pneg %p3127
      $region105: #{two_stream_split_forward.1} parent=5 // pred_check_branch
        %3130 = sbr.rel (%p3128) target = $region107
      $region106: #{two_stream_split_forward.1} parent=5 // pred_region
        %s3131 = ssub.s32 %s21, 2
        // Predicated region
        $region108: #{two_stream_split_forward.1} parent=106 // pred_check
          %p3132 = pneg %p456
        $region109: #{two_stream_split_forward.1} parent=106 // pred_check_branch
          %3134 = sbr.rel (%p3132) target = $region111
        $region110: #{two_stream_split_forward.1} parent=106 // pred_region
          %s3135 = sand.u32 %s441, 1
          %s3136 = sand.u32 %s441, 1
          %s3137 = smul.addr %s3136, 32
          %s3138 = scalar_lea.vmem [#allocation2], %s3137
        $region111: #{two_stream_split_forward.1} parent=106 // pred_fallthru
          _
      $region107: #{two_stream_split_forward.1} parent=5 // pred_fallthru
        _
    $region6: #{two_stream_split_forward.1} parent=1 // loop_footer
      %s25 = sadd.s32 1, %s21
    $region7: #{two_stream_split_forward.1} parent=1 // loop_footer_branch
      %20 = sbr.rel target = $region3
    $region8: #{two_stream_split_forward.1} parent=1 // loop_exit
      _

</llo_original>
